<compile_context>
chip_gen: v7x
topology: tpu7x:2x2x1
jax: 0.10.0
libtpu: 0.0.40
codegen_flags: <defaults>
</compile_context>

<pallas_src>
import functools

import jax
import jax.numpy as jnp
from jax import lax
from jax.experimental import pallas as pl
from jax.experimental.pallas import tpu as pltpu

NEG_SLOPE = 0.2   # nn.LeakyReLU(0.2)
RES_SCALE = 0.2   # res_scale in ResidualDenseBlock5


# ---------------------------------------------------------------------------
# Fused Pallas kernel: 5 dense convs + LeakyReLU + residual, all in VMEM
# ---------------------------------------------------------------------------
def _rdb5_kernel(nc, gc, H, W, res_scale, neg_slope,
                 x_ref,
                 w1_ref, w2_ref, w3_ref, w4_ref, w5_ref,
                 b1_ref, b2_ref, b3_ref, b4_ref, b5_ref,
                 o_ref, f_ref):
    # x_ref : (1, nc, H*W)           pixels on the lane axis
    # wK_ref: (9, gc, cin_K)         3x3 taps flattened on the leading axis
    # bK_ref: (gc, 1)
    # o_ref : (1, nc, H*W)
    # f_ref : (nc + 4*gc, (H+2)*W+2) flat, H-padded feature buffer (VMEM scratch)
    HW = H * W
    lo = W + 1                              # interior region: [lo, lo + HW)

    # Zero the scratch once per step: halo rows / guard slots must read back as 0.
    f_ref[...] = jnp.zeros_like(f_ref)
    f_ref[0:nc, lo:lo + HW] = x_ref[0]      # write x into channels [0, nc)

    # Column-validity masks, hoisted once and reused by all taps of all 5 convs.
    col = lax.broadcasted_iota(jnp.int32, (1, HW), 1) % W
    mask_l = col != 0                       # tap dx == 0 reads column x-1
    mask_r = col != (W - 1)                 # tap dx == 2 reads column x+1

    def conv3x3_lrelu(w_ref, b_ref, cin):
        feat = f_ref[0:cin, :]              # (cin, (H+2)*W + 2)
        acc = None
        for dy in range(3):
            for dx in range(3):
                s = dy * W + dx
                slab = feat[:, s:s + HW]    # (cin, H*W): contiguous lane slice
                if dx == 0:
                    slab = jnp.where(mask_l, slab, 0.0)
                elif dx == 2:
                    slab = jnp.where(mask_r, slab, 0.0)
                part = jnp.dot(w_ref[dy * 3 + dx], slab,
                               preferred_element_type=jnp.float32)
                acc = part if acc is None else acc + part
        acc = acc + b_ref[...]                              # (gc,1) bcast over lanes
        return jnp.where(acc >= 0.0, acc, neg_slope * acc)  # LeakyReLU(0.2)

    x1 = conv3x3_lrelu(w1_ref, b1_ref, nc)
    f_ref[nc:nc + gc, lo:lo + HW] = x1
    x2 = conv3x3_lrelu(w2_ref, b2_ref, nc + gc)
    f_ref[nc + gc:nc + 2 * gc, lo:lo + HW] = x2
    x3 = conv3x3_lrelu(w3_ref, b3_ref, nc + 2 * gc)
    f_ref[nc + 2 * gc:nc + 3 * gc, lo:lo + HW] = x3
    x4 = conv3x3_lrelu(w4_ref, b4_ref, nc + 3 * gc)
    f_ref[nc + 3 * gc:nc + 4 * gc, lo:lo + HW] = x4
    x5 = conv3x3_lrelu(w5_ref, b5_ref, nc + 4 * gc)

    o_ref[0] = (x5 * res_scale + x_ref[0]).astype(o_ref.dtype)


# ---------------------------------------------------------------------------
# Wrapper: ResidualDenseBlock5 forward (NCHW in / NCHW out)
# ---------------------------------------------------------------------------
def residual_dense_block5(x_nchw, params, *, res_scale=RES_SCALE, neg_slope=NEG_SLOPE):
    N, nc, H, W = x_nchw.shape
    gc = params["w1"].shape[0]              # residual add requires gc == nc (as in torch)
    HW = H * W
    LBUF = (H + 2) * W + 2
    ctot = nc + 4 * gc

    x_flat = x_nchw.reshape(N, nc, HW)      # NCHW -> (N, C, H*W): pure reshape

    ws, bs, w_specs, b_specs = [], [], [], []
    for k in range(1, 6):
        w = params[f"w{k}"]                 # (gc, cin, 3, 3)  PyTorch OIHW
        b = params[f"b{k}"]                 # (gc,)
        cin = w.shape[1]
        ws.append(jnp.transpose(w, (2, 3, 0, 1)).reshape(9, gc, cin))  # tap-major
        bs.append(b.reshape(gc, 1))
        w_specs.append(pl.BlockSpec((9, gc, cin), lambda n: (0, 0, 0)))
        b_specs.append(pl.BlockSpec((gc, 1), lambda n: (0, 0)))

    kernel = functools.partial(_rdb5_kernel, nc, gc, H, W,
                               float(res_scale), float(neg_slope))

    out_flat = pl.pallas_call(
        kernel,
        out_shape=jax.ShapeDtypeStruct((N, nc, HW), x_nchw.dtype),
        grid=(N,),
        in_specs=[pl.BlockSpec((1, nc, HW), lambda n: (n, 0, 0))] + w_specs + b_specs,
        out_specs=pl.BlockSpec((1, nc, HW), lambda n: (n, 0, 0)),
        scratch_shapes=[pltpu.VMEM((ctot, LBUF), jnp.float32)],
        compiler_params=pltpu.CompilerParams(dimension_semantics=("parallel",)),
    )(x_flat, *ws, *bs)

    return out_flat.reshape(N, nc, H, W)


# ---------------------------------------------------------------------------
# Pure-JAX reference (XLA convs) for validation
# ---------------------------------------------------------------------------
def _ref_rdb5(x, p, res_scale=RES_SCALE, neg_slope=NEG_SLOPE):
    def conv(z, w, b):
        y = lax.conv_general_dilated(
            z, w, (1, 1), "SAME",
            dimension_numbers=("NCHW", "OIHW", "NCHW"),
            precision=lax.Precision.HIGHEST) + b[None, :, None, None]
        return jnp.where(y >= 0.0, y, neg_slope * y)

    x1 = conv(x, p["w1"], p["b1"])
    x2 = conv(jnp.concatenate([x, x1], 1), p["w2"], p["b2"])
    x3 = conv(jnp.concatenate([x, x1, x2], 1), p["w3"], p["b3"])
    x4 = conv(jnp.concatenate([x, x1, x2, x3], 1), p["w4"], p["b4"])
    x5 = conv(jnp.concatenate([x, x1, x2, x3, x4], 1), p["w5"], p["b5"])
    return x5 * res_scale + x


# ---------------------------------------------------------------------------
# Deterministic parameter init (PyTorch layout: weight OIHW, bias (Cout,))
# ---------------------------------------------------------------------------
def init_params(key, nc, gc):
    p = {}
    for k in range(1, 6):
        cin = nc + (k - 1) * gc
        key, kw, kb = jax.random.split(key, 3)
        p[f"w{k}"] = 0.1 * jax.random.normal(kw, (gc, cin, 3, 3), jnp.float32)
        p[f"b{k}"] = 0.01 * jax.random.normal(kb, (gc,), jnp.float32)
    return p


if __name__ == "__main__":
    # gc == nc is required by the module's residual add (x5 * res_scale + x).
    N, nc, gc, H, W = 2, 4, 4, 16, 16
    key = jax.random.PRNGKey(0)
    kx, kp = jax.random.split(key)
    x = jax.random.normal(kx, (N, nc, H, W), jnp.float32)    # NCHW like PyTorch
    params = init_params(kp, nc, gc)

    out = jax.jit(residual_dense_block5)(x, params)
    out = jax.block_until_ready(out)

    ref = jax.block_until_ready(_ref_rdb5(x, params))
    max_err = float(jnp.max(jnp.abs(out - ref)))
    assert out.shape == (N, nc, H, W), out.shape
    assert max_err < 1e-2, f"mismatch vs JAX reference: {max_err}"
    print("KERNEL_OK")
</pallas_src>

<mosaic_0001>
module attributes {stable_mosaic.version = 11 : i64} {
  func.func @_rdb5_kernel(%arg0: i32, %arg1: memref<1x4x256xf32, #tpu.memory_space<vmem>>, %arg2: memref<9x4x4xf32, #tpu.memory_space<vmem>>, %arg3: memref<9x4x8xf32, #tpu.memory_space<vmem>>, %arg4: memref<9x4x12xf32, #tpu.memory_space<vmem>>, %arg5: memref<9x4x16xf32, #tpu.memory_space<vmem>>, %arg6: memref<9x4x20xf32, #tpu.memory_space<vmem>>, %arg7: memref<4x1xf32, #tpu.memory_space<vmem>>, %arg8: memref<4x1xf32, #tpu.memory_space<vmem>>, %arg9: memref<4x1xf32, #tpu.memory_space<vmem>>, %arg10: memref<4x1xf32, #tpu.memory_space<vmem>>, %arg11: memref<4x1xf32, #tpu.memory_space<vmem>>, %arg12: memref<1x4x256xf32, #tpu.memory_space<vmem>>, %arg13: memref<20x290xf32, #tpu.memory_space<vmem>>) attributes {dimension_semantics = [#tpu.dimension_semantics<parallel>], iteration_bounds = array<i64: 2>, scalar_prefetch = 0 : i64, scratch_operands = 1 : i64, tpu.core_type = #tpu.core_type<tc>, window_params = [{transform_indices = @transform_0, window_bounds = array<i64: 1, 4, 256>}, {pipeline_mode = #tpu.pipeline_mode<synchronous>, transform_indices = @transform_1, window_bounds = array<i64: 9, 4, 4>}, {pipeline_mode = #tpu.pipeline_mode<synchronous>, transform_indices = @transform_2, window_bounds = array<i64: 9, 4, 8>}, {pipeline_mode = #tpu.pipeline_mode<synchronous>, transform_indices = @transform_3, window_bounds = array<i64: 9, 4, 12>}, {pipeline_mode = #tpu.pipeline_mode<synchronous>, transform_indices = @transform_4, window_bounds = array<i64: 9, 4, 16>}, {pipeline_mode = #tpu.pipeline_mode<synchronous>, transform_indices = @transform_5, window_bounds = array<i64: 9, 4, 20>}, {pipeline_mode = #tpu.pipeline_mode<synchronous>, transform_indices = @transform_6, window_bounds = array<i64: 4, 1>}, {pipeline_mode = #tpu.pipeline_mode<synchronous>, transform_indices = @transform_7, window_bounds = array<i64: 4, 1>}, {pipeline_mode = #tpu.pipeline_mode<synchronous>, transform_indices = @transform_8, window_bounds = array<i64: 4, 1>}, {pipeline_mode = #tpu.pipeline_mode<synchronous>, transform_indices = @transform_9, window_bounds = array<i64: 4, 1>}, {pipeline_mode = #tpu.pipeline_mode<synchronous>, transform_indices = @transform_10, window_bounds = array<i64: 4, 1>}, {transform_indices = @transform_11, window_bounds = array<i64: 1, 4, 256>}]} {
    %cst = arith.constant 0.000000e+00 : f32
    %0 = vector.broadcast %cst : f32 to vector<20x290xf32>
    %c0 = arith.constant 0 : index
    %c0_0 = arith.constant 0 : index
    %1 = vector.load %arg13[%c0, %c0_0] : memref<20x290xf32, #tpu.memory_space<vmem>>, vector<20x290xf32>
    tpu.vector_store %arg13[%c0, %c0_0], %0 {strides = array<i32>} : memref<20x290xf32, #tpu.memory_space<vmem>>, vector<20x290xf32>,
    %c0_1 = arith.constant 0 : index
    %c0_2 = arith.constant 0 : index
    %c0_3 = arith.constant 0 : index
    %2 = vector.load %arg1[%c0_1, %c0_2, %c0_3] : memref<1x4x256xf32, #tpu.memory_space<vmem>>, vector<1x4x256xf32>
    %3 = vector.shape_cast %2 : vector<1x4x256xf32> to vector<4x256xf32>
    %c0_4 = arith.constant 0 : index
    %c17 = arith.constant 17 : index
    %4 = vector.load %arg13[%c0_4, %c17] : memref<20x290xf32, #tpu.memory_space<vmem>>, vector<4x256xf32>
    tpu.vector_store %arg13[%c0_4, %c17], %3 {strides = array<i32>} : memref<20x290xf32, #tpu.memory_space<vmem>>, vector<4x256xf32>,
    %5 = tpu.iota {dimensions = array<i32: 1>} : vector<1x256xi32>
    %c16_i32 = arith.constant 16 : i32
    %c0_i32 = arith.constant 0 : i32
    %6 = arith.cmpi eq, %c16_i32, %c0_i32 : i32
    %c1_i32 = arith.constant 1 : i32
    %7 = arith.select %6, %c1_i32, %c16_i32 : i32
    %8 = vector.broadcast %7 : i32 to vector<1x256xi32>
    %9 = arith.remsi %5, %8 : vector<1x256xi32>
    %c0_i32_5 = arith.constant 0 : i32
    %10 = vector.broadcast %c0_i32_5 : i32 to vector<1x256xi32>
    %11 = arith.cmpi ne, %9, %10 : vector<1x256xi32>
    %c0_i32_6 = arith.constant 0 : i32
    %12 = vector.broadcast %c0_i32_6 : i32 to vector<1x256xi32>
    %13 = arith.cmpi slt, %9, %12 : vector<1x256xi32>
    %c0_i32_7 = arith.constant 0 : i32
    %14 = arith.cmpi slt, %7, %c0_i32_7 : i32
    %15 = vector.broadcast %14 : i1 to vector<1x256xi1>
    %16 = vector.broadcast %15 : vector<1x256xi1> to vector<1x256xi1>
    %17 = arith.xori %13, %16 : vector<1x256xi1>
    %18 = arith.andi %17, %11 : vector<1x256xi1>
    %19 = vector.broadcast %7 : i32 to vector<1x256xi32>
    %20 = arith.addi %9, %19 : vector<1x256xi32>
    %21 = arith.select %18, %20, %9 : vector<1x256xi1>, vector<1x256xi32>
    %c0_i32_8 = arith.constant 0 : i32
    %22 = vector.broadcast %c0_i32_8 : i32 to vector<1x256xi32>
    %23 = arith.cmpi ne, %21, %22 : vector<1x256xi32>
    %c15_i32 = arith.constant 15 : i32
    %24 = vector.broadcast %c15_i32 : i32 to vector<1x256xi32>
    %25 = arith.cmpi ne, %21, %24 : vector<1x256xi32>
    %c0_9 = arith.constant 0 : index
    %c0_10 = arith.constant 0 : index
    %26 = vector.load %arg13[%c0_9, %c0_10] : memref<20x290xf32, #tpu.memory_space<vmem>>, vector<4x290xf32>
    %27 = vector.extract_strided_slice %26 {offsets = [0, 0], sizes = [4, 256], strides = [1, 1]} : vector<4x290xf32> to vector<4x256xf32>
    %cst_11 = arith.constant 0.000000e+00 : f32
    %28 = vector.shape_cast %23 : vector<1x256xi1> to vector<1x256xi1>
    %29 = vector.broadcast %28 : vector<1x256xi1> to vector<4x256xi1>
    %30 = vector.broadcast %cst_11 : f32 to vector<4x256xf32>
    %31 = arith.select %29, %27, %30 : vector<4x256xi1>, vector<4x256xf32>
    %c0_12 = arith.constant 0 : index
    %c0_13 = arith.constant 0 : index
    %c0_14 = arith.constant 0 : index
    %32 = vector.load %arg2[%c0_12, %c0_13, %c0_14] : memref<9x4x4xf32, #tpu.memory_space<vmem>>, vector<1x4x4xf32>
    %33 = vector.shape_cast %32 : vector<1x4x4xf32> to vector<4x4xf32>
    %cst_15 = arith.constant dense<0.000000e+00> : vector<4x256xf32>
    %34 = tpu.matmul %33, %31, %cst_15 {dimension_numbers = #tpu.dot_dimension_numbers<[1], [0], [0], [1], [0, 0, 1, 1], [], []>} : vector<4x4xf32>, vector<4x256xf32>, vector<4x256xf32> -> vector<4x256xf32>
    %35 = vector.extract_strided_slice %26 {offsets = [0, 1], sizes = [4, 256], strides = [1, 1]} : vector<4x290xf32> to vector<4x256xf32>
    %c1 = arith.constant 1 : index
    %c0_16 = arith.constant 0 : index
    %c0_17 = arith.constant 0 : index
    %36 = vector.load %arg2[%c1, %c0_16, %c0_17] : memref<9x4x4xf32, #tpu.memory_space<vmem>>, vector<1x4x4xf32>
    %37 = vector.shape_cast %36 : vector<1x4x4xf32> to vector<4x4xf32>
    %cst_18 = arith.constant dense<0.000000e+00> : vector<4x256xf32>
    %38 = tpu.matmul %37, %35, %cst_18 {dimension_numbers = #tpu.dot_dimension_numbers<[1], [0], [0], [1], [0, 0, 1, 1], [], []>} : vector<4x4xf32>, vector<4x256xf32>, vector<4x256xf32> -> vector<4x256xf32>
    %39 = arith.addf %34, %38 : vector<4x256xf32>
    %40 = vector.extract_strided_slice %26 {offsets = [0, 2], sizes = [4, 256], strides = [1, 1]} : vector<4x290xf32> to vector<4x256xf32>
    %cst_19 = arith.constant 0.000000e+00 : f32
    %41 = vector.shape_cast %25 : vector<1x256xi1> to vector<1x256xi1>
    %42 = vector.broadcast %41 : vector<1x256xi1> to vector<4x256xi1>
    %43 = vector.broadcast %cst_19 : f32 to vector<4x256xf32>
    %44 = arith.select %42, %40, %43 : vector<4x256xi1>, vector<4x256xf32>
    %c2 = arith.constant 2 : index
    %c0_20 = arith.constant 0 : index
    %c0_21 = arith.constant 0 : index
    %45 = vector.load %arg2[%c2, %c0_20, %c0_21] : memref<9x4x4xf32, #tpu.memory_space<vmem>>, vector<1x4x4xf32>
    %46 = vector.shape_cast %45 : vector<1x4x4xf32> to vector<4x4xf32>
    %cst_22 = arith.constant dense<0.000000e+00> : vector<4x256xf32>
    %47 = tpu.matmul %46, %44, %cst_22 {dimension_numbers = #tpu.dot_dimension_numbers<[1], [0], [0], [1], [0, 0, 1, 1], [], []>} : vector<4x4xf32>, vector<4x256xf32>, vector<4x256xf32> -> vector<4x256xf32>
    %48 = arith.addf %39, %47 : vector<4x256xf32>
    %49 = vector.extract_strided_slice %26 {offsets = [0, 16], sizes = [4, 256], strides = [1, 1]} : vector<4x290xf32> to vector<4x256xf32>
    %cst_23 = arith.constant 0.000000e+00 : f32
    %50 = vector.shape_cast %23 : vector<1x256xi1> to vector<1x256xi1>
    %51 = vector.broadcast %50 : vector<1x256xi1> to vector<4x256xi1>
    %52 = vector.broadcast %cst_23 : f32 to vector<4x256xf32>
    %53 = arith.select %51, %49, %52 : vector<4x256xi1>, vector<4x256xf32>
    %c3 = arith.constant 3 : index
    %c0_24 = arith.constant 0 : index
    %c0_25 = arith.constant 0 : index
    %54 = vector.load %arg2[%c3, %c0_24, %c0_25] : memref<9x4x4xf32, #tpu.memory_space<vmem>>, vector<1x4x4xf32>
    %55 = vector.shape_cast %54 : vector<1x4x4xf32> to vector<4x4xf32>
    %cst_26 = arith.constant dense<0.000000e+00> : vector<4x256xf32>
    %56 = tpu.matmul %55, %53, %cst_26 {dimension_numbers = #tpu.dot_dimension_numbers<[1], [0], [0], [1], [0, 0, 1, 1], [], []>} : vector<4x4xf32>, vector<4x256xf32>, vector<4x256xf32> -> vector<4x256xf32>
    %57 = arith.addf %48, %56 : vector<4x256xf32>
    %58 = vector.extract_strided_slice %26 {offsets = [0, 17], sizes = [4, 256], strides = [1, 1]} : vector<4x290xf32> to vector<4x256xf32>
    %c4 = arith.constant 4 : index
    %c0_27 = arith.constant 0 : index
    %c0_28 = arith.constant 0 : index
    %59 = vector.load %arg2[%c4, %c0_27, %c0_28] : memref<9x4x4xf32, #tpu.memory_space<vmem>>, vector<1x4x4xf32>
    %60 = vector.shape_cast %59 : vector<1x4x4xf32> to vector<4x4xf32>
    %cst_29 = arith.constant dense<0.000000e+00> : vector<4x256xf32>
    %61 = tpu.matmul %60, %58, %cst_29 {dimension_numbers = #tpu.dot_dimension_numbers<[1], [0], [0], [1], [0, 0, 1, 1], [], []>} : vector<4x4xf32>, vector<4x256xf32>, vector<4x256xf32> -> vector<4x256xf32>
    %62 = arith.addf %57, %61 : vector<4x256xf32>
    %63 = vector.extract_strided_slice %26 {offsets = [0, 18], sizes = [4, 256], strides = [1, 1]} : vector<4x290xf32> to vector<4x256xf32>
    %cst_30 = arith.constant 0.000000e+00 : f32
    %64 = vector.shape_cast %25 : vector<1x256xi1> to vector<1x256xi1>
    %65 = vector.broadcast %64 : vector<1x256xi1> to vector<4x256xi1>
    %66 = vector.broadcast %cst_30 : f32 to vector<4x256xf32>
    %67 = arith.select %65, %63, %66 : vector<4x256xi1>, vector<4x256xf32>
    %c5 = arith.constant 5 : index
    %c0_31 = arith.constant 0 : index
    %c0_32 = arith.constant 0 : index
    %68 = vector.load %arg2[%c5, %c0_31, %c0_32] : memref<9x4x4xf32, #tpu.memory_space<vmem>>, vector<1x4x4xf32>
    %69 = vector.shape_cast %68 : vector<1x4x4xf32> to vector<4x4xf32>
    %cst_33 = arith.constant dense<0.000000e+00> : vector<4x256xf32>
    %70 = tpu.matmul %69, %67, %cst_33 {dimension_numbers = #tpu.dot_dimension_numbers<[1], [0], [0], [1], [0, 0, 1, 1], [], []>} : vector<4x4xf32>, vector<4x256xf32>, vector<4x256xf32> -> vector<4x256xf32>
    %71 = arith.addf %62, %70 : vector<4x256xf32>
    %72 = vector.extract_strided_slice %26 {offsets = [0, 32], sizes = [4, 256], strides = [1, 1]} : vector<4x290xf32> to vector<4x256xf32>
    %cst_34 = arith.constant 0.000000e+00 : f32
    %73 = vector.shape_cast %23 : vector<1x256xi1> to vector<1x256xi1>
    %74 = vector.broadcast %73 : vector<1x256xi1> to vector<4x256xi1>
    %75 = vector.broadcast %cst_34 : f32 to vector<4x256xf32>
    %76 = arith.select %74, %72, %75 : vector<4x256xi1>, vector<4x256xf32>
    %c6 = arith.constant 6 : index
    %c0_35 = arith.constant 0 : index
    %c0_36 = arith.constant 0 : index
    %77 = vector.load %arg2[%c6, %c0_35, %c0_36] : memref<9x4x4xf32, #tpu.memory_space<vmem>>, vector<1x4x4xf32>
    %78 = vector.shape_cast %77 : vector<1x4x4xf32> to vector<4x4xf32>
    %cst_37 = arith.constant dense<0.000000e+00> : vector<4x256xf32>
    %79 = tpu.matmul %78, %76, %cst_37 {dimension_numbers = #tpu.dot_dimension_numbers<[1], [0], [0], [1], [0, 0, 1, 1], [], []>} : vector<4x4xf32>, vector<4x256xf32>, vector<4x256xf32> -> vector<4x256xf32>
    %80 = arith.addf %71, %79 : vector<4x256xf32>
    %81 = vector.extract_strided_slice %26 {offsets = [0, 33], sizes = [4, 256], strides = [1, 1]} : vector<4x290xf32> to vector<4x256xf32>
    %c7 = arith.constant 7 : index
    %c0_38 = arith.constant 0 : index
    %c0_39 = arith.constant 0 : index
    %82 = vector.load %arg2[%c7, %c0_38, %c0_39] : memref<9x4x4xf32, #tpu.memory_space<vmem>>, vector<1x4x4xf32>
    %83 = vector.shape_cast %82 : vector<1x4x4xf32> to vector<4x4xf32>
    %cst_40 = arith.constant dense<0.000000e+00> : vector<4x256xf32>
    %84 = tpu.matmul %83, %81, %cst_40 {dimension_numbers = #tpu.dot_dimension_numbers<[1], [0], [0], [1], [0, 0, 1, 1], [], []>} : vector<4x4xf32>, vector<4x256xf32>, vector<4x256xf32> -> vector<4x256xf32>
    %85 = arith.addf %80, %84 : vector<4x256xf32>
    %86 = vector.extract_strided_slice %26 {offsets = [0, 34], sizes = [4, 256], strides = [1, 1]} : vector<4x290xf32> to vector<4x256xf32>
    %cst_41 = arith.constant 0.000000e+00 : f32
    %87 = vector.shape_cast %25 : vector<1x256xi1> to vector<1x256xi1>
    %88 = vector.broadcast %87 : vector<1x256xi1> to vector<4x256xi1>
    %89 = vector.broadcast %cst_41 : f32 to vector<4x256xf32>
    %90 = arith.select %88, %86, %89 : vector<4x256xi1>, vector<4x256xf32>
    %c8 = arith.constant 8 : index
    %c0_42 = arith.constant 0 : index
    %c0_43 = arith.constant 0 : index
    %91 = vector.load %arg2[%c8, %c0_42, %c0_43] : memref<9x4x4xf32, #tpu.memory_space<vmem>>, vector<1x4x4xf32>
    %92 = vector.shape_cast %91 : vector<1x4x4xf32> to vector<4x4xf32>
    %cst_44 = arith.constant dense<0.000000e+00> : vector<4x256xf32>
    %93 = tpu.matmul %92, %90, %cst_44 {dimension_numbers = #tpu.dot_dimension_numbers<[1], [0], [0], [1], [0, 0, 1, 1], [], []>} : vector<4x4xf32>, vector<4x256xf32>, vector<4x256xf32> -> vector<4x256xf32>
    %94 = arith.addf %85, %93 : vector<4x256xf32>
    %c0_45 = arith.constant 0 : index
    %c0_46 = arith.constant 0 : index
    %95 = vector.load %arg7[%c0_45, %c0_46] : memref<4x1xf32, #tpu.memory_space<vmem>>, vector<4x1xf32>
    %96 = vector.broadcast %95 : vector<4x1xf32> to vector<4x256xf32>
    %97 = arith.addf %94, %96 : vector<4x256xf32>
    %cst_47 = arith.constant 0.000000e+00 : f32
    %98 = vector.broadcast %cst_47 : f32 to vector<4x256xf32>
    %99 = arith.cmpf oge, %97, %98 : vector<4x256xf32>
    %cst_48 = arith.constant 2.000000e-01 : f32
    %100 = vector.broadcast %cst_48 : f32 to vector<4x256xf32>
    %101 = arith.mulf %100, %97 : vector<4x256xf32>
    %102 = arith.select %99, %97, %101 : vector<4x256xi1>, vector<4x256xf32>
    %c4_49 = arith.constant 4 : index
    %c17_50 = arith.constant 17 : index
    %103 = vector.load %arg13[%c4_49, %c17_50] : memref<20x290xf32, #tpu.memory_space<vmem>>, vector<4x256xf32>
    tpu.vector_store %arg13[%c4_49, %c17_50], %102 {strides = array<i32>} : memref<20x290xf32, #tpu.memory_space<vmem>>, vector<4x256xf32>,
    %c0_51 = arith.constant 0 : index
    %c0_52 = arith.constant 0 : index
    %104 = vector.load %arg13[%c0_51, %c0_52] : memref<20x290xf32, #tpu.memory_space<vmem>>, vector<8x290xf32>
    %105 = vector.extract_strided_slice %104 {offsets = [0, 0], sizes = [8, 256], strides = [1, 1]} : vector<8x290xf32> to vector<8x256xf32>
    %cst_53 = arith.constant 0.000000e+00 : f32
    %106 = vector.shape_cast %23 : vector<1x256xi1> to vector<1x256xi1>
    %107 = vector.broadcast %106 : vector<1x256xi1> to vector<8x256xi1>
    %108 = vector.broadcast %cst_53 : f32 to vector<8x256xf32>
    %109 = arith.select %107, %105, %108 : vector<8x256xi1>, vector<8x256xf32>
    %c0_54 = arith.constant 0 : index
    %c0_55 = arith.constant 0 : index
    %c0_56 = arith.constant 0 : index
    %110 = vector.load %arg3[%c0_54, %c0_55, %c0_56] : memref<9x4x8xf32, #tpu.memory_space<vmem>>, vector<1x4x8xf32>
    %111 = vector.shape_cast %110 : vector<1x4x8xf32> to vector<4x8xf32>
    %cst_57 = arith.constant dense<0.000000e+00> : vector<4x256xf32>
    %112 = tpu.matmul %111, %109, %cst_57 {dimension_numbers = #tpu.dot_dimension_numbers<[1], [0], [0], [1], [0, 0, 1, 1], [], []>} : vector<4x8xf32>, vector<8x256xf32>, vector<4x256xf32> -> vector<4x256xf32>
    %113 = vector.extract_strided_slice %104 {offsets = [0, 1], sizes = [8, 256], strides = [1, 1]} : vector<8x290xf32> to vector<8x256xf32>
    %c1_58 = arith.constant 1 : index
    %c0_59 = arith.constant 0 : index
    %c0_60 = arith.constant 0 : index
    %114 = vector.load %arg3[%c1_58, %c0_59, %c0_60] : memref<9x4x8xf32, #tpu.memory_space<vmem>>, vector<1x4x8xf32>
    %115 = vector.shape_cast %114 : vector<1x4x8xf32> to vector<4x8xf32>
    %cst_61 = arith.constant dense<0.000000e+00> : vector<4x256xf32>
    %116 = tpu.matmul %115, %113, %cst_61 {dimension_numbers = #tpu.dot_dimension_numbers<[1], [0], [0], [1], [0, 0, 1, 1], [], []>} : vector<4x8xf32>, vector<8x256xf32>, vector<4x256xf32> -> vector<4x256xf32>
    %117 = arith.addf %112, %116 : vector<4x256xf32>
    %118 = vector.extract_strided_slice %104 {offsets = [0, 2], sizes = [8, 256], strides = [1, 1]} : vector<8x290xf32> to vector<8x256xf32>
    %cst_62 = arith.constant 0.000000e+00 : f32
    %119 = vector.shape_cast %25 : vector<1x256xi1> to vector<1x256xi1>
    %120 = vector.broadcast %119 : vector<1x256xi1> to vector<8x256xi1>
    %121 = vector.broadcast %cst_62 : f32 to vector<8x256xf32>
    %122 = arith.select %120, %118, %121 : vector<8x256xi1>, vector<8x256xf32>
    %c2_63 = arith.constant 2 : index
    %c0_64 = arith.constant 0 : index
    %c0_65 = arith.constant 0 : index
    %123 = vector.load %arg3[%c2_63, %c0_64, %c0_65] : memref<9x4x8xf32, #tpu.memory_space<vmem>>, vector<1x4x8xf32>
    %124 = vector.shape_cast %123 : vector<1x4x8xf32> to vector<4x8xf32>
    %cst_66 = arith.constant dense<0.000000e+00> : vector<4x256xf32>
    %125 = tpu.matmul %124, %122, %cst_66 {dimension_numbers = #tpu.dot_dimension_numbers<[1], [0], [0], [1], [0, 0, 1, 1], [], []>} : vector<4x8xf32>, vector<8x256xf32>, vector<4x256xf32> -> vector<4x256xf32>
    %126 = arith.addf %117, %125 : vector<4x256xf32>
    %127 = vector.extract_strided_slice %104 {offsets = [0, 16], sizes = [8, 256], strides = [1, 1]} : vector<8x290xf32> to vector<8x256xf32>
    %cst_67 = arith.constant 0.000000e+00 : f32
    %128 = vector.shape_cast %23 : vector<1x256xi1> to vector<1x256xi1>
    %129 = vector.broadcast %128 : vector<1x256xi1> to vector<8x256xi1>
    %130 = vector.broadcast %cst_67 : f32 to vector<8x256xf32>
    %131 = arith.select %129, %127, %130 : vector<8x256xi1>, vector<8x256xf32>
    %c3_68 = arith.constant 3 : index
    %c0_69 = arith.constant 0 : index
    %c0_70 = arith.constant 0 : index
    %132 = vector.load %arg3[%c3_68, %c0_69, %c0_70] : memref<9x4x8xf32, #tpu.memory_space<vmem>>, vector<1x4x8xf32>
    %133 = vector.shape_cast %132 : vector<1x4x8xf32> to vector<4x8xf32>
    %cst_71 = arith.constant dense<0.000000e+00> : vector<4x256xf32>
    %134 = tpu.matmul %133, %131, %cst_71 {dimension_numbers = #tpu.dot_dimension_numbers<[1], [0], [0], [1], [0, 0, 1, 1], [], []>} : vector<4x8xf32>, vector<8x256xf32>, vector<4x256xf32> -> vector<4x256xf32>
    %135 = arith.addf %126, %134 : vector<4x256xf32>
    %136 = vector.extract_strided_slice %104 {offsets = [0, 17], sizes = [8, 256], strides = [1, 1]} : vector<8x290xf32> to vector<8x256xf32>
    %c4_72 = arith.constant 4 : index
    %c0_73 = arith.constant 0 : index
    %c0_74 = arith.constant 0 : index
    %137 = vector.load %arg3[%c4_72, %c0_73, %c0_74] : memref<9x4x8xf32, #tpu.memory_space<vmem>>, vector<1x4x8xf32>
    %138 = vector.shape_cast %137 : vector<1x4x8xf32> to vector<4x8xf32>
    %cst_75 = arith.constant dense<0.000000e+00> : vector<4x256xf32>
    %139 = tpu.matmul %138, %136, %cst_75 {dimension_numbers = #tpu.dot_dimension_numbers<[1], [0], [0], [1], [0, 0, 1, 1], [], []>} : vector<4x8xf32>, vector<8x256xf32>, vector<4x256xf32> -> vector<4x256xf32>
    %140 = arith.addf %135, %139 : vector<4x256xf32>
    %141 = vector.extract_strided_slice %104 {offsets = [0, 18], sizes = [8, 256], strides = [1, 1]} : vector<8x290xf32> to vector<8x256xf32>
    %cst_76 = arith.constant 0.000000e+00 : f32
    %142 = vector.shape_cast %25 : vector<1x256xi1> to vector<1x256xi1>
    %143 = vector.broadcast %142 : vector<1x256xi1> to vector<8x256xi1>
    %144 = vector.broadcast %cst_76 : f32 to vector<8x256xf32>
    %145 = arith.select %143, %141, %144 : vector<8x256xi1>, vector<8x256xf32>
    %c5_77 = arith.constant 5 : index
    %c0_78 = arith.constant 0 : index
    %c0_79 = arith.constant 0 : index
    %146 = vector.load %arg3[%c5_77, %c0_78, %c0_79] : memref<9x4x8xf32, #tpu.memory_space<vmem>>, vector<1x4x8xf32>
    %147 = vector.shape_cast %146 : vector<1x4x8xf32> to vector<4x8xf32>
    %cst_80 = arith.constant dense<0.000000e+00> : vector<4x256xf32>
    %148 = tpu.matmul %147, %145, %cst_80 {dimension_numbers = #tpu.dot_dimension_numbers<[1], [0], [0], [1], [0, 0, 1, 1], [], []>} : vector<4x8xf32>, vector<8x256xf32>, vector<4x256xf32> -> vector<4x256xf32>
    %149 = arith.addf %140, %148 : vector<4x256xf32>
    %150 = vector.extract_strided_slice %104 {offsets = [0, 32], sizes = [8, 256], strides = [1, 1]} : vector<8x290xf32> to vector<8x256xf32>
    %cst_81 = arith.constant 0.000000e+00 : f32
    %151 = vector.shape_cast %23 : vector<1x256xi1> to vector<1x256xi1>
    %152 = vector.broadcast %151 : vector<1x256xi1> to vector<8x256xi1>
    %153 = vector.broadcast %cst_81 : f32 to vector<8x256xf32>
    %154 = arith.select %152, %150, %153 : vector<8x256xi1>, vector<8x256xf32>
    %c6_82 = arith.constant 6 : index
    %c0_83 = arith.constant 0 : index
    %c0_84 = arith.constant 0 : index
    %155 = vector.load %arg3[%c6_82, %c0_83, %c0_84] : memref<9x4x8xf32, #tpu.memory_space<vmem>>, vector<1x4x8xf32>
    %156 = vector.shape_cast %155 : vector<1x4x8xf32> to vector<4x8xf32>
    %cst_85 = arith.constant dense<0.000000e+00> : vector<4x256xf32>
    %157 = tpu.matmul %156, %154, %cst_85 {dimension_numbers = #tpu.dot_dimension_numbers<[1], [0], [0], [1], [0, 0, 1, 1], [], []>} : vector<4x8xf32>, vector<8x256xf32>, vector<4x256xf32> -> vector<4x256xf32>
    %158 = arith.addf %149, %157 : vector<4x256xf32>
    %159 = vector.extract_strided_slice %104 {offsets = [0, 33], sizes = [8, 256], strides = [1, 1]} : vector<8x290xf32> to vector<8x256xf32>
    %c7_86 = arith.constant 7 : index
    %c0_87 = arith.constant 0 : index
    %c0_88 = arith.constant 0 : index
    %160 = vector.load %arg3[%c7_86, %c0_87, %c0_88] : memref<9x4x8xf32, #tpu.memory_space<vmem>>, vector<1x4x8xf32>
    %161 = vector.shape_cast %160 : vector<1x4x8xf32> to vector<4x8xf32>
    %cst_89 = arith.constant dense<0.000000e+00> : vector<4x256xf32>
    %162 = tpu.matmul %161, %159, %cst_89 {dimension_numbers = #tpu.dot_dimension_numbers<[1], [0], [0], [1], [0, 0, 1, 1], [], []>} : vector<4x8xf32>, vector<8x256xf32>, vector<4x256xf32> -> vector<4x256xf32>
    %163 = arith.addf %158, %162 : vector<4x256xf32>
    %164 = vector.extract_strided_slice %104 {offsets = [0, 34], sizes = [8, 256], strides = [1, 1]} : vector<8x290xf32> to vector<8x256xf32>
    %cst_90 = arith.constant 0.000000e+00 : f32
    %165 = vector.shape_cast %25 : vector<1x256xi1> to vector<1x256xi1>
    %166 = vector.broadcast %165 : vector<1x256xi1> to vector<8x256xi1>
    %167 = vector.broadcast %cst_90 : f32 to vector<8x256xf32>
    %168 = arith.select %166, %164, %167 : vector<8x256xi1>, vector<8x256xf32>
    %c8_91 = arith.constant 8 : index
    %c0_92 = arith.constant 0 : index
    %c0_93 = arith.constant 0 : index
    %169 = vector.load %arg3[%c8_91, %c0_92, %c0_93] : memref<9x4x8xf32, #tpu.memory_space<vmem>>, vector<1x4x8xf32>
    %170 = vector.shape_cast %169 : vector<1x4x8xf32> to vector<4x8xf32>
    %cst_94 = arith.constant dense<0.000000e+00> : vector<4x256xf32>
    %171 = tpu.matmul %170, %168, %cst_94 {dimension_numbers = #tpu.dot_dimension_numbers<[1], [0], [0], [1], [0, 0, 1, 1], [], []>} : vector<4x8xf32>, vector<8x256xf32>, vector<4x256xf32> -> vector<4x256xf32>
    %172 = arith.addf %163, %171 : vector<4x256xf32>
    %c0_95 = arith.constant 0 : index
    %c0_96 = arith.constant 0 : index
    %173 = vector.load %arg8[%c0_95, %c0_96] : memref<4x1xf32, #tpu.memory_space<vmem>>, vector<4x1xf32>
    %174 = vector.broadcast %173 : vector<4x1xf32> to vector<4x256xf32>
    %175 = arith.addf %172, %174 : vector<4x256xf32>
    %cst_97 = arith.constant 0.000000e+00 : f32
    %176 = vector.broadcast %cst_97 : f32 to vector<4x256xf32>
    %177 = arith.cmpf oge, %175, %176 : vector<4x256xf32>
    %cst_98 = arith.constant 2.000000e-01 : f32
    %178 = vector.broadcast %cst_98 : f32 to vector<4x256xf32>
    %179 = arith.mulf %178, %175 : vector<4x256xf32>
    %180 = arith.select %177, %175, %179 : vector<4x256xi1>, vector<4x256xf32>
    %c8_99 = arith.constant 8 : index
    %c17_100 = arith.constant 17 : index
    %181 = vector.load %arg13[%c8_99, %c17_100] : memref<20x290xf32, #tpu.memory_space<vmem>>, vector<4x256xf32>
    tpu.vector_store %arg13[%c8_99, %c17_100], %180 {strides = array<i32>} : memref<20x290xf32, #tpu.memory_space<vmem>>, vector<4x256xf32>,
    %c0_101 = arith.constant 0 : index
    %c0_102 = arith.constant 0 : index
    %182 = vector.load %arg13[%c0_101, %c0_102] : memref<20x290xf32, #tpu.memory_space<vmem>>, vector<12x290xf32>
    %183 = vector.extract_strided_slice %182 {offsets = [0, 0], sizes = [12, 256], strides = [1, 1]} : vector<12x290xf32> to vector<12x256xf32>
    %cst_103 = arith.constant 0.000000e+00 : f32
    %184 = vector.shape_cast %23 : vector<1x256xi1> to vector<1x256xi1>
    %185 = vector.broadcast %184 : vector<1x256xi1> to vector<12x256xi1>
    %186 = vector.broadcast %cst_103 : f32 to vector<12x256xf32>
    %187 = arith.select %185, %183, %186 : vector<12x256xi1>, vector<12x256xf32>
    %c0_104 = arith.constant 0 : index
    %c0_105 = arith.constant 0 : index
    %c0_106 = arith.constant 0 : index
    %188 = vector.load %arg4[%c0_104, %c0_105, %c0_106] : memref<9x4x12xf32, #tpu.memory_space<vmem>>, vector<1x4x12xf32>
    %189 = vector.shape_cast %188 : vector<1x4x12xf32> to vector<4x12xf32>
    %cst_107 = arith.constant dense<0.000000e+00> : vector<4x256xf32>
    %190 = tpu.matmul %189, %187, %cst_107 {dimension_numbers = #tpu.dot_dimension_numbers<[1], [0], [0], [1], [0, 0, 1, 1], [], []>} : vector<4x12xf32>, vector<12x256xf32>, vector<4x256xf32> -> vector<4x256xf32>
    %191 = vector.extract_strided_slice %182 {offsets = [0, 1], sizes = [12, 256], strides = [1, 1]} : vector<12x290xf32> to vector<12x256xf32>
    %c1_108 = arith.constant 1 : index
    %c0_109 = arith.constant 0 : index
    %c0_110 = arith.constant 0 : index
    %192 = vector.load %arg4[%c1_108, %c0_109, %c0_110] : memref<9x4x12xf32, #tpu.memory_space<vmem>>, vector<1x4x12xf32>
    %193 = vector.shape_cast %192 : vector<1x4x12xf32> to vector<4x12xf32>
    %cst_111 = arith.constant dense<0.000000e+00> : vector<4x256xf32>
    %194 = tpu.matmul %193, %191, %cst_111 {dimension_numbers = #tpu.dot_dimension_numbers<[1], [0], [0], [1], [0, 0, 1, 1], [], []>} : vector<4x12xf32>, vector<12x256xf32>, vector<4x256xf32> -> vector<4x256xf32>
    %195 = arith.addf %190, %194 : vector<4x256xf32>
    %196 = vector.extract_strided_slice %182 {offsets = [0, 2], sizes = [12, 256], strides = [1, 1]} : vector<12x290xf32> to vector<12x256xf32>
    %cst_112 = arith.constant 0.000000e+00 : f32
    %197 = vector.shape_cast %25 : vector<1x256xi1> to vector<1x256xi1>
    %198 = vector.broadcast %197 : vector<1x256xi1> to vector<12x256xi1>
    %199 = vector.broadcast %cst_112 : f32 to vector<12x256xf32>
    %200 = arith.select %198, %196, %199 : vector<12x256xi1>, vector<12x256xf32>
    %c2_113 = arith.constant 2 : index
    %c0_114 = arith.constant 0 : index
    %c0_115 = arith.constant 0 : index
    %201 = vector.load %arg4[%c2_113, %c0_114, %c0_115] : memref<9x4x12xf32, #tpu.memory_space<vmem>>, vector<1x4x12xf32>
    %202 = vector.shape_cast %201 : vector<1x4x12xf32> to vector<4x12xf32>
    %cst_116 = arith.constant dense<0.000000e+00> : vector<4x256xf32>
    %203 = tpu.matmul %202, %200, %cst_116 {dimension_numbers = #tpu.dot_dimension_numbers<[1], [0], [0], [1], [0, 0, 1, 1], [], []>} : vector<4x12xf32>, vector<12x256xf32>, vector<4x256xf32> -> vector<4x256xf32>
    %204 = arith.addf %195, %203 : vector<4x256xf32>
    %205 = vector.extract_strided_slice %182 {offsets = [0, 16], sizes = [12, 256], strides = [1, 1]} : vector<12x290xf32> to vector<12x256xf32>
    %cst_117 = arith.constant 0.000000e+00 : f32
    %206 = vector.shape_cast %23 : vector<1x256xi1> to vector<1x256xi1>
    %207 = vector.broadcast %206 : vector<1x256xi1> to vector<12x256xi1>
    %208 = vector.broadcast %cst_117 : f32 to vector<12x256xf32>
    %209 = arith.select %207, %205, %208 : vector<12x256xi1>, vector<12x256xf32>
    %c3_118 = arith.constant 3 : index
    %c0_119 = arith.constant 0 : index
    %c0_120 = arith.constant 0 : index
    %210 = vector.load %arg4[%c3_118, %c0_119, %c0_120] : memref<9x4x12xf32, #tpu.memory_space<vmem>>, vector<1x4x12xf32>
    %211 = vector.shape_cast %210 : vector<1x4x12xf32> to vector<4x12xf32>
    %cst_121 = arith.constant dense<0.000000e+00> : vector<4x256xf32>
    %212 = tpu.matmul %211, %209, %cst_121 {dimension_numbers = #tpu.dot_dimension_numbers<[1], [0], [0], [1], [0, 0, 1, 1], [], []>} : vector<4x12xf32>, vector<12x256xf32>, vector<4x256xf32> -> vector<4x256xf32>
    %213 = arith.addf %204, %212 : vector<4x256xf32>
    %214 = vector.extract_strided_slice %182 {offsets = [0, 17], sizes = [12, 256], strides = [1, 1]} : vector<12x290xf32> to vector<12x256xf32>
    %c4_122 = arith.constant 4 : index
    %c0_123 = arith.constant 0 : index
    %c0_124 = arith.constant 0 : index
    %215 = vector.load %arg4[%c4_122, %c0_123, %c0_124] : memref<9x4x12xf32, #tpu.memory_space<vmem>>, vector<1x4x12xf32>
    %216 = vector.shape_cast %215 : vector<1x4x12xf32> to vector<4x12xf32>
    %cst_125 = arith.constant dense<0.000000e+00> : vector<4x256xf32>
    %217 = tpu.matmul %216, %214, %cst_125 {dimension_numbers = #tpu.dot_dimension_numbers<[1], [0], [0], [1], [0, 0, 1, 1], [], []>} : vector<4x12xf32>, vector<12x256xf32>, vector<4x256xf32> -> vector<4x256xf32>
    %218 = arith.addf %213, %217 : vector<4x256xf32>
    %219 = vector.extract_strided_slice %182 {offsets = [0, 18], sizes = [12, 256], strides = [1, 1]} : vector<12x290xf32> to vector<12x256xf32>
    %cst_126 = arith.constant 0.000000e+00 : f32
    %220 = vector.shape_cast %25 : vector<1x256xi1> to vector<1x256xi1>
    %221 = vector.broadcast %220 : vector<1x256xi1> to vector<12x256xi1>
    %222 = vector.broadcast %cst_126 : f32 to vector<12x256xf32>
    %223 = arith.select %221, %219, %222 : vector<12x256xi1>, vector<12x256xf32>
    %c5_127 = arith.constant 5 : index
    %c0_128 = arith.constant 0 : index
    %c0_129 = arith.constant 0 : index
    %224 = vector.load %arg4[%c5_127, %c0_128, %c0_129] : memref<9x4x12xf32, #tpu.memory_space<vmem>>, vector<1x4x12xf32>
    %225 = vector.shape_cast %224 : vector<1x4x12xf32> to vector<4x12xf32>
    %cst_130 = arith.constant dense<0.000000e+00> : vector<4x256xf32>
    %226 = tpu.matmul %225, %223, %cst_130 {dimension_numbers = #tpu.dot_dimension_numbers<[1], [0], [0], [1], [0, 0, 1, 1], [], []>} : vector<4x12xf32>, vector<12x256xf32>, vector<4x256xf32> -> vector<4x256xf32>
    %227 = arith.addf %218, %226 : vector<4x256xf32>
    %228 = vector.extract_strided_slice %182 {offsets = [0, 32], sizes = [12, 256], strides = [1, 1]} : vector<12x290xf32> to vector<12x256xf32>
    %cst_131 = arith.constant 0.000000e+00 : f32
    %229 = vector.shape_cast %23 : vector<1x256xi1> to vector<1x256xi1>
    %230 = vector.broadcast %229 : vector<1x256xi1> to vector<12x256xi1>
    %231 = vector.broadcast %cst_131 : f32 to vector<12x256xf32>
    %232 = arith.select %230, %228, %231 : vector<12x256xi1>, vector<12x256xf32>
    %c6_132 = arith.constant 6 : index
    %c0_133 = arith.constant 0 : index
    %c0_134 = arith.constant 0 : index
    %233 = vector.load %arg4[%c6_132, %c0_133, %c0_134] : memref<9x4x12xf32, #tpu.memory_space<vmem>>, vector<1x4x12xf32>
    %234 = vector.shape_cast %233 : vector<1x4x12xf32> to vector<4x12xf32>
    %cst_135 = arith.constant dense<0.000000e+00> : vector<4x256xf32>
    %235 = tpu.matmul %234, %232, %cst_135 {dimension_numbers = #tpu.dot_dimension_numbers<[1], [0], [0], [1], [0, 0, 1, 1], [], []>} : vector<4x12xf32>, vector<12x256xf32>, vector<4x256xf32> -> vector<4x256xf32>
    %236 = arith.addf %227, %235 : vector<4x256xf32>
    %237 = vector.extract_strided_slice %182 {offsets = [0, 33], sizes = [12, 256], strides = [1, 1]} : vector<12x290xf32> to vector<12x256xf32>
    %c7_136 = arith.constant 7 : index
    %c0_137 = arith.constant 0 : index
    %c0_138 = arith.constant 0 : index
    %238 = vector.load %arg4[%c7_136, %c0_137, %c0_138] : memref<9x4x12xf32, #tpu.memory_space<vmem>>, vector<1x4x12xf32>
    %239 = vector.shape_cast %238 : vector<1x4x12xf32> to vector<4x12xf32>
    %cst_139 = arith.constant dense<0.000000e+00> : vector<4x256xf32>
    %240 = tpu.matmul %239, %237, %cst_139 {dimension_numbers = #tpu.dot_dimension_numbers<[1], [0], [0], [1], [0, 0, 1, 1], [], []>} : vector<4x12xf32>, vector<12x256xf32>, vector<4x256xf32> -> vector<4x256xf32>
    %241 = arith.addf %236, %240 : vector<4x256xf32>
    %242 = vector.extract_strided_slice %182 {offsets = [0, 34], sizes = [12, 256], strides = [1, 1]} : vector<12x290xf32> to vector<12x256xf32>
    %cst_140 = arith.constant 0.000000e+00 : f32
    %243 = vector.shape_cast %25 : vector<1x256xi1> to vector<1x256xi1>
    %244 = vector.broadcast %243 : vector<1x256xi1> to vector<12x256xi1>
    %245 = vector.broadcast %cst_140 : f32 to vector<12x256xf32>
    %246 = arith.select %244, %242, %245 : vector<12x256xi1>, vector<12x256xf32>
    %c8_141 = arith.constant 8 : index
    %c0_142 = arith.constant 0 : index
    %c0_143 = arith.constant 0 : index
    %247 = vector.load %arg4[%c8_141, %c0_142, %c0_143] : memref<9x4x12xf32, #tpu.memory_space<vmem>>, vector<1x4x12xf32>
    %248 = vector.shape_cast %247 : vector<1x4x12xf32> to vector<4x12xf32>
    %cst_144 = arith.constant dense<0.000000e+00> : vector<4x256xf32>
    %249 = tpu.matmul %248, %246, %cst_144 {dimension_numbers = #tpu.dot_dimension_numbers<[1], [0], [0], [1], [0, 0, 1, 1], [], []>} : vector<4x12xf32>, vector<12x256xf32>, vector<4x256xf32> -> vector<4x256xf32>
    %250 = arith.addf %241, %249 : vector<4x256xf32>
    %c0_145 = arith.constant 0 : index
    %c0_146 = arith.constant 0 : index
    %251 = vector.load %arg9[%c0_145, %c0_146] : memref<4x1xf32, #tpu.memory_space<vmem>>, vector<4x1xf32>
    %252 = vector.broadcast %251 : vector<4x1xf32> to vector<4x256xf32>
    %253 = arith.addf %250, %252 : vector<4x256xf32>
    %cst_147 = arith.constant 0.000000e+00 : f32
    %254 = vector.broadcast %cst_147 : f32 to vector<4x256xf32>
    %255 = arith.cmpf oge, %253, %254 : vector<4x256xf32>
    %cst_148 = arith.constant 2.000000e-01 : f32
    %256 = vector.broadcast %cst_148 : f32 to vector<4x256xf32>
    %257 = arith.mulf %256, %253 : vector<4x256xf32>
    %258 = arith.select %255, %253, %257 : vector<4x256xi1>, vector<4x256xf32>
    %c12 = arith.constant 12 : index
    %c17_149 = arith.constant 17 : index
    %259 = vector.load %arg13[%c12, %c17_149] : memref<20x290xf32, #tpu.memory_space<vmem>>, vector<4x256xf32>
    tpu.vector_store %arg13[%c12, %c17_149], %258 {strides = array<i32>} : memref<20x290xf32, #tpu.memory_space<vmem>>, vector<4x256xf32>,
    %c0_150 = arith.constant 0 : index
    %c0_151 = arith.constant 0 : index
    %260 = vector.load %arg13[%c0_150, %c0_151] : memref<20x290xf32, #tpu.memory_space<vmem>>, vector<16x290xf32>
    %261 = vector.extract_strided_slice %260 {offsets = [0, 0], sizes = [16, 256], strides = [1, 1]} : vector<16x290xf32> to vector<16x256xf32>
    %cst_152 = arith.constant 0.000000e+00 : f32
    %262 = vector.shape_cast %23 : vector<1x256xi1> to vector<1x256xi1>
    %263 = vector.broadcast %262 : vector<1x256xi1> to vector<16x256xi1>
    %264 = vector.broadcast %cst_152 : f32 to vector<16x256xf32>
    %265 = arith.select %263, %261, %264 : vector<16x256xi1>, vector<16x256xf32>
    %c0_153 = arith.constant 0 : index
    %c0_154 = arith.constant 0 : index
    %c0_155 = arith.constant 0 : index
    %266 = vector.load %arg5[%c0_153, %c0_154, %c0_155] : memref<9x4x16xf32, #tpu.memory_space<vmem>>, vector<1x4x16xf32>
    %267 = vector.shape_cast %266 : vector<1x4x16xf32> to vector<4x16xf32>
    %cst_156 = arith.constant dense<0.000000e+00> : vector<4x256xf32>
    %268 = tpu.matmul %267, %265, %cst_156 {dimension_numbers = #tpu.dot_dimension_numbers<[1], [0], [0], [1], [0, 0, 1, 1], [], []>} : vector<4x16xf32>, vector<16x256xf32>, vector<4x256xf32> -> vector<4x256xf32>
    %269 = vector.extract_strided_slice %260 {offsets = [0, 1], sizes = [16, 256], strides = [1, 1]} : vector<16x290xf32> to vector<16x256xf32>
    %c1_157 = arith.constant 1 : index
    %c0_158 = arith.constant 0 : index
    %c0_159 = arith.constant 0 : index
    %270 = vector.load %arg5[%c1_157, %c0_158, %c0_159] : memref<9x4x16xf32, #tpu.memory_space<vmem>>, vector<1x4x16xf32>
    %271 = vector.shape_cast %270 : vector<1x4x16xf32> to vector<4x16xf32>
    %cst_160 = arith.constant dense<0.000000e+00> : vector<4x256xf32>
    %272 = tpu.matmul %271, %269, %cst_160 {dimension_numbers = #tpu.dot_dimension_numbers<[1], [0], [0], [1], [0, 0, 1, 1], [], []>} : vector<4x16xf32>, vector<16x256xf32>, vector<4x256xf32> -> vector<4x256xf32>
    %273 = arith.addf %268, %272 : vector<4x256xf32>
    %274 = vector.extract_strided_slice %260 {offsets = [0, 2], sizes = [16, 256], strides = [1, 1]} : vector<16x290xf32> to vector<16x256xf32>
    %cst_161 = arith.constant 0.000000e+00 : f32
    %275 = vector.shape_cast %25 : vector<1x256xi1> to vector<1x256xi1>
    %276 = vector.broadcast %275 : vector<1x256xi1> to vector<16x256xi1>
    %277 = vector.broadcast %cst_161 : f32 to vector<16x256xf32>
    %278 = arith.select %276, %274, %277 : vector<16x256xi1>, vector<16x256xf32>
    %c2_162 = arith.constant 2 : index
    %c0_163 = arith.constant 0 : index
    %c0_164 = arith.constant 0 : index
    %279 = vector.load %arg5[%c2_162, %c0_163, %c0_164] : memref<9x4x16xf32, #tpu.memory_space<vmem>>, vector<1x4x16xf32>
    %280 = vector.shape_cast %279 : vector<1x4x16xf32> to vector<4x16xf32>
    %cst_165 = arith.constant dense<0.000000e+00> : vector<4x256xf32>
    %281 = tpu.matmul %280, %278, %cst_165 {dimension_numbers = #tpu.dot_dimension_numbers<[1], [0], [0], [1], [0, 0, 1, 1], [], []>} : vector<4x16xf32>, vector<16x256xf32>, vector<4x256xf32> -> vector<4x256xf32>
    %282 = arith.addf %273, %281 : vector<4x256xf32>
    %283 = vector.extract_strided_slice %260 {offsets = [0, 16], sizes = [16, 256], strides = [1, 1]} : vector<16x290xf32> to vector<16x256xf32>
    %cst_166 = arith.constant 0.000000e+00 : f32
    %284 = vector.shape_cast %23 : vector<1x256xi1> to vector<1x256xi1>
    %285 = vector.broadcast %284 : vector<1x256xi1> to vector<16x256xi1>
    %286 = vector.broadcast %cst_166 : f32 to vector<16x256xf32>
    %287 = arith.select %285, %283, %286 : vector<16x256xi1>, vector<16x256xf32>
    %c3_167 = arith.constant 3 : index
    %c0_168 = arith.constant 0 : index
    %c0_169 = arith.constant 0 : index
    %288 = vector.load %arg5[%c3_167, %c0_168, %c0_169] : memref<9x4x16xf32, #tpu.memory_space<vmem>>, vector<1x4x16xf32>
    %289 = vector.shape_cast %288 : vector<1x4x16xf32> to vector<4x16xf32>
    %cst_170 = arith.constant dense<0.000000e+00> : vector<4x256xf32>
    %290 = tpu.matmul %289, %287, %cst_170 {dimension_numbers = #tpu.dot_dimension_numbers<[1], [0], [0], [1], [0, 0, 1, 1], [], []>} : vector<4x16xf32>, vector<16x256xf32>, vector<4x256xf32> -> vector<4x256xf32>
    %291 = arith.addf %282, %290 : vector<4x256xf32>
    %292 = vector.extract_strided_slice %260 {offsets = [0, 17], sizes = [16, 256], strides = [1, 1]} : vector<16x290xf32> to vector<16x256xf32>
    %c4_171 = arith.constant 4 : index
    %c0_172 = arith.constant 0 : index
    %c0_173 = arith.constant 0 : index
    %293 = vector.load %arg5[%c4_171, %c0_172, %c0_173] : memref<9x4x16xf32, #tpu.memory_space<vmem>>, vector<1x4x16xf32>
    %294 = vector.shape_cast %293 : vector<1x4x16xf32> to vector<4x16xf32>
    %cst_174 = arith.constant dense<0.000000e+00> : vector<4x256xf32>
    %295 = tpu.matmul %294, %292, %cst_174 {dimension_numbers = #tpu.dot_dimension_numbers<[1], [0], [0], [1], [0, 0, 1, 1], [], []>} : vector<4x16xf32>, vector<16x256xf32>, vector<4x256xf32> -> vector<4x256xf32>
    %296 = arith.addf %291, %295 : vector<4x256xf32>
    %297 = vector.extract_strided_slice %260 {offsets = [0, 18], sizes = [16, 256], strides = [1, 1]} : vector<16x290xf32> to vector<16x256xf32>
    %cst_175 = arith.constant 0.000000e+00 : f32
    %298 = vector.shape_cast %25 : vector<1x256xi1> to vector<1x256xi1>
    %299 = vector.broadcast %298 : vector<1x256xi1> to vector<16x256xi1>
    %300 = vector.broadcast %cst_175 : f32 to vector<16x256xf32>
    %301 = arith.select %299, %297, %300 : vector<16x256xi1>, vector<16x256xf32>
    %c5_176 = arith.constant 5 : index
    %c0_177 = arith.constant 0 : index
    %c0_178 = arith.constant 0 : index
    %302 = vector.load %arg5[%c5_176, %c0_177, %c0_178] : memref<9x4x16xf32, #tpu.memory_space<vmem>>, vector<1x4x16xf32>
    %303 = vector.shape_cast %302 : vector<1x4x16xf32> to vector<4x16xf32>
    %cst_179 = arith.constant dense<0.000000e+00> : vector<4x256xf32>
    %304 = tpu.matmul %303, %301, %cst_179 {dimension_numbers = #tpu.dot_dimension_numbers<[1], [0], [0], [1], [0, 0, 1, 1], [], []>} : vector<4x16xf32>, vector<16x256xf32>, vector<4x256xf32> -> vector<4x256xf32>
    %305 = arith.addf %296, %304 : vector<4x256xf32>
    %306 = vector.extract_strided_slice %260 {offsets = [0, 32], sizes = [16, 256], strides = [1, 1]} : vector<16x290xf32> to vector<16x256xf32>
    %cst_180 = arith.constant 0.000000e+00 : f32
    %307 = vector.shape_cast %23 : vector<1x256xi1> to vector<1x256xi1>
    %308 = vector.broadcast %307 : vector<1x256xi1> to vector<16x256xi1>
    %309 = vector.broadcast %cst_180 : f32 to vector<16x256xf32>
    %310 = arith.select %308, %306, %309 : vector<16x256xi1>, vector<16x256xf32>
    %c6_181 = arith.constant 6 : index
    %c0_182 = arith.constant 0 : index
    %c0_183 = arith.constant 0 : index
    %311 = vector.load %arg5[%c6_181, %c0_182, %c0_183] : memref<9x4x16xf32, #tpu.memory_space<vmem>>, vector<1x4x16xf32>
    %312 = vector.shape_cast %311 : vector<1x4x16xf32> to vector<4x16xf32>
    %cst_184 = arith.constant dense<0.000000e+00> : vector<4x256xf32>
    %313 = tpu.matmul %312, %310, %cst_184 {dimension_numbers = #tpu.dot_dimension_numbers<[1], [0], [0], [1], [0, 0, 1, 1], [], []>} : vector<4x16xf32>, vector<16x256xf32>, vector<4x256xf32> -> vector<4x256xf32>
    %314 = arith.addf %305, %313 : vector<4x256xf32>
    %315 = vector.extract_strided_slice %260 {offsets = [0, 33], sizes = [16, 256], strides = [1, 1]} : vector<16x290xf32> to vector<16x256xf32>
    %c7_185 = arith.constant 7 : index
    %c0_186 = arith.constant 0 : index
    %c0_187 = arith.constant 0 : index
    %316 = vector.load %arg5[%c7_185, %c0_186, %c0_187] : memref<9x4x16xf32, #tpu.memory_space<vmem>>, vector<1x4x16xf32>
    %317 = vector.shape_cast %316 : vector<1x4x16xf32> to vector<4x16xf32>
    %cst_188 = arith.constant dense<0.000000e+00> : vector<4x256xf32>
    %318 = tpu.matmul %317, %315, %cst_188 {dimension_numbers = #tpu.dot_dimension_numbers<[1], [0], [0], [1], [0, 0, 1, 1], [], []>} : vector<4x16xf32>, vector<16x256xf32>, vector<4x256xf32> -> vector<4x256xf32>
    %319 = arith.addf %314, %318 : vector<4x256xf32>
    %320 = vector.extract_strided_slice %260 {offsets = [0, 34], sizes = [16, 256], strides = [1, 1]} : vector<16x290xf32> to vector<16x256xf32>
    %cst_189 = arith.constant 0.000000e+00 : f32
    %321 = vector.shape_cast %25 : vector<1x256xi1> to vector<1x256xi1>
    %322 = vector.broadcast %321 : vector<1x256xi1> to vector<16x256xi1>
    %323 = vector.broadcast %cst_189 : f32 to vector<16x256xf32>
    %324 = arith.select %322, %320, %323 : vector<16x256xi1>, vector<16x256xf32>
    %c8_190 = arith.constant 8 : index
    %c0_191 = arith.constant 0 : index
    %c0_192 = arith.constant 0 : index
    %325 = vector.load %arg5[%c8_190, %c0_191, %c0_192] : memref<9x4x16xf32, #tpu.memory_space<vmem>>, vector<1x4x16xf32>
    %326 = vector.shape_cast %325 : vector<1x4x16xf32> to vector<4x16xf32>
    %cst_193 = arith.constant dense<0.000000e+00> : vector<4x256xf32>
    %327 = tpu.matmul %326, %324, %cst_193 {dimension_numbers = #tpu.dot_dimension_numbers<[1], [0], [0], [1], [0, 0, 1, 1], [], []>} : vector<4x16xf32>, vector<16x256xf32>, vector<4x256xf32> -> vector<4x256xf32>
    %328 = arith.addf %319, %327 : vector<4x256xf32>
    %c0_194 = arith.constant 0 : index
    %c0_195 = arith.constant 0 : index
    %329 = vector.load %arg10[%c0_194, %c0_195] : memref<4x1xf32, #tpu.memory_space<vmem>>, vector<4x1xf32>
    %330 = vector.broadcast %329 : vector<4x1xf32> to vector<4x256xf32>
    %331 = arith.addf %328, %330 : vector<4x256xf32>
    %cst_196 = arith.constant 0.000000e+00 : f32
    %332 = vector.broadcast %cst_196 : f32 to vector<4x256xf32>
    %333 = arith.cmpf oge, %331, %332 : vector<4x256xf32>
    %cst_197 = arith.constant 2.000000e-01 : f32
    %334 = vector.broadcast %cst_197 : f32 to vector<4x256xf32>
    %335 = arith.mulf %334, %331 : vector<4x256xf32>
    %336 = arith.select %333, %331, %335 : vector<4x256xi1>, vector<4x256xf32>
    %c16 = arith.constant 16 : index
    %c17_198 = arith.constant 17 : index
    %337 = vector.load %arg13[%c16, %c17_198] : memref<20x290xf32, #tpu.memory_space<vmem>>, vector<4x256xf32>
    tpu.vector_store %arg13[%c16, %c17_198], %336 {strides = array<i32>} : memref<20x290xf32, #tpu.memory_space<vmem>>, vector<4x256xf32>,
    %c0_199 = arith.constant 0 : index
    %c0_200 = arith.constant 0 : index
    %338 = vector.load %arg13[%c0_199, %c0_200] : memref<20x290xf32, #tpu.memory_space<vmem>>, vector<20x290xf32>
    %339 = vector.extract_strided_slice %338 {offsets = [0, 0], sizes = [20, 256], strides = [1, 1]} : vector<20x290xf32> to vector<20x256xf32>
    %cst_201 = arith.constant 0.000000e+00 : f32
    %340 = vector.shape_cast %23 : vector<1x256xi1> to vector<1x256xi1>
    %341 = vector.broadcast %340 : vector<1x256xi1> to vector<20x256xi1>
    %342 = vector.broadcast %cst_201 : f32 to vector<20x256xf32>
    %343 = arith.select %341, %339, %342 : vector<20x256xi1>, vector<20x256xf32>
    %c0_202 = arith.constant 0 : index
    %c0_203 = arith.constant 0 : index
    %c0_204 = arith.constant 0 : index
    %344 = vector.load %arg6[%c0_202, %c0_203, %c0_204] : memref<9x4x20xf32, #tpu.memory_space<vmem>>, vector<1x4x20xf32>
    %345 = vector.shape_cast %344 : vector<1x4x20xf32> to vector<4x20xf32>
    %cst_205 = arith.constant dense<0.000000e+00> : vector<4x256xf32>
    %346 = tpu.matmul %345, %343, %cst_205 {dimension_numbers = #tpu.dot_dimension_numbers<[1], [0], [0], [1], [0, 0, 1, 1], [], []>} : vector<4x20xf32>, vector<20x256xf32>, vector<4x256xf32> -> vector<4x256xf32>
    %347 = vector.extract_strided_slice %338 {offsets = [0, 1], sizes = [20, 256], strides = [1, 1]} : vector<20x290xf32> to vector<20x256xf32>
    %c1_206 = arith.constant 1 : index
    %c0_207 = arith.constant 0 : index
    %c0_208 = arith.constant 0 : index
    %348 = vector.load %arg6[%c1_206, %c0_207, %c0_208] : memref<9x4x20xf32, #tpu.memory_space<vmem>>, vector<1x4x20xf32>
    %349 = vector.shape_cast %348 : vector<1x4x20xf32> to vector<4x20xf32>
    %cst_209 = arith.constant dense<0.000000e+00> : vector<4x256xf32>
    %350 = tpu.matmul %349, %347, %cst_209 {dimension_numbers = #tpu.dot_dimension_numbers<[1], [0], [0], [1], [0, 0, 1, 1], [], []>} : vector<4x20xf32>, vector<20x256xf32>, vector<4x256xf32> -> vector<4x256xf32>
    %351 = arith.addf %346, %350 : vector<4x256xf32>
    %352 = vector.extract_strided_slice %338 {offsets = [0, 2], sizes = [20, 256], strides = [1, 1]} : vector<20x290xf32> to vector<20x256xf32>
    %cst_210 = arith.constant 0.000000e+00 : f32
    %353 = vector.shape_cast %25 : vector<1x256xi1> to vector<1x256xi1>
    %354 = vector.broadcast %353 : vector<1x256xi1> to vector<20x256xi1>
    %355 = vector.broadcast %cst_210 : f32 to vector<20x256xf32>
    %356 = arith.select %354, %352, %355 : vector<20x256xi1>, vector<20x256xf32>
    %c2_211 = arith.constant 2 : index
    %c0_212 = arith.constant 0 : index
    %c0_213 = arith.constant 0 : index
    %357 = vector.load %arg6[%c2_211, %c0_212, %c0_213] : memref<9x4x20xf32, #tpu.memory_space<vmem>>, vector<1x4x20xf32>
    %358 = vector.shape_cast %357 : vector<1x4x20xf32> to vector<4x20xf32>
    %cst_214 = arith.constant dense<0.000000e+00> : vector<4x256xf32>
    %359 = tpu.matmul %358, %356, %cst_214 {dimension_numbers = #tpu.dot_dimension_numbers<[1], [0], [0], [1], [0, 0, 1, 1], [], []>} : vector<4x20xf32>, vector<20x256xf32>, vector<4x256xf32> -> vector<4x256xf32>
    %360 = arith.addf %351, %359 : vector<4x256xf32>
    %361 = vector.extract_strided_slice %338 {offsets = [0, 16], sizes = [20, 256], strides = [1, 1]} : vector<20x290xf32> to vector<20x256xf32>
    %cst_215 = arith.constant 0.000000e+00 : f32
    %362 = vector.shape_cast %23 : vector<1x256xi1> to vector<1x256xi1>
    %363 = vector.broadcast %362 : vector<1x256xi1> to vector<20x256xi1>
    %364 = vector.broadcast %cst_215 : f32 to vector<20x256xf32>
    %365 = arith.select %363, %361, %364 : vector<20x256xi1>, vector<20x256xf32>
    %c3_216 = arith.constant 3 : index
    %c0_217 = arith.constant 0 : index
    %c0_218 = arith.constant 0 : index
    %366 = vector.load %arg6[%c3_216, %c0_217, %c0_218] : memref<9x4x20xf32, #tpu.memory_space<vmem>>, vector<1x4x20xf32>
    %367 = vector.shape_cast %366 : vector<1x4x20xf32> to vector<4x20xf32>
    %cst_219 = arith.constant dense<0.000000e+00> : vector<4x256xf32>
    %368 = tpu.matmul %367, %365, %cst_219 {dimension_numbers = #tpu.dot_dimension_numbers<[1], [0], [0], [1], [0, 0, 1, 1], [], []>} : vector<4x20xf32>, vector<20x256xf32>, vector<4x256xf32> -> vector<4x256xf32>
    %369 = arith.addf %360, %368 : vector<4x256xf32>
    %370 = vector.extract_strided_slice %338 {offsets = [0, 17], sizes = [20, 256], strides = [1, 1]} : vector<20x290xf32> to vector<20x256xf32>
    %c4_220 = arith.constant 4 : index
    %c0_221 = arith.constant 0 : index
    %c0_222 = arith.constant 0 : index
    %371 = vector.load %arg6[%c4_220, %c0_221, %c0_222] : memref<9x4x20xf32, #tpu.memory_space<vmem>>, vector<1x4x20xf32>
    %372 = vector.shape_cast %371 : vector<1x4x20xf32> to vector<4x20xf32>
    %cst_223 = arith.constant dense<0.000000e+00> : vector<4x256xf32>
    %373 = tpu.matmul %372, %370, %cst_223 {dimension_numbers = #tpu.dot_dimension_numbers<[1], [0], [0], [1], [0, 0, 1, 1], [], []>} : vector<4x20xf32>, vector<20x256xf32>, vector<4x256xf32> -> vector<4x256xf32>
    %374 = arith.addf %369, %373 : vector<4x256xf32>
    %375 = vector.extract_strided_slice %338 {offsets = [0, 18], sizes = [20, 256], strides = [1, 1]} : vector<20x290xf32> to vector<20x256xf32>
    %cst_224 = arith.constant 0.000000e+00 : f32
    %376 = vector.shape_cast %25 : vector<1x256xi1> to vector<1x256xi1>
    %377 = vector.broadcast %376 : vector<1x256xi1> to vector<20x256xi1>
    %378 = vector.broadcast %cst_224 : f32 to vector<20x256xf32>
    %379 = arith.select %377, %375, %378 : vector<20x256xi1>, vector<20x256xf32>
    %c5_225 = arith.constant 5 : index
    %c0_226 = arith.constant 0 : index
    %c0_227 = arith.constant 0 : index
    %380 = vector.load %arg6[%c5_225, %c0_226, %c0_227] : memref<9x4x20xf32, #tpu.memory_space<vmem>>, vector<1x4x20xf32>
    %381 = vector.shape_cast %380 : vector<1x4x20xf32> to vector<4x20xf32>
    %cst_228 = arith.constant dense<0.000000e+00> : vector<4x256xf32>
    %382 = tpu.matmul %381, %379, %cst_228 {dimension_numbers = #tpu.dot_dimension_numbers<[1], [0], [0], [1], [0, 0, 1, 1], [], []>} : vector<4x20xf32>, vector<20x256xf32>, vector<4x256xf32> -> vector<4x256xf32>
    %383 = arith.addf %374, %382 : vector<4x256xf32>
    %384 = vector.extract_strided_slice %338 {offsets = [0, 32], sizes = [20, 256], strides = [1, 1]} : vector<20x290xf32> to vector<20x256xf32>
    %cst_229 = arith.constant 0.000000e+00 : f32
    %385 = vector.shape_cast %23 : vector<1x256xi1> to vector<1x256xi1>
    %386 = vector.broadcast %385 : vector<1x256xi1> to vector<20x256xi1>
    %387 = vector.broadcast %cst_229 : f32 to vector<20x256xf32>
    %388 = arith.select %386, %384, %387 : vector<20x256xi1>, vector<20x256xf32>
    %c6_230 = arith.constant 6 : index
    %c0_231 = arith.constant 0 : index
    %c0_232 = arith.constant 0 : index
    %389 = vector.load %arg6[%c6_230, %c0_231, %c0_232] : memref<9x4x20xf32, #tpu.memory_space<vmem>>, vector<1x4x20xf32>
    %390 = vector.shape_cast %389 : vector<1x4x20xf32> to vector<4x20xf32>
    %cst_233 = arith.constant dense<0.000000e+00> : vector<4x256xf32>
    %391 = tpu.matmul %390, %388, %cst_233 {dimension_numbers = #tpu.dot_dimension_numbers<[1], [0], [0], [1], [0, 0, 1, 1], [], []>} : vector<4x20xf32>, vector<20x256xf32>, vector<4x256xf32> -> vector<4x256xf32>
    %392 = arith.addf %383, %391 : vector<4x256xf32>
    %393 = vector.extract_strided_slice %338 {offsets = [0, 33], sizes = [20, 256], strides = [1, 1]} : vector<20x290xf32> to vector<20x256xf32>
    %c7_234 = arith.constant 7 : index
    %c0_235 = arith.constant 0 : index
    %c0_236 = arith.constant 0 : index
    %394 = vector.load %arg6[%c7_234, %c0_235, %c0_236] : memref<9x4x20xf32, #tpu.memory_space<vmem>>, vector<1x4x20xf32>
    %395 = vector.shape_cast %394 : vector<1x4x20xf32> to vector<4x20xf32>
    %cst_237 = arith.constant dense<0.000000e+00> : vector<4x256xf32>
    %396 = tpu.matmul %395, %393, %cst_237 {dimension_numbers = #tpu.dot_dimension_numbers<[1], [0], [0], [1], [0, 0, 1, 1], [], []>} : vector<4x20xf32>, vector<20x256xf32>, vector<4x256xf32> -> vector<4x256xf32>
    %397 = arith.addf %392, %396 : vector<4x256xf32>
    %398 = vector.extract_strided_slice %338 {offsets = [0, 34], sizes = [20, 256], strides = [1, 1]} : vector<20x290xf32> to vector<20x256xf32>
    %cst_238 = arith.constant 0.000000e+00 : f32
    %399 = vector.shape_cast %25 : vector<1x256xi1> to vector<1x256xi1>
    %400 = vector.broadcast %399 : vector<1x256xi1> to vector<20x256xi1>
    %401 = vector.broadcast %cst_238 : f32 to vector<20x256xf32>
    %402 = arith.select %400, %398, %401 : vector<20x256xi1>, vector<20x256xf32>
    %c8_239 = arith.constant 8 : index
    %c0_240 = arith.constant 0 : index
    %c0_241 = arith.constant 0 : index
    %403 = vector.load %arg6[%c8_239, %c0_240, %c0_241] : memref<9x4x20xf32, #tpu.memory_space<vmem>>, vector<1x4x20xf32>
    %404 = vector.shape_cast %403 : vector<1x4x20xf32> to vector<4x20xf32>
    %cst_242 = arith.constant dense<0.000000e+00> : vector<4x256xf32>
    %405 = tpu.matmul %404, %402, %cst_242 {dimension_numbers = #tpu.dot_dimension_numbers<[1], [0], [0], [1], [0, 0, 1, 1], [], []>} : vector<4x20xf32>, vector<20x256xf32>, vector<4x256xf32> -> vector<4x256xf32>
    %406 = arith.addf %397, %405 : vector<4x256xf32>
    %c0_243 = arith.constant 0 : index
    %c0_244 = arith.constant 0 : index
    %407 = vector.load %arg11[%c0_243, %c0_244] : memref<4x1xf32, #tpu.memory_space<vmem>>, vector<4x1xf32>
    %408 = vector.broadcast %407 : vector<4x1xf32> to vector<4x256xf32>
    %409 = arith.addf %406, %408 : vector<4x256xf32>
    %cst_245 = arith.constant 0.000000e+00 : f32
    %410 = vector.broadcast %cst_245 : f32 to vector<4x256xf32>
    %411 = arith.cmpf oge, %409, %410 : vector<4x256xf32>
    %cst_246 = arith.constant 2.000000e-01 : f32
    %412 = vector.broadcast %cst_246 : f32 to vector<4x256xf32>
    %413 = arith.mulf %412, %409 : vector<4x256xf32>
    %414 = arith.select %411, %409, %413 : vector<4x256xi1>, vector<4x256xf32>
    %cst_247 = arith.constant 2.000000e-01 : f32
    %415 = vector.broadcast %cst_247 : f32 to vector<4x256xf32>
    %416 = arith.mulf %414, %415 : vector<4x256xf32>
    %c0_248 = arith.constant 0 : index
    %c0_249 = arith.constant 0 : index
    %c0_250 = arith.constant 0 : index
    %417 = vector.load %arg1[%c0_248, %c0_249, %c0_250] : memref<1x4x256xf32, #tpu.memory_space<vmem>>, vector<1x4x256xf32>
    %418 = vector.shape_cast %417 : vector<1x4x256xf32> to vector<4x256xf32>
    %419 = arith.addf %416, %418 : vector<4x256xf32>
    %c0_251 = arith.constant 0 : index
    %c0_252 = arith.constant 0 : index
    %c0_253 = arith.constant 0 : index
    %420 = vector.load %arg12[%c0_251, %c0_252, %c0_253] : memref<1x4x256xf32, #tpu.memory_space<vmem>>, vector<1x4x256xf32>
    %421 = vector.shape_cast %420 : vector<1x4x256xf32> to vector<4x256xf32>
    %422 = vector.shape_cast %419 : vector<4x256xf32> to vector<1x4x256xf32>
    tpu.vector_store %arg12[%c0_251, %c0_252, %c0_253], %422 {strides = array<i32>} : memref<1x4x256xf32, #tpu.memory_space<vmem>>, vector<1x4x256xf32>,
    return
  }
  func.func @transform_0(%arg0: i32) -> (i32, i32, i32) {
    %c0_i32 = arith.constant 0 : i32
    %c0_i32_0 = arith.constant 0 : i32
    %c0_i32_1 = arith.constant 0 : i32
    return %arg0, %c0_i32, %c0_i32_0 : i32, i32, i32
  }
  func.func @transform_1(%arg0: i32) -> (i32, i32, i32) {
    %c0_i32 = arith.constant 0 : i32
    %c0_i32_0 = arith.constant 0 : i32
    %c0_i32_1 = arith.constant 0 : i32
    %c0_i32_2 = arith.constant 0 : i32
    return %c0_i32, %c0_i32_0, %c0_i32_1 : i32, i32, i32
  }
  func.func @transform_2(%arg0: i32) -> (i32, i32, i32) {
    %c0_i32 = arith.constant 0 : i32
    %c0_i32_0 = arith.constant 0 : i32
    %c0_i32_1 = arith.constant 0 : i32
    %c0_i32_2 = arith.constant 0 : i32
    return %c0_i32, %c0_i32_0, %c0_i32_1 : i32, i32, i32
  }
  func.func @transform_3(%arg0: i32) -> (i32, i32, i32) {
    %c0_i32 = arith.constant 0 : i32
    %c0_i32_0 = arith.constant 0 : i32
    %c0_i32_1 = arith.constant 0 : i32
    %c0_i32_2 = arith.constant 0 : i32
    return %c0_i32, %c0_i32_0, %c0_i32_1 : i32, i32, i32
  }
  func.func @transform_4(%arg0: i32) -> (i32, i32, i32) {
    %c0_i32 = arith.constant 0 : i32
    %c0_i32_0 = arith.constant 0 : i32
    %c0_i32_1 = arith.constant 0 : i32
    %c0_i32_2 = arith.constant 0 : i32
    return %c0_i32, %c0_i32_0, %c0_i32_1 : i32, i32, i32
  }
  func.func @transform_5(%arg0: i32) -> (i32, i32, i32) {
    %c0_i32 = arith.constant 0 : i32
    %c0_i32_0 = arith.constant 0 : i32
    %c0_i32_1 = arith.constant 0 : i32
    %c0_i32_2 = arith.constant 0 : i32
    return %c0_i32, %c0_i32_0, %c0_i32_1 : i32, i32, i32
  }
  func.func @transform_6(%arg0: i32) -> (i32, i32) {
    %c0_i32 = arith.constant 0 : i32
    %c0_i32_0 = arith.constant 0 : i32
    %c0_i32_1 = arith.constant 0 : i32
    return %c0_i32, %c0_i32_0 : i32, i32
  }
  func.func @transform_7(%arg0: i32) -> (i32, i32) {
    %c0_i32 = arith.constant 0 : i32
    %c0_i32_0 = arith.constant 0 : i32
    %c0_i32_1 = arith.constant 0 : i32
    return %c0_i32, %c0_i32_0 : i32, i32
  }
  func.func @transform_8(%arg0: i32) -> (i32, i32) {
    %c0_i32 = arith.constant 0 : i32
    %c0_i32_0 = arith.constant 0 : i32
    %c0_i32_1 = arith.constant 0 : i32
    return %c0_i32, %c0_i32_0 : i32, i32
  }
  func.func @transform_9(%arg0: i32) -> (i32, i32) {
    %c0_i32 = arith.constant 0 : i32
    %c0_i32_0 = arith.constant 0 : i32
    %c0_i32_1 = arith.constant 0 : i32
    return %c0_i32, %c0_i32_0 : i32, i32
  }
  func.func @transform_10(%arg0: i32) -> (i32, i32) {
    %c0_i32 = arith.constant 0 : i32
    %c0_i32_0 = arith.constant 0 : i32
    %c0_i32_1 = arith.constant 0 : i32
    return %c0_i32, %c0_i32_0 : i32, i32
  }
  func.func @transform_11(%arg0: i32) -> (i32, i32, i32) {
    %c0_i32 = arith.constant 0 : i32
    %c0_i32_0 = arith.constant 0 : i32
    %c0_i32_1 = arith.constant 0 : i32
    return %arg0, %c0_i32, %c0_i32_0 : i32, i32, i32
  }
}

</mosaic_0001>

<llo_original>
// kernel: residual_dense_block5.1
$region0: #{residual_dense_block5.1}
  #allocation0 [shape = 'u32[]', space=smem, size = 0x4, offset = 0x4, fixed_abs, tag = 'smem constant byte address 0x4 - core index']
  #allocation1 [shape = 'u32[144,128]{1,0:T(1,128)}', space=vmem, size = 0x12000, scoped, tag = 'internal scratch']
  #allocation2 [shape = 'f32[20,290]{1,0:T(8,128)}', space=vmem, size = 0x9000, scoped, tag = 'scratch operand']
  %s0 = inlined_call_operand.vmem [shape: f32[2,4,256], index: 0, kind: input, shape index: {}]
  %s1 = inlined_call_operand.vmem [shape: f32[9,4,4], index: 1, kind: input, shape index: {}]
  %s2 = inlined_call_operand.vmem [shape: f32[9,4,8], index: 2, kind: input, shape index: {}]
  %s3 = inlined_call_operand.vmem [shape: f32[9,4,12], index: 3, kind: input, shape index: {}]
  %s4 = inlined_call_operand.vmem [shape: f32[9,4,16], index: 4, kind: input, shape index: {}]
  %s5 = inlined_call_operand.vmem [shape: f32[9,4,20], index: 5, kind: input, shape index: {}]
  %s6 = inlined_call_operand.vmem [shape: f32[4,1], index: 6, kind: input, shape index: {}]
  %s7 = inlined_call_operand.vmem [shape: f32[4,1], index: 7, kind: input, shape index: {}]
  %s8 = inlined_call_operand.vmem [shape: f32[4,1], index: 8, kind: input, shape index: {}]
  %s9 = inlined_call_operand.vmem [shape: f32[4,1], index: 9, kind: input, shape index: {}]
  %s10 = inlined_call_operand.vmem [shape: f32[4,1], index: 10, kind: input, shape index: {}]
  %s11 = inlined_call_operand.vmem [shape: f32[2,4,256], index: 11, kind: output, shape index: {}]
  %s12 = sld [smem:[#allocation0]]
  $region77: #{residual_dense_block5.1} parent=0
    _
  %s14 = ssub.s32 1, %s12
  %s15 = scalar_select 0, %s14, %s12
  loop: start=0, step=1, limit=4
  $region2: #{residual_dense_block5.1} parent=0 // loop_pre_header
    _
  $region3: #{residual_dense_block5.1} parent=0 // loop_header
    %s17 = sphi 0, %s21
    %p18 = scmp.ge.s32.totalorder %s17, 4
    %s27 = sphi 0, %s29
    %s30 = sphi 0, %s27
    %s31 = sphi 0, %s30
    %s47 = sphi 0, %s31
    %s51 = sphi 0, %s51
    %s53 = sphi 0, %s51
    %s54 = sphi 0, %s53
    %s68 = sphi 0, %s54
    %s72 = sphi 0, %s72
    %s74 = sphi 0, %s72
    %s75 = sphi 0, %s74
    %s89 = sphi 0, %s75
    %s93 = sphi 0, %s93
    %s95 = sphi 0, %s93
    %s96 = sphi 0, %s95
    %s110 = sphi 0, %s96
    %s114 = sphi 0, %s114
    %s116 = sphi 0, %s114
    %s117 = sphi 0, %s116
    %s131 = sphi 0, %s117
    %s135 = sphi 0, %s135
    %s137 = sphi 0, %s135
    %s138 = sphi 0, %s137
    %s152 = sphi 0, %s138
    %s156 = sphi 0, %s156
    %s158 = sphi 0, %s156
    %s159 = sphi 0, %s158
    %s173 = sphi 0, %s159
    %s177 = sphi 0, %s177
    %s179 = sphi 0, %s177
    %s180 = sphi 0, %s179
    %s194 = sphi 0, %s180
    %s198 = sphi 0, %s198
    %s200 = sphi 0, %s198
    %s201 = sphi 0, %s200
    %s215 = sphi 0, %s201
    %s219 = sphi 0, %s219
    %s221 = sphi 0, %s219
    %s222 = sphi 0, %s221
    %s236 = sphi 0, %s222
    %s240 = sphi 0, %s240
    %s242 = sphi 0, %s240
    %s243 = sphi 0, %s242
    %s257 = sphi 0, %s243
    %s263 = sphi 0, %s265
    %s266 = sphi 0, %s263
    %s267 = sphi 0, %s266
    %s283 = sphi 0, %s267
  $region4: #{residual_dense_block5.1} parent=0 // loop_header_branch
    %20 = sbr.rel (%p18) target = $region8
  $region5: #{residual_dense_block5.1} parent=0 // loop_body
    %s22 = ssub.s32 %s17, 1
    %s23 = ssub.s32 %s17, 2
    %s24 = sadd.s32 %s17, 1
    %s25 = ssub.s32 %s17, %s24
    %p26 = scmp.eq.s32.totalorder %s25, 0
    %s28 = sadd.s32 %s27, 1
    %s29 = scalar_select %p26, %s27, %s28
    %p32 = pneg %p26
    %p33 = scmp.eq.s32.totalorder %s17, 1
    %p34 = por %p32, %p33
    %p35 = scmp.ne.s32.totalorder %s27, %s30
    %p36 = scmp.eq.s32.totalorder %s17, 0
    %p37 = por %p35, %p36
    %p38 = scmp.ne.s32.totalorder %s27, %s30
    %p39 = scmp.eq.s32.totalorder %s22, 1
    %p40 = por %p38, %p39
    %p41 = scmp.ne.s32.totalorder %s30, %s31
    %p42 = scmp.eq.s32.totalorder %s22, 0
    %p43 = por %p41, %p42
    %p44 = scmp.ne.s32.totalorder %s30, %s31
    %p45 = scmp.eq.s32.totalorder %s23, 1
    %p46 = por %p44, %p45
    %p48 = scmp.ne.s32.totalorder %s31, %s47
    %p49 = scmp.eq.s32.totalorder %s23, 0
    %p50 = por %p48, %p49
    %s52 = sadd.s32 %s51, 1
    %p55 = scmp.eq.s32.totalorder %s17, 1
    %p56 = scmp.ne.s32.totalorder %s51, %s53
    %p57 = scmp.eq.s32.totalorder %s17, 0
    %p58 = por %p56, %p57
    %p59 = scmp.ne.s32.totalorder %s51, %s53
    %p60 = scmp.eq.s32.totalorder %s22, 1
    %p61 = por %p59, %p60
    %p62 = scmp.ne.s32.totalorder %s53, %s54
    %p63 = scmp.eq.s32.totalorder %s22, 0
    %p64 = por %p62, %p63
    %p65 = scmp.ne.s32.totalorder %s53, %s54
    %p66 = scmp.eq.s32.totalorder %s23, 1
    %p67 = por %p65, %p66
    %p69 = scmp.ne.s32.totalorder %s54, %s68
    %p70 = scmp.eq.s32.totalorder %s23, 0
    %p71 = por %p69, %p70
    %s73 = sadd.s32 %s72, 1
    %p76 = scmp.eq.s32.totalorder %s17, 1
    %p77 = scmp.ne.s32.totalorder %s72, %s74
    %p78 = scmp.eq.s32.totalorder %s17, 0
    %p79 = por %p77, %p78
    %p80 = scmp.ne.s32.totalorder %s72, %s74
    %p81 = scmp.eq.s32.totalorder %s22, 1
    %p82 = por %p80, %p81
    %p83 = scmp.ne.s32.totalorder %s74, %s75
    %p84 = scmp.eq.s32.totalorder %s22, 0
    %p85 = por %p83, %p84
    %p86 = scmp.ne.s32.totalorder %s74, %s75
    %p87 = scmp.eq.s32.totalorder %s23, 1
    %p88 = por %p86, %p87
    %p90 = scmp.ne.s32.totalorder %s75, %s89
    %p91 = scmp.eq.s32.totalorder %s23, 0
    %p92 = por %p90, %p91
    %s94 = sadd.s32 %s93, 1
    %p97 = scmp.eq.s32.totalorder %s17, 1
    %p98 = scmp.ne.s32.totalorder %s93, %s95
    %p99 = scmp.eq.s32.totalorder %s17, 0
    %p100 = por %p98, %p99
    %p101 = scmp.ne.s32.totalorder %s93, %s95
    %p102 = scmp.eq.s32.totalorder %s22, 1
    %p103 = por %p101, %p102
    %p104 = scmp.ne.s32.totalorder %s95, %s96
    %p105 = scmp.eq.s32.totalorder %s22, 0
    %p106 = por %p104, %p105
    %p107 = scmp.ne.s32.totalorder %s95, %s96
    %p108 = scmp.eq.s32.totalorder %s23, 1
    %p109 = por %p107, %p108
    %p111 = scmp.ne.s32.totalorder %s96, %s110
    %p112 = scmp.eq.s32.totalorder %s23, 0
    %p113 = por %p111, %p112
    %s115 = sadd.s32 %s114, 1
    %p118 = scmp.eq.s32.totalorder %s17, 1
    %p119 = scmp.ne.s32.totalorder %s114, %s116
    %p120 = scmp.eq.s32.totalorder %s17, 0
    %p121 = por %p119, %p120
    %p122 = scmp.ne.s32.totalorder %s114, %s116
    %p123 = scmp.eq.s32.totalorder %s22, 1
    %p124 = por %p122, %p123
    %p125 = scmp.ne.s32.totalorder %s116, %s117
    %p126 = scmp.eq.s32.totalorder %s22, 0
    %p127 = por %p125, %p126
    %p128 = scmp.ne.s32.totalorder %s116, %s117
    %p129 = scmp.eq.s32.totalorder %s23, 1
    %p130 = por %p128, %p129
    %p132 = scmp.ne.s32.totalorder %s117, %s131
    %p133 = scmp.eq.s32.totalorder %s23, 0
    %p134 = por %p132, %p133
    %s136 = sadd.s32 %s135, 1
    %p139 = scmp.eq.s32.totalorder %s17, 1
    %p140 = scmp.ne.s32.totalorder %s135, %s137
    %p141 = scmp.eq.s32.totalorder %s17, 0
    %p142 = por %p140, %p141
    %p143 = scmp.ne.s32.totalorder %s135, %s137
    %p144 = scmp.eq.s32.totalorder %s22, 1
    %p145 = por %p143, %p144
    %p146 = scmp.ne.s32.totalorder %s137, %s138
    %p147 = scmp.eq.s32.totalorder %s22, 0
    %p148 = por %p146, %p147
    %p149 = scmp.ne.s32.totalorder %s137, %s138
    %p150 = scmp.eq.s32.totalorder %s23, 1
    %p151 = por %p149, %p150
    %p153 = scmp.ne.s32.totalorder %s138, %s152
    %p154 = scmp.eq.s32.totalorder %s23, 0
    %p155 = por %p153, %p154
    %s157 = sadd.s32 %s156, 1
    %p160 = scmp.eq.s32.totalorder %s17, 1
    %p161 = scmp.ne.s32.totalorder %s156, %s158
    %p162 = scmp.eq.s32.totalorder %s17, 0
    %p163 = por %p161, %p162
    %p164 = scmp.ne.s32.totalorder %s156, %s158
    %p165 = scmp.eq.s32.totalorder %s22, 1
    %p166 = por %p164, %p165
    %p167 = scmp.ne.s32.totalorder %s158, %s159
    %p168 = scmp.eq.s32.totalorder %s22, 0
    %p169 = por %p167, %p168
    %p170 = scmp.ne.s32.totalorder %s158, %s159
    %p171 = scmp.eq.s32.totalorder %s23, 1
    %p172 = por %p170, %p171
    %p174 = scmp.ne.s32.totalorder %s159, %s173
    %p175 = scmp.eq.s32.totalorder %s23, 0
    %p176 = por %p174, %p175
    %s178 = sadd.s32 %s177, 1
    %p181 = scmp.eq.s32.totalorder %s17, 1
    %p182 = scmp.ne.s32.totalorder %s177, %s179
    %p183 = scmp.eq.s32.totalorder %s17, 0
    %p184 = por %p182, %p183
    %p185 = scmp.ne.s32.totalorder %s177, %s179
    %p186 = scmp.eq.s32.totalorder %s22, 1
    %p187 = por %p185, %p186
    %p188 = scmp.ne.s32.totalorder %s179, %s180
    %p189 = scmp.eq.s32.totalorder %s22, 0
    %p190 = por %p188, %p189
    %p191 = scmp.ne.s32.totalorder %s179, %s180
    %p192 = scmp.eq.s32.totalorder %s23, 1
    %p193 = por %p191, %p192
    %p195 = scmp.ne.s32.totalorder %s180, %s194
    %p196 = scmp.eq.s32.totalorder %s23, 0
    %p197 = por %p195, %p196
    %s199 = sadd.s32 %s198, 1
    %p202 = scmp.eq.s32.totalorder %s17, 1
    %p203 = scmp.ne.s32.totalorder %s198, %s200
    %p204 = scmp.eq.s32.totalorder %s17, 0
    %p205 = por %p203, %p204
    %p206 = scmp.ne.s32.totalorder %s198, %s200
    %p207 = scmp.eq.s32.totalorder %s22, 1
    %p208 = por %p206, %p207
    %p209 = scmp.ne.s32.totalorder %s200, %s201
    %p210 = scmp.eq.s32.totalorder %s22, 0
    %p211 = por %p209, %p210
    %p212 = scmp.ne.s32.totalorder %s200, %s201
    %p213 = scmp.eq.s32.totalorder %s23, 1
    %p214 = por %p212, %p213
    %p216 = scmp.ne.s32.totalorder %s201, %s215
    %p217 = scmp.eq.s32.totalorder %s23, 0
    %p218 = por %p216, %p217
    %s220 = sadd.s32 %s219, 1
    %p223 = scmp.eq.s32.totalorder %s17, 1
    %p224 = scmp.ne.s32.totalorder %s219, %s221
    %p225 = scmp.eq.s32.totalorder %s17, 0
    %p226 = por %p224, %p225
    %p227 = scmp.ne.s32.totalorder %s219, %s221
    %p228 = scmp.eq.s32.totalorder %s22, 1
    %p229 = por %p227, %p228
    %p230 = scmp.ne.s32.totalorder %s221, %s222
    %p231 = scmp.eq.s32.totalorder %s22, 0
    %p232 = por %p230, %p231
    %p233 = scmp.ne.s32.totalorder %s221, %s222
    %p234 = scmp.eq.s32.totalorder %s23, 1
    %p235 = por %p233, %p234
    %p237 = scmp.ne.s32.totalorder %s222, %s236
    %p238 = scmp.eq.s32.totalorder %s23, 0
    %p239 = por %p237, %p238
    %s241 = sadd.s32 %s240, 1
    %p244 = scmp.eq.s32.totalorder %s17, 1
    %p245 = scmp.ne.s32.totalorder %s240, %s242
    %p246 = scmp.eq.s32.totalorder %s17, 0
    %p247 = por %p245, %p246
    %p248 = scmp.ne.s32.totalorder %s240, %s242
    %p249 = scmp.eq.s32.totalorder %s22, 1
    %p250 = por %p248, %p249
    %p251 = scmp.ne.s32.totalorder %s242, %s243
    %p252 = scmp.eq.s32.totalorder %s22, 0
    %p253 = por %p251, %p252
    %p254 = scmp.ne.s32.totalorder %s242, %s243
    %p255 = scmp.eq.s32.totalorder %s23, 1
    %p256 = por %p254, %p255
    %p258 = scmp.ne.s32.totalorder %s243, %s257
    %p259 = scmp.eq.s32.totalorder %s23, 0
    %p260 = por %p258, %p259
    %s261 = ssub.s32 %s17, %s24
    %p262 = scmp.eq.s32.totalorder %s261, 0
    %s264 = sadd.s32 %s263, 1
    %s265 = scalar_select %p262, %s263, %s264
    %p268 = pneg %p262
    %p269 = scmp.eq.s32.totalorder %s17, 1
    %p270 = por %p268, %p269
    %p271 = scmp.ne.s32.totalorder %s263, %s266
    %p272 = scmp.eq.s32.totalorder %s17, 0
    %p273 = por %p271, %p272
    %p274 = scmp.ne.s32.totalorder %s263, %s266
    %p275 = scmp.eq.s32.totalorder %s22, 1
    %p276 = por %p274, %p275
    %p277 = scmp.ne.s32.totalorder %s266, %s267
    %p278 = scmp.eq.s32.totalorder %s22, 0
    %p279 = por %p277, %p278
    %p280 = scmp.ne.s32.totalorder %s266, %s267
    %p281 = scmp.eq.s32.totalorder %s23, 1
    %p282 = por %p280, %p281
    %p284 = scmp.ne.s32.totalorder %s267, %s283
    %p285 = scmp.eq.s32.totalorder %s23, 0
    %p286 = por %p284, %p285
    %p287 = scmp.le.s32.totalorder 1, %s17
    %p288 = scmp.lt.s32.totalorder %s17, 3
    %p289 = pnand %p287, %p288
    %p290 = pneg %p289
    // Predicated region
    $region9: #{residual_dense_block5.1} parent=5 // pred_check
      _
    $region10: #{residual_dense_block5.1} parent=5 // pred_check_branch
      %292 = sbr.rel (%p289) target = $region12
    $region11: #{residual_dense_block5.1} parent=5 // pred_region
      %s293 = ssub.s32 %s17, 1
      // Predicated region
      $region13: #{residual_dense_block5.1} parent=11 // pred_check
        %p294 = pneg %p64
      $region14: #{residual_dense_block5.1} parent=11 // pred_check_branch
        %296 = sbr.rel (%p294) target = $region16
      $region15: #{residual_dense_block5.1} parent=11 // pred_region
        _
      $region16: #{residual_dense_block5.1} parent=11 // pred_fallthru
        _
      // Predicated region
      $region17: #{residual_dense_block5.1} parent=11 // pred_check
        %p297 = pneg %p85
      $region18: #{residual_dense_block5.1} parent=11 // pred_check_branch
        %299 = sbr.rel (%p297) target = $region20
      $region19: #{residual_dense_block5.1} parent=11 // pred_region
        _
      $region20: #{residual_dense_block5.1} parent=11 // pred_fallthru
        _
      // Predicated region
      $region21: #{residual_dense_block5.1} parent=11 // pred_check
        %p300 = pneg %p106
      $region22: #{residual_dense_block5.1} parent=11 // pred_check_branch
        %302 = sbr.rel (%p300) target = $region24
      $region23: #{residual_dense_block5.1} parent=11 // pred_region
        _
      $region24: #{residual_dense_block5.1} parent=11 // pred_fallthru
        _
      // Predicated region
      $region25: #{residual_dense_block5.1} parent=11 // pred_check
        %p303 = pneg %p127
      $region26: #{residual_dense_block5.1} parent=11 // pred_check_branch
        %305 = sbr.rel (%p303) target = $region28
      $region27: #{residual_dense_block5.1} parent=11 // pred_region
        _
      $region28: #{residual_dense_block5.1} parent=11 // pred_fallthru
        _
      // Predicated region
      $region29: #{residual_dense_block5.1} parent=11 // pred_check
        %p306 = pneg %p148
      $region30: #{residual_dense_block5.1} parent=11 // pred_check_branch
        %308 = sbr.rel (%p306) target = $region32
      $region31: #{residual_dense_block5.1} parent=11 // pred_region
        _
      $region32: #{residual_dense_block5.1} parent=11 // pred_fallthru
        _
      // Predicated region
      $region33: #{residual_dense_block5.1} parent=11 // pred_check
        %p309 = pneg %p169
      $region34: #{residual_dense_block5.1} parent=11 // pred_check_branch
        %311 = sbr.rel (%p309) target = $region36
      $region35: #{residual_dense_block5.1} parent=11 // pred_region
        _
      $region36: #{residual_dense_block5.1} parent=11 // pred_fallthru
        _
      // Predicated region
      $region37: #{residual_dense_block5.1} parent=11 // pred_check
        %p312 = pneg %p190
      $region38: #{residual_dense_block5.1} parent=11 // pred_check_branch
        %314 = sbr.rel (%p312) target = $region40
      $region39: #{residual_dense_block5.1} parent=11 // pred_region
        _
      $region40: #{residual_dense_block5.1} parent=11 // pred_fallthru
        _
      // Predicated region
      $region41: #{residual_dense_block5.1} parent=11 // pred_check
        %p315 = pneg %p211
      $region42: #{residual_dense_block5.1} parent=11 // pred_check_branch
        %317 = sbr.rel (%p315) target = $region44
      $region43: #{residual_dense_block5.1} parent=11 // pred_region
        _
      $region44: #{residual_dense_block5.1} parent=11 // pred_fallthru
        _
      // Predicated region
      $region45: #{residual_dense_block5.1} parent=11 // pred_check
        %p318 = pneg %p232
      $region46: #{residual_dense_block5.1} parent=11 // pred_check_branch
        %320 = sbr.rel (%p318) target = $region48
      $region47: #{residual_dense_block5.1} parent=11 // pred_region
        _
      $region48: #{residual_dense_block5.1} parent=11 // pred_fallthru
        _
      // Predicated region
      $region49: #{residual_dense_block5.1} parent=11 // pred_check
        %p321 = pneg %p253
      $region50: #{residual_dense_block5.1} parent=11 // pred_check_branch
        %323 = sbr.rel (%p321) target = $region52
      $region51: #{residual_dense_block5.1} parent=11 // pred_region
        _
      $region52: #{residual_dense_block5.1} parent=11 // pred_fallthru
        _
    $region12: #{residual_dense_block5.1} parent=5 // pred_fallthru
      _
    %p324 = scmp.lt.s32.totalorder %s17, 2
    // Predicated region
    $region53: #{residual_dense_block5.1} parent=5 // pred_check
      %p325 = pneg %p324
    $region54: #{residual_dense_block5.1} parent=5 // pred_check_branch
      %327 = sbr.rel (%p325) target = $region56
    $region55: #{residual_dense_block5.1} parent=5 // pred_region
      // Predicated region
      $region57: #{residual_dense_block5.1} parent=55 // pred_check
        %p328 = pneg %p37
      $region58: #{residual_dense_block5.1} parent=55 // pred_check_branch
        %330 = sbr.rel (%p328) target = $region60
      $region59: #{residual_dense_block5.1} parent=55 // pred_region
        %p331 = scmp.lt.s32.totalorder %s17, 1
        %s332 = scalar_select %p331, %s17, 1
        %s333 = smul.addr %s332, 2
        %s334 = smul.addr %s333, 4
        %s335 = scalar_lea.vmem %s0, %s334
      $region60: #{residual_dense_block5.1} parent=55 // pred_fallthru
        _
    $region56: #{residual_dense_block5.1} parent=5 // pred_fallthru
      _
    %p336 = scmp.le.s32.totalorder 1, %s17
    %p337 = scmp.lt.s32.totalorder %s17, 3
    %p338 = pnand %p336, %p337
    %p339 = pneg %p338
    // Predicated region
    $region61: #{residual_dense_block5.1} parent=5 // pred_check
      _
    $region62: #{residual_dense_block5.1} parent=5 // pred_check_branch
      %341 = sbr.rel (%p338) target = $region64
    $region63: #{residual_dense_block5.1} parent=5 // pred_region
      %s342 = ssub.s32 %s17, 1
      %p343 = scmp.lt.s32.totalorder %s22, 1
      %s344 = scalar_select %p343, %s22, 1
      %s345 = smul.addr %s344, 2
      %s346 = smul.addr %s345, 4
      %s347 = scalar_lea.vmem %s0, %s346
      %p348 = pneg %p43
      %p349 = pneg %p40
      %p350 = pneg %p64
      %p351 = pneg %p61
      %p352 = pneg %p85
      %p353 = pneg %p82
      %p354 = pneg %p106
      %p355 = pneg %p103
      %p356 = pneg %p127
      %p357 = pneg %p124
      %p358 = pneg %p148
      %p359 = pneg %p145
      %p360 = pneg %p169
      %p361 = pneg %p166
      %p362 = pneg %p190
      %p363 = pneg %p187
      %p364 = pneg %p211
      %p365 = pneg %p208
      %p366 = pneg %p232
      %p367 = pneg %p229
      %p368 = pneg %p253
      %p369 = pneg %p250
      %p370 = pneg %p279
      %p371 = pneg %p276
      %p372 = scmp.lt.s32.totalorder %s22, 1
      %s373 = scalar_select %p372, %s22, 1
      %s374 = smul.addr %s373, 2
      %s375 = smul.addr %s374, 4
      %s376 = scalar_lea.vmem %s11, %s375
      %p377 = scmp.lt.s32.totalorder %s22, 1
      %s378 = scalar_select %p377, %s22, 1
      %s379 = smul.addr %s378, 2
      %s380 = smul.addr %s379, 4
      %s381 = scalar_lea.vmem %s0, %s380
      %p382 = scmp.lt.s32.totalorder %s22, 1
      %s383 = scalar_select %p382, %s22, 1
      %s384 = smul.addr %s383, 2
      %s385 = smul.addr %s384, 4
      %s386 = scalar_lea.vmem %s11, %s385
      %387 = vst [vmem:[#allocation2] sm:$0xff] 0.0
      %388 = vst [vmem:[#allocation2 + $0x8] sm:$0xff] 0.0
      %vm389 = vcmask 277504
      %390 = vst.msk [vmem:[#allocation2 + $0x10] sm:$0xff] %vm389, 0.0
      %391 = vst [vmem:[#allocation2 + $0x18] sm:$0xff] 0.0
      %392 = vst [vmem:[#allocation2 + $0x20] sm:$0xff] 0.0
      %393 = vst.msk [vmem:[#allocation2 + $0x28] sm:$0xff] %vm389, 0.0
      %394 = vst [vmem:[#allocation2 + $0x30] sm:$0xf] 0.0
      %395 = vst [vmem:[#allocation2 + $0x38] sm:$0xf] 0.0
      %vm396 = vcmask 273408
      %397 = vst.msk [vmem:[#allocation2 + $0x40] sm:$0xf] %vm396, 0.0
      %v398 = vld [vmem:[%s381] sm:$0xff]
      %v400 = vcombine.high %v398, %v398
      %401 = vrot.lane.b32.xlu0 %v398, 17
      %v402 = vpop.permute.xlu0 %401
      %403 = vrot.lane.b32.xlu0 %v400, 17
      %v404 = vpop.permute.xlu0 %403
      %vm405 = vcmask 138240
      %v406 = vsel %vm405, %v402, %v404
      %vm410 = vcmask 1043592
      %411 = vst.msk [vmem:[#allocation2] sm:$0xf] %vm410, %v402
      %412 = vst [vmem:[#allocation2 + $0x8] sm:$0xf] %v406
      %vm413 = vcmask 134144
      %414 = vst.msk [vmem:[#allocation2 + $0x10] sm:$0xf] %vm413, %v404
      %v415 = vlaneseq
      %v416 = vand.u32 %v415, 127
      %v417 = vadd.s32 %v416, 128
      %vm418 = vcmp.lt.s32.totalorder %v416, 0
      %v419 = vsub.s32 0, %v416
      %v420 = vsel %vm418, %v419, %v416
      %v421 = vshrl.u32 %v420, 4
      %v422 = vand.u32 %v420, 15
      %v423 = vsub.s32 0, %v422
      %v424 = vsel %vm418, %v423, %v422
      %vm425 = vcmp.lt.s32.totalorder %v417, 0
      %v426 = vsub.s32 0, %v417
      %v427 = vsel %vm425, %v426, %v417
      %v428 = vshrl.u32 %v427, 4
      %v429 = vand.u32 %v427, 15
      %v430 = vsub.s32 0, %v429
      %v431 = vsel %vm425, %v430, %v429
      %vm432 = vcmp.ne.s32.totalorder %v424, 0
      %vm433 = vcmp.ne.s32.totalorder %v431, 0
      %vm434 = vcmp.lt.s32.totalorder %v424, 0
      %vm435 = vcmp.lt.s32.totalorder %v431, 0
      %vm436 = vmand %vm434, %vm432
      %vm437 = vmand %vm435, %vm433
      %v438 = vadd.s32 %v424, 16
      %v439 = vadd.s32 %v431, 16
      %v440 = vsel %vm436, %v438, %v424
      %v441 = vsel %vm437, %v439, %v431
      %vm442 = vcmp.ne.s32.totalorder %v440, 0
      %vm443 = vcmp.ne.s32.totalorder %v441, 0
      %vm444 = vcmp.ne.s32.totalorder %v440, 15
      %vm445 = vcmp.ne.s32.totalorder %v441, 15
      %v446 = vld [vmem:[#allocation2] sm:$0xf]
      %v447 = vld [vmem:[#allocation2 + $0x8] sm:$0xf]
      %v448 = vld [vmem:[#allocation2 + $0x10] sm:$0xf]
      %v449 = vsel %vm442, 1, 0
      %v450 = vsel %vm443, 1, 0
      %vm451 = vcmp.eq.s32.totalorder %v449, 1
      %vm452 = vcmp.eq.s32.totalorder %v450, 1
      %v453 = vsel %vm451, %v446, 0.0
      %v454 = vsel %vm452, %v447, 0.0
      %v455 = vld [vmem:[%s1] sm:$0xf]
      %s456 = scalar_lea.vmem %s1, 4
      %v457 = vld [vmem:[%s456] sm:$0xf]
      %461 = vrot.lane.b32.xlu0 %v446, 127
      %v462 = vpop.permute.xlu0 %461
      %463 = vrot.lane.b32.xlu0 %v447, 127
      %v464 = vpop.permute.xlu0 %463
      %465 = vrot.lane.b32.xlu0 %v448, 127
      %v466 = vpop.permute.xlu0 %465
      %vm467 = vcmask 1039360
      %v468 = vsel %vm467, %v462, %v464
      %v469 = vsel %vm467, %v464, %v466
      %vm470 = vcmask 31744
      %v472 = vsel %vm470, %v457, 0
      %vm474 = vcmask 1043456
      %v475 = vsel %vm474, %v468, 0
      %v477 = vsel %vm474, %v469, 0
      %479 = vmatprep.subr.mxu0 %v477
      %480 = vmatpush1.msra.mxu0 %v475
      %481 = vmatprep.subr.mxu0 0.0
      %482 = vmatpush1.msra.mxu0 0.0
      %483 = vmatprep.subr.mxu0 0.0
      %484 = vmatpush1.msra.mxu0 0.0
      %485 = vmatprep.subr.mxu0 0.0
      %486 = vmatpush1.msra.mxu0 0.0
      %487 = vmatprep.subr.mxu0 0.0
      %488 = vmatpush1.msra.mxu0 0.0
      %489 = vmatprep.subr.mxu0 0.0
      %490 = vmatpush1.msra.mxu0 0.0
      %491 = vmatprep.subr.mxu0 0.0
      %492 = vmatpush1.msra.mxu0 0.0
      %493 = vmatprep.subr.mxu0 0.0
      %494 = vmatpush1.msra.mxu0 0.0
      %495 = vmatprep.subr.mxu0 0.0
      %496 = vmatpush1.msra.mxu0 0.0
      %497 = vmatprep.subr.mxu0 0.0
      %498 = vmatpush1.msra.mxu0 0.0
      %499 = vmatprep.subr.mxu0 0.0
      %500 = vmatpush1.msra.mxu0 0.0
      %501 = vmatprep.subr.mxu0 0.0
      %502 = vmatpush1.msra.mxu0 0.0
      %503 = vmatprep.subr.mxu0 0.0
      %504 = vmatpush1.msra.mxu0 0.0
      %505 = vmatprep.subr.mxu0 0.0
      %506 = vmatpush1.msra.mxu0 0.0
      %507 = vmatprep.subr.mxu0 0.0
      %508 = vmatpush1.msra.mxu0 0.0
      %509 = vmatprep.subr.mxu0 0.0
      %510 = vmatpush1.msra.mxu0 0.0
      %511 = vmatprep.subr.mxu0 0.0
      %512 = vmatpush1.msra.mxu0 0.0
      %513 = vmatprep.subr.mxu0 0.0
      %514 = vmatpush1.msra.mxu0 0.0
      %515 = vmatprep.subr.mxu0 0.0
      %516 = vmatpush1.msra.mxu0 0.0
      %517 = vmatprep.subr.mxu0 0.0
      %518 = vmatpush1.msra.mxu0 0.0
      %519 = vmatprep.subr.mxu0 0.0
      %520 = vmatpush1.msra.mxu0 0.0
      %521 = vmatprep.subr.mxu0 0.0
      %522 = vmatpush1.msra.mxu0 0.0
      %523 = vmatprep.subr.mxu0 0.0
      %524 = vmatpush1.msra.mxu0 0.0
      %525 = vmatprep.subr.mxu0 0.0
      %526 = vmatpush1.msra.mxu0 0.0
      %527 = vmatprep.subr.mxu0 0.0
      %528 = vmatpush1.msra.mxu0 0.0
      %529 = vmatprep.subr.mxu0 0.0
      %530 = vmatpush1.msra.mxu0 0.0
      %531 = vmatprep.subr.mxu0 0.0
      %532 = vmatpush1.msra.mxu0 0.0
      %533 = vmatprep.subr.mxu0 0.0
      %534 = vmatpush1.msra.mxu0 0.0
      %535 = vmatprep.subr.mxu0 0.0
      %536 = vmatpush1.msra.mxu0 0.0
      %537 = vmatprep.subr.mxu0 0.0
      %538 = vmatpush1.msra.mxu0 0.0
      %539 = vmatprep.subr.mxu0 0.0
      %540 = vmatpush1.msra.mxu0 0.0
      %541 = vmatprep.subr.mxu0 0.0
      %542 = vmatpush1.msra.mxu0 0.0
      %543 = vmatprep.mubr.f32.mxu0 0.0
      %544 = vmatmul.mubr.f32.gmra.mrb[0].mxu0 %v472
      %v545 = vpop.f32.mrb[0].mxu0
      %v546 = vadd.f32 0.0, %v545
      %v547 = vpop.f32.mrb[0].mxu0
      %v548 = vadd.f32 0.0, %v547
      %549 = vdwg.mxu0
      %v551 = vsel %vm470, %v455, 0
      %v554 = vsel %vm474, %v453, 0
      %v557 = vsel %vm474, %v454, 0
      %559 = vmatprep.subr.mxu0 %v557
      %560 = vmatpush1.msra.mxu0 %v554
      %561 = vmatprep.subr.mxu0 0.0
      %562 = vmatpush1.msra.mxu0 0.0
      %563 = vmatprep.subr.mxu0 0.0
      %564 = vmatpush1.msra.mxu0 0.0
      %565 = vmatprep.subr.mxu0 0.0
      %566 = vmatpush1.msra.mxu0 0.0
      %567 = vmatprep.subr.mxu0 0.0
      %568 = vmatpush1.msra.mxu0 0.0
      %569 = vmatprep.subr.mxu0 0.0
      %570 = vmatpush1.msra.mxu0 0.0
      %571 = vmatprep.subr.mxu0 0.0
      %572 = vmatpush1.msra.mxu0 0.0
      %573 = vmatprep.subr.mxu0 0.0
      %574 = vmatpush1.msra.mxu0 0.0
      %575 = vmatprep.subr.mxu0 0.0
      %576 = vmatpush1.msra.mxu0 0.0
      %577 = vmatprep.subr.mxu0 0.0
      %578 = vmatpush1.msra.mxu0 0.0
      %579 = vmatprep.subr.mxu0 0.0
      %580 = vmatpush1.msra.mxu0 0.0
      %581 = vmatprep.subr.mxu0 0.0
      %582 = vmatpush1.msra.mxu0 0.0
      %583 = vmatprep.subr.mxu0 0.0
      %584 = vmatpush1.msra.mxu0 0.0
      %585 = vmatprep.subr.mxu0 0.0
      %586 = vmatpush1.msra.mxu0 0.0
      %587 = vmatprep.subr.mxu0 0.0
      %588 = vmatpush1.msra.mxu0 0.0
      %589 = vmatprep.subr.mxu0 0.0
      %590 = vmatpush1.msra.mxu0 0.0
      %591 = vmatprep.subr.mxu0 0.0
      %592 = vmatpush1.msra.mxu0 0.0
      %593 = vmatprep.subr.mxu0 0.0
      %594 = vmatpush1.msra.mxu0 0.0
      %595 = vmatprep.subr.mxu0 0.0
      %596 = vmatpush1.msra.mxu0 0.0
      %597 = vmatprep.subr.mxu0 0.0
      %598 = vmatpush1.msra.mxu0 0.0
      %599 = vmatprep.subr.mxu0 0.0
      %600 = vmatpush1.msra.mxu0 0.0
      %601 = vmatprep.subr.mxu0 0.0
      %602 = vmatpush1.msra.mxu0 0.0
      %603 = vmatprep.subr.mxu0 0.0
      %604 = vmatpush1.msra.mxu0 0.0
      %605 = vmatprep.subr.mxu0 0.0
      %606 = vmatpush1.msra.mxu0 0.0
      %607 = vmatprep.subr.mxu0 0.0
      %608 = vmatpush1.msra.mxu0 0.0
      %609 = vmatprep.subr.mxu0 0.0
      %610 = vmatpush1.msra.mxu0 0.0
      %611 = vmatprep.subr.mxu0 0.0
      %612 = vmatpush1.msra.mxu0 0.0
      %613 = vmatprep.subr.mxu0 0.0
      %614 = vmatpush1.msra.mxu0 0.0
      %615 = vmatprep.subr.mxu0 0.0
      %616 = vmatpush1.msra.mxu0 0.0
      %617 = vmatprep.subr.mxu0 0.0
      %618 = vmatpush1.msra.mxu0 0.0
      %619 = vmatprep.subr.mxu0 0.0
      %620 = vmatpush1.msra.mxu0 0.0
      %621 = vmatprep.subr.mxu0 0.0
      %622 = vmatpush1.msra.mxu0 0.0
      %623 = vmatprep.mubr.f32.mxu0 0.0
      %624 = vmatmul.mubr.f32.gmra.mrb[0].mxu0 %v551
      %v625 = vpop.f32.mrb[0].mxu0
      %v626 = vadd.f32 %v546, %v625
      %v627 = vpop.f32.mrb[0].mxu0
      %v628 = vadd.f32 %v548, %v627
      %629 = vdwg.mxu0
      %v630 = vsel %vm444, 1, 0
      %v631 = vsel %vm445, 1, 0
      %vm632 = vcmp.eq.s32.totalorder %v630, 1
      %vm633 = vcmp.eq.s32.totalorder %v631, 1
      %634 = vrot.lane.b32.xlu0 %v446, 126
      %v635 = vpop.permute.xlu0 %634
      %636 = vrot.lane.b32.xlu0 %v447, 126
      %v637 = vpop.permute.xlu0 %636
      %638 = vrot.lane.b32.xlu0 %v448, 126
      %v639 = vpop.permute.xlu0 %638
      %vm640 = vcmask 1031168
      %v641 = vsel %vm640, %v635, %v637
      %v642 = vsel %vm640, %v637, %v639
      %v645 = vsel %vm632, %v641, 0.0
      %v646 = vsel %vm633, %v642, 0.0
      %s647 = scalar_lea.vmem %s1, 8
      %v648 = vld [vmem:[%s647] sm:$0xf]
      %v650 = vsel %vm470, %v648, 0
      %v653 = vsel %vm474, %v645, 0
      %v656 = vsel %vm474, %v646, 0
      %658 = vmatprep.subr.mxu0 %v656
      %659 = vmatpush1.msra.mxu0 %v653
      %660 = vmatprep.subr.mxu0 0.0
      %661 = vmatpush1.msra.mxu0 0.0
      %662 = vmatprep.subr.mxu0 0.0
      %663 = vmatpush1.msra.mxu0 0.0
      %664 = vmatprep.subr.mxu0 0.0
      %665 = vmatpush1.msra.mxu0 0.0
      %666 = vmatprep.subr.mxu0 0.0
      %667 = vmatpush1.msra.mxu0 0.0
      %668 = vmatprep.subr.mxu0 0.0
      %669 = vmatpush1.msra.mxu0 0.0
      %670 = vmatprep.subr.mxu0 0.0
      %671 = vmatpush1.msra.mxu0 0.0
      %672 = vmatprep.subr.mxu0 0.0
      %673 = vmatpush1.msra.mxu0 0.0
      %674 = vmatprep.subr.mxu0 0.0
      %675 = vmatpush1.msra.mxu0 0.0
      %676 = vmatprep.subr.mxu0 0.0
      %677 = vmatpush1.msra.mxu0 0.0
      %678 = vmatprep.subr.mxu0 0.0
      %679 = vmatpush1.msra.mxu0 0.0
      %680 = vmatprep.subr.mxu0 0.0
      %681 = vmatpush1.msra.mxu0 0.0
      %682 = vmatprep.subr.mxu0 0.0
      %683 = vmatpush1.msra.mxu0 0.0
      %684 = vmatprep.subr.mxu0 0.0
      %685 = vmatpush1.msra.mxu0 0.0
      %686 = vmatprep.subr.mxu0 0.0
      %687 = vmatpush1.msra.mxu0 0.0
      %688 = vmatprep.subr.mxu0 0.0
      %689 = vmatpush1.msra.mxu0 0.0
      %690 = vmatprep.subr.mxu0 0.0
      %691 = vmatpush1.msra.mxu0 0.0
      %692 = vmatprep.subr.mxu0 0.0
      %693 = vmatpush1.msra.mxu0 0.0
      %694 = vmatprep.subr.mxu0 0.0
      %695 = vmatpush1.msra.mxu0 0.0
      %696 = vmatprep.subr.mxu0 0.0
      %697 = vmatpush1.msra.mxu0 0.0
      %698 = vmatprep.subr.mxu0 0.0
      %699 = vmatpush1.msra.mxu0 0.0
      %700 = vmatprep.subr.mxu0 0.0
      %701 = vmatpush1.msra.mxu0 0.0
      %702 = vmatprep.subr.mxu0 0.0
      %703 = vmatpush1.msra.mxu0 0.0
      %704 = vmatprep.subr.mxu0 0.0
      %705 = vmatpush1.msra.mxu0 0.0
      %706 = vmatprep.subr.mxu0 0.0
      %707 = vmatpush1.msra.mxu0 0.0
      %708 = vmatprep.subr.mxu0 0.0
      %709 = vmatpush1.msra.mxu0 0.0
      %710 = vmatprep.subr.mxu0 0.0
      %711 = vmatpush1.msra.mxu0 0.0
      %712 = vmatprep.subr.mxu0 0.0
      %713 = vmatpush1.msra.mxu0 0.0
      %714 = vmatprep.subr.mxu0 0.0
      %715 = vmatpush1.msra.mxu0 0.0
      %716 = vmatprep.subr.mxu0 0.0
      %717 = vmatpush1.msra.mxu0 0.0
      %718 = vmatprep.subr.mxu0 0.0
      %719 = vmatpush1.msra.mxu0 0.0
      %720 = vmatprep.subr.mxu0 0.0
      %721 = vmatpush1.msra.mxu0 0.0
      %722 = vmatprep.mubr.f32.mxu0 0.0
      %723 = vmatmul.mubr.f32.gmra.mrb[0].mxu0 %v650
      %v724 = vpop.f32.mrb[0].mxu0
      %v725 = vadd.f32 0.0, %v724
      %v726 = vpop.f32.mrb[0].mxu0
      %v727 = vadd.f32 0.0, %v726
      %728 = vdwg.mxu0
      %v729 = vadd.f32 %v626, %v725
      %v730 = vadd.f32 %v628, %v727
      %731 = vrot.lane.b32.xlu0 %v446, 112
      %v732 = vpop.permute.xlu0 %731
      %733 = vrot.lane.b32.xlu0 %v447, 112
      %v734 = vpop.permute.xlu0 %733
      %735 = vrot.lane.b32.xlu0 %v448, 112
      %v736 = vpop.permute.xlu0 %735
      %vm737 = vcmask 916480
      %v738 = vsel %vm737, %v732, %v734
      %v739 = vsel %vm737, %v734, %v736
      %v742 = vsel %vm451, %v738, 0.0
      %v743 = vsel %vm452, %v739, 0.0
      %s744 = scalar_lea.vmem %s1, 12
      %v745 = vld [vmem:[%s744] sm:$0xf]
      %v747 = vsel %vm470, %v745, 0
      %v750 = vsel %vm474, %v742, 0
      %v753 = vsel %vm474, %v743, 0
      %755 = vmatprep.subr.mxu0 %v753
      %756 = vmatpush1.msra.mxu0 %v750
      %757 = vmatprep.subr.mxu0 0.0
      %758 = vmatpush1.msra.mxu0 0.0
      %759 = vmatprep.subr.mxu0 0.0
      %760 = vmatpush1.msra.mxu0 0.0
      %761 = vmatprep.subr.mxu0 0.0
      %762 = vmatpush1.msra.mxu0 0.0
      %763 = vmatprep.subr.mxu0 0.0
      %764 = vmatpush1.msra.mxu0 0.0
      %765 = vmatprep.subr.mxu0 0.0
      %766 = vmatpush1.msra.mxu0 0.0
      %767 = vmatprep.subr.mxu0 0.0
      %768 = vmatpush1.msra.mxu0 0.0
      %769 = vmatprep.subr.mxu0 0.0
      %770 = vmatpush1.msra.mxu0 0.0
      %771 = vmatprep.subr.mxu0 0.0
      %772 = vmatpush1.msra.mxu0 0.0
      %773 = vmatprep.subr.mxu0 0.0
      %774 = vmatpush1.msra.mxu0 0.0
      %775 = vmatprep.subr.mxu0 0.0
      %776 = vmatpush1.msra.mxu0 0.0
      %777 = vmatprep.subr.mxu0 0.0
      %778 = vmatpush1.msra.mxu0 0.0
      %779 = vmatprep.subr.mxu0 0.0
      %780 = vmatpush1.msra.mxu0 0.0
      %781 = vmatprep.subr.mxu0 0.0
      %782 = vmatpush1.msra.mxu0 0.0
      %783 = vmatprep.subr.mxu0 0.0
      %784 = vmatpush1.msra.mxu0 0.0
      %785 = vmatprep.subr.mxu0 0.0
      %786 = vmatpush1.msra.mxu0 0.0
      %787 = vmatprep.subr.mxu0 0.0
      %788 = vmatpush1.msra.mxu0 0.0
      %789 = vmatprep.subr.mxu0 0.0
      %790 = vmatpush1.msra.mxu0 0.0
      %791 = vmatprep.subr.mxu0 0.0
      %792 = vmatpush1.msra.mxu0 0.0
      %793 = vmatprep.subr.mxu0 0.0
      %794 = vmatpush1.msra.mxu0 0.0
      %795 = vmatprep.subr.mxu0 0.0
      %796 = vmatpush1.msra.mxu0 0.0
      %797 = vmatprep.subr.mxu0 0.0
      %798 = vmatpush1.msra.mxu0 0.0
      %799 = vmatprep.subr.mxu0 0.0
      %800 = vmatpush1.msra.mxu0 0.0
      %801 = vmatprep.subr.mxu0 0.0
      %802 = vmatpush1.msra.mxu0 0.0
      %803 = vmatprep.subr.mxu0 0.0
      %804 = vmatpush1.msra.mxu0 0.0
      %805 = vmatprep.subr.mxu0 0.0
      %806 = vmatpush1.msra.mxu0 0.0
      %807 = vmatprep.subr.mxu0 0.0
      %808 = vmatpush1.msra.mxu0 0.0
      %809 = vmatprep.subr.mxu0 0.0
      %810 = vmatpush1.msra.mxu0 0.0
      %811 = vmatprep.subr.mxu0 0.0
      %812 = vmatpush1.msra.mxu0 0.0
      %813 = vmatprep.subr.mxu0 0.0
      %814 = vmatpush1.msra.mxu0 0.0
      %815 = vmatprep.subr.mxu0 0.0
      %816 = vmatpush1.msra.mxu0 0.0
      %817 = vmatprep.subr.mxu0 0.0
      %818 = vmatpush1.msra.mxu0 0.0
      %819 = vmatprep.mubr.f32.mxu0 0.0
      %820 = vmatmul.mubr.f32.gmra.mrb[0].mxu0 %v747
      %v821 = vpop.f32.mrb[0].mxu0
      %v822 = vadd.f32 0.0, %v821
      %v823 = vpop.f32.mrb[0].mxu0
      %v824 = vadd.f32 0.0, %v823
      %825 = vdwg.mxu0
      %v826 = vadd.f32 %v729, %v822
      %v827 = vadd.f32 %v730, %v824
      %s828 = scalar_lea.vmem %s1, 16
      %v829 = vld [vmem:[%s828] sm:$0xf]
      %830 = vrot.lane.b32.xlu0 %v446, 111
      %v831 = vpop.permute.xlu0 %830
      %832 = vrot.lane.b32.xlu0 %v447, 111
      %v833 = vpop.permute.xlu0 %832
      %834 = vrot.lane.b32.xlu0 %v448, 111
      %v835 = vpop.permute.xlu0 %834
      %vm836 = vcmask 908288
      %v837 = vsel %vm836, %v831, %v833
      %v838 = vsel %vm836, %v833, %v835
      %v840 = vsel %vm470, %v829, 0
      %v842 = vsel %vm474, %v837, 0
      %v844 = vsel %vm474, %v838, 0
      %846 = vmatprep.subr.mxu0 %v844
      %847 = vmatpush1.msra.mxu0 %v842
      %848 = vmatprep.subr.mxu0 0.0
      %849 = vmatpush1.msra.mxu0 0.0
      %850 = vmatprep.subr.mxu0 0.0
      %851 = vmatpush1.msra.mxu0 0.0
      %852 = vmatprep.subr.mxu0 0.0
      %853 = vmatpush1.msra.mxu0 0.0
      %854 = vmatprep.subr.mxu0 0.0
      %855 = vmatpush1.msra.mxu0 0.0
      %856 = vmatprep.subr.mxu0 0.0
      %857 = vmatpush1.msra.mxu0 0.0
      %858 = vmatprep.subr.mxu0 0.0
      %859 = vmatpush1.msra.mxu0 0.0
      %860 = vmatprep.subr.mxu0 0.0
      %861 = vmatpush1.msra.mxu0 0.0
      %862 = vmatprep.subr.mxu0 0.0
      %863 = vmatpush1.msra.mxu0 0.0
      %864 = vmatprep.subr.mxu0 0.0
      %865 = vmatpush1.msra.mxu0 0.0
      %866 = vmatprep.subr.mxu0 0.0
      %867 = vmatpush1.msra.mxu0 0.0
      %868 = vmatprep.subr.mxu0 0.0
      %869 = vmatpush1.msra.mxu0 0.0
      %870 = vmatprep.subr.mxu0 0.0
      %871 = vmatpush1.msra.mxu0 0.0
      %872 = vmatprep.subr.mxu0 0.0
      %873 = vmatpush1.msra.mxu0 0.0
      %874 = vmatprep.subr.mxu0 0.0
      %875 = vmatpush1.msra.mxu0 0.0
      %876 = vmatprep.subr.mxu0 0.0
      %877 = vmatpush1.msra.mxu0 0.0
      %878 = vmatprep.subr.mxu0 0.0
      %879 = vmatpush1.msra.mxu0 0.0
      %880 = vmatprep.subr.mxu0 0.0
      %881 = vmatpush1.msra.mxu0 0.0
      %882 = vmatprep.subr.mxu0 0.0
      %883 = vmatpush1.msra.mxu0 0.0
      %884 = vmatprep.subr.mxu0 0.0
      %885 = vmatpush1.msra.mxu0 0.0
      %886 = vmatprep.subr.mxu0 0.0
      %887 = vmatpush1.msra.mxu0 0.0
      %888 = vmatprep.subr.mxu0 0.0
      %889 = vmatpush1.msra.mxu0 0.0
      %890 = vmatprep.subr.mxu0 0.0
      %891 = vmatpush1.msra.mxu0 0.0
      %892 = vmatprep.subr.mxu0 0.0
      %893 = vmatpush1.msra.mxu0 0.0
      %894 = vmatprep.subr.mxu0 0.0
      %895 = vmatpush1.msra.mxu0 0.0
      %896 = vmatprep.subr.mxu0 0.0
      %897 = vmatpush1.msra.mxu0 0.0
      %898 = vmatprep.subr.mxu0 0.0
      %899 = vmatpush1.msra.mxu0 0.0
      %900 = vmatprep.subr.mxu0 0.0
      %901 = vmatpush1.msra.mxu0 0.0
      %902 = vmatprep.subr.mxu0 0.0
      %903 = vmatpush1.msra.mxu0 0.0
      %904 = vmatprep.subr.mxu0 0.0
      %905 = vmatpush1.msra.mxu0 0.0
      %906 = vmatprep.subr.mxu0 0.0
      %907 = vmatpush1.msra.mxu0 0.0
      %908 = vmatprep.subr.mxu0 0.0
      %909 = vmatpush1.msra.mxu0 0.0
      %910 = vmatprep.mubr.f32.mxu0 0.0
      %911 = vmatmul.mubr.f32.gmra.mrb[0].mxu0 %v840
      %v912 = vpop.f32.mrb[0].mxu0
      %v913 = vadd.f32 0.0, %v912
      %v914 = vpop.f32.mrb[0].mxu0
      %v915 = vadd.f32 0.0, %v914
      %916 = vdwg.mxu0
      %v917 = vadd.f32 %v826, %v913
      %v918 = vadd.f32 %v827, %v915
      %919 = vrot.lane.b32.xlu0 %v446, 110
      %v920 = vpop.permute.xlu0 %919
      %921 = vrot.lane.b32.xlu0 %v447, 110
      %v922 = vpop.permute.xlu0 %921
      %923 = vrot.lane.b32.xlu0 %v448, 110
      %v924 = vpop.permute.xlu0 %923
      %vm925 = vcmask 900096
      %v926 = vsel %vm925, %v920, %v922
      %v927 = vsel %vm925, %v922, %v924
      %v930 = vsel %vm632, %v926, 0.0
      %v931 = vsel %vm633, %v927, 0.0
      %s932 = scalar_lea.vmem %s1, 20
      %v933 = vld [vmem:[%s932] sm:$0xf]
      %v935 = vsel %vm470, %v933, 0
      %v938 = vsel %vm474, %v930, 0
      %v941 = vsel %vm474, %v931, 0
      %943 = vmatprep.subr.mxu0 %v941
      %944 = vmatpush1.msra.mxu0 %v938
      %945 = vmatprep.subr.mxu0 0.0
      %946 = vmatpush1.msra.mxu0 0.0
      %947 = vmatprep.subr.mxu0 0.0
      %948 = vmatpush1.msra.mxu0 0.0
      %949 = vmatprep.subr.mxu0 0.0
      %950 = vmatpush1.msra.mxu0 0.0
      %951 = vmatprep.subr.mxu0 0.0
      %952 = vmatpush1.msra.mxu0 0.0
      %953 = vmatprep.subr.mxu0 0.0
      %954 = vmatpush1.msra.mxu0 0.0
      %955 = vmatprep.subr.mxu0 0.0
      %956 = vmatpush1.msra.mxu0 0.0
      %957 = vmatprep.subr.mxu0 0.0
      %958 = vmatpush1.msra.mxu0 0.0
      %959 = vmatprep.subr.mxu0 0.0
      %960 = vmatpush1.msra.mxu0 0.0
      %961 = vmatprep.subr.mxu0 0.0
      %962 = vmatpush1.msra.mxu0 0.0
      %963 = vmatprep.subr.mxu0 0.0
      %964 = vmatpush1.msra.mxu0 0.0
      %965 = vmatprep.subr.mxu0 0.0
      %966 = vmatpush1.msra.mxu0 0.0
      %967 = vmatprep.subr.mxu0 0.0
      %968 = vmatpush1.msra.mxu0 0.0
      %969 = vmatprep.subr.mxu0 0.0
      %970 = vmatpush1.msra.mxu0 0.0
      %971 = vmatprep.subr.mxu0 0.0
      %972 = vmatpush1.msra.mxu0 0.0
      %973 = vmatprep.subr.mxu0 0.0
      %974 = vmatpush1.msra.mxu0 0.0
      %975 = vmatprep.subr.mxu0 0.0
      %976 = vmatpush1.msra.mxu0 0.0
      %977 = vmatprep.subr.mxu0 0.0
      %978 = vmatpush1.msra.mxu0 0.0
      %979 = vmatprep.subr.mxu0 0.0
      %980 = vmatpush1.msra.mxu0 0.0
      %981 = vmatprep.subr.mxu0 0.0
      %982 = vmatpush1.msra.mxu0 0.0
      %983 = vmatprep.subr.mxu0 0.0
      %984 = vmatpush1.msra.mxu0 0.0
      %985 = vmatprep.subr.mxu0 0.0
      %986 = vmatpush1.msra.mxu0 0.0
      %987 = vmatprep.subr.mxu0 0.0
      %988 = vmatpush1.msra.mxu0 0.0
      %989 = vmatprep.subr.mxu0 0.0
      %990 = vmatpush1.msra.mxu0 0.0
      %991 = vmatprep.subr.mxu0 0.0
      %992 = vmatpush1.msra.mxu0 0.0
      %993 = vmatprep.subr.mxu0 0.0
      %994 = vmatpush1.msra.mxu0 0.0
      %995 = vmatprep.subr.mxu0 0.0
      %996 = vmatpush1.msra.mxu0 0.0
      %997 = vmatprep.subr.mxu0 0.0
      %998 = vmatpush1.msra.mxu0 0.0
      %999 = vmatprep.subr.mxu0 0.0
      %1000 = vmatpush1.msra.mxu0 0.0
      %1001 = vmatprep.subr.mxu0 0.0
      %1002 = vmatpush1.msra.mxu0 0.0
      %1003 = vmatprep.subr.mxu0 0.0
      %1004 = vmatpush1.msra.mxu0 0.0
      %1005 = vmatprep.subr.mxu0 0.0
      %1006 = vmatpush1.msra.mxu0 0.0
      %1007 = vmatprep.mubr.f32.mxu0 0.0
      %1008 = vmatmul.mubr.f32.gmra.mrb[0].mxu0 %v935
      %v1009 = vpop.f32.mrb[0].mxu0
      %v1010 = vadd.f32 0.0, %v1009
      %v1011 = vpop.f32.mrb[0].mxu0
      %v1012 = vadd.f32 0.0, %v1011
      %1013 = vdwg.mxu0
      %v1014 = vadd.f32 %v917, %v1010
      %v1015 = vadd.f32 %v918, %v1012
      %1016 = vrot.lane.b32.xlu0 %v446, 96
      %v1017 = vpop.permute.xlu0 %1016
      %1018 = vrot.lane.b32.xlu0 %v447, 96
      %v1019 = vpop.permute.xlu0 %1018
      %1020 = vrot.lane.b32.xlu0 %v448, 96
      %v1021 = vpop.permute.xlu0 %1020
      %vm1022 = vcmask 785408
      %v1023 = vsel %vm1022, %v1017, %v1019
      %v1024 = vsel %vm1022, %v1019, %v1021
      %v1027 = vsel %vm451, %v1023, 0.0
      %v1028 = vsel %vm452, %v1024, 0.0
      %s1029 = scalar_lea.vmem %s1, 24
      %v1030 = vld [vmem:[%s1029] sm:$0xf]
      %v1032 = vsel %vm470, %v1030, 0
      %v1035 = vsel %vm474, %v1027, 0
      %v1038 = vsel %vm474, %v1028, 0
      %1040 = vmatprep.subr.mxu0 %v1038
      %1041 = vmatpush1.msra.mxu0 %v1035
      %1042 = vmatprep.subr.mxu0 0.0
      %1043 = vmatpush1.msra.mxu0 0.0
      %1044 = vmatprep.subr.mxu0 0.0
      %1045 = vmatpush1.msra.mxu0 0.0
      %1046 = vmatprep.subr.mxu0 0.0
      %1047 = vmatpush1.msra.mxu0 0.0
      %1048 = vmatprep.subr.mxu0 0.0
      %1049 = vmatpush1.msra.mxu0 0.0
      %1050 = vmatprep.subr.mxu0 0.0
      %1051 = vmatpush1.msra.mxu0 0.0
      %1052 = vmatprep.subr.mxu0 0.0
      %1053 = vmatpush1.msra.mxu0 0.0
      %1054 = vmatprep.subr.mxu0 0.0
      %1055 = vmatpush1.msra.mxu0 0.0
      %1056 = vmatprep.subr.mxu0 0.0
      %1057 = vmatpush1.msra.mxu0 0.0
      %1058 = vmatprep.subr.mxu0 0.0
      %1059 = vmatpush1.msra.mxu0 0.0
      %1060 = vmatprep.subr.mxu0 0.0
      %1061 = vmatpush1.msra.mxu0 0.0
      %1062 = vmatprep.subr.mxu0 0.0
      %1063 = vmatpush1.msra.mxu0 0.0
      %1064 = vmatprep.subr.mxu0 0.0
      %1065 = vmatpush1.msra.mxu0 0.0
      %1066 = vmatprep.subr.mxu0 0.0
      %1067 = vmatpush1.msra.mxu0 0.0
      %1068 = vmatprep.subr.mxu0 0.0
      %1069 = vmatpush1.msra.mxu0 0.0
      %1070 = vmatprep.subr.mxu0 0.0
      %1071 = vmatpush1.msra.mxu0 0.0
      %1072 = vmatprep.subr.mxu0 0.0
      %1073 = vmatpush1.msra.mxu0 0.0
      %1074 = vmatprep.subr.mxu0 0.0
      %1075 = vmatpush1.msra.mxu0 0.0
      %1076 = vmatprep.subr.mxu0 0.0
      %1077 = vmatpush1.msra.mxu0 0.0
      %1078 = vmatprep.subr.mxu0 0.0
      %1079 = vmatpush1.msra.mxu0 0.0
      %1080 = vmatprep.subr.mxu0 0.0
      %1081 = vmatpush1.msra.mxu0 0.0
      %1082 = vmatprep.subr.mxu0 0.0
      %1083 = vmatpush1.msra.mxu0 0.0
      %1084 = vmatprep.subr.mxu0 0.0
      %1085 = vmatpush1.msra.mxu0 0.0
      %1086 = vmatprep.subr.mxu0 0.0
      %1087 = vmatpush1.msra.mxu0 0.0
      %1088 = vmatprep.subr.mxu0 0.0
      %1089 = vmatpush1.msra.mxu0 0.0
      %1090 = vmatprep.subr.mxu0 0.0
      %1091 = vmatpush1.msra.mxu0 0.0
      %1092 = vmatprep.subr.mxu0 0.0
      %1093 = vmatpush1.msra.mxu0 0.0
      %1094 = vmatprep.subr.mxu0 0.0
      %1095 = vmatpush1.msra.mxu0 0.0
      %1096 = vmatprep.subr.mxu0 0.0
      %1097 = vmatpush1.msra.mxu0 0.0
      %1098 = vmatprep.subr.mxu0 0.0
      %1099 = vmatpush1.msra.mxu0 0.0
      %1100 = vmatprep.subr.mxu0 0.0
      %1101 = vmatpush1.msra.mxu0 0.0
      %1102 = vmatprep.subr.mxu0 0.0
      %1103 = vmatpush1.msra.mxu0 0.0
      %1104 = vmatprep.mubr.f32.mxu0 0.0
      %1105 = vmatmul.mubr.f32.gmra.mrb[0].mxu0 %v1032
      %v1106 = vpop.f32.mrb[0].mxu0
      %v1107 = vadd.f32 0.0, %v1106
      %v1108 = vpop.f32.mrb[0].mxu0
      %v1109 = vadd.f32 0.0, %v1108
      %1110 = vdwg.mxu0
      %v1111 = vadd.f32 %v1014, %v1107
      %v1112 = vadd.f32 %v1015, %v1109
      %s1113 = scalar_lea.vmem %s1, 28
      %v1114 = vld [vmem:[%s1113] sm:$0xf]
      %1115 = vrot.lane.b32.xlu0 %v446, 95
      %v1116 = vpop.permute.xlu0 %1115
      %1117 = vrot.lane.b32.xlu0 %v447, 95
      %v1118 = vpop.permute.xlu0 %1117
      %1119 = vrot.lane.b32.xlu0 %v448, 95
      %v1120 = vpop.permute.xlu0 %1119
      %vm1121 = vcmask 777216
      %v1122 = vsel %vm1121, %v1116, %v1118
      %v1123 = vsel %vm1121, %v1118, %v1120
      %v1125 = vsel %vm470, %v1114, 0
      %v1127 = vsel %vm474, %v1122, 0
      %v1129 = vsel %vm474, %v1123, 0
      %1131 = vmatprep.subr.mxu0 %v1129
      %1132 = vmatpush1.msra.mxu0 %v1127
      %1133 = vmatprep.subr.mxu0 0.0
      %1134 = vmatpush1.msra.mxu0 0.0
      %1135 = vmatprep.subr.mxu0 0.0
      %1136 = vmatpush1.msra.mxu0 0.0
      %1137 = vmatprep.subr.mxu0 0.0
      %1138 = vmatpush1.msra.mxu0 0.0
      %1139 = vmatprep.subr.mxu0 0.0
      %1140 = vmatpush1.msra.mxu0 0.0
      %1141 = vmatprep.subr.mxu0 0.0
      %1142 = vmatpush1.msra.mxu0 0.0
      %1143 = vmatprep.subr.mxu0 0.0
      %1144 = vmatpush1.msra.mxu0 0.0
      %1145 = vmatprep.subr.mxu0 0.0
      %1146 = vmatpush1.msra.mxu0 0.0
      %1147 = vmatprep.subr.mxu0 0.0
      %1148 = vmatpush1.msra.mxu0 0.0
      %1149 = vmatprep.subr.mxu0 0.0
      %1150 = vmatpush1.msra.mxu0 0.0
      %1151 = vmatprep.subr.mxu0 0.0
      %1152 = vmatpush1.msra.mxu0 0.0
      %1153 = vmatprep.subr.mxu0 0.0
      %1154 = vmatpush1.msra.mxu0 0.0
      %1155 = vmatprep.subr.mxu0 0.0
      %1156 = vmatpush1.msra.mxu0 0.0
      %1157 = vmatprep.subr.mxu0 0.0
      %1158 = vmatpush1.msra.mxu0 0.0
      %1159 = vmatprep.subr.mxu0 0.0
      %1160 = vmatpush1.msra.mxu0 0.0
      %1161 = vmatprep.subr.mxu0 0.0
      %1162 = vmatpush1.msra.mxu0 0.0
      %1163 = vmatprep.subr.mxu0 0.0
      %1164 = vmatpush1.msra.mxu0 0.0
      %1165 = vmatprep.subr.mxu0 0.0
      %1166 = vmatpush1.msra.mxu0 0.0
      %1167 = vmatprep.subr.mxu0 0.0
      %1168 = vmatpush1.msra.mxu0 0.0
      %1169 = vmatprep.subr.mxu0 0.0
      %1170 = vmatpush1.msra.mxu0 0.0
      %1171 = vmatprep.subr.mxu0 0.0
      %1172 = vmatpush1.msra.mxu0 0.0
      %1173 = vmatprep.subr.mxu0 0.0
      %1174 = vmatpush1.msra.mxu0 0.0
      %1175 = vmatprep.subr.mxu0 0.0
      %1176 = vmatpush1.msra.mxu0 0.0
      %1177 = vmatprep.subr.mxu0 0.0
      %1178 = vmatpush1.msra.mxu0 0.0
      %1179 = vmatprep.subr.mxu0 0.0
      %1180 = vmatpush1.msra.mxu0 0.0
      %1181 = vmatprep.subr.mxu0 0.0
      %1182 = vmatpush1.msra.mxu0 0.0
      %1183 = vmatprep.subr.mxu0 0.0
      %1184 = vmatpush1.msra.mxu0 0.0
      %1185 = vmatprep.subr.mxu0 0.0
      %1186 = vmatpush1.msra.mxu0 0.0
      %1187 = vmatprep.subr.mxu0 0.0
      %1188 = vmatpush1.msra.mxu0 0.0
      %1189 = vmatprep.subr.mxu0 0.0
      %1190 = vmatpush1.msra.mxu0 0.0
      %1191 = vmatprep.subr.mxu0 0.0
      %1192 = vmatpush1.msra.mxu0 0.0
      %1193 = vmatprep.subr.mxu0 0.0
      %1194 = vmatpush1.msra.mxu0 0.0
      %1195 = vmatprep.mubr.f32.mxu0 0.0
      %1196 = vmatmul.mubr.f32.gmra.mrb[0].mxu0 %v1125
      %v1197 = vpop.f32.mrb[0].mxu0
      %v1198 = vadd.f32 0.0, %v1197
      %v1199 = vpop.f32.mrb[0].mxu0
      %v1200 = vadd.f32 0.0, %v1199
      %1201 = vdwg.mxu0
      %v1202 = vadd.f32 %v1111, %v1198
      %v1203 = vadd.f32 %v1112, %v1200
      %1204 = vrot.lane.b32.xlu0 %v446, 94
      %v1205 = vpop.permute.xlu0 %1204
      %1206 = vrot.lane.b32.xlu0 %v447, 94
      %v1207 = vpop.permute.xlu0 %1206
      %1208 = vrot.lane.b32.xlu0 %v448, 94
      %v1209 = vpop.permute.xlu0 %1208
      %vm1210 = vcmask 769024
      %v1211 = vsel %vm1210, %v1205, %v1207
      %v1212 = vsel %vm1210, %v1207, %v1209
      %v1215 = vsel %vm632, %v1211, 0.0
      %v1216 = vsel %vm633, %v1212, 0.0
      %s1217 = scalar_lea.vmem %s1, 32
      %v1218 = vld [vmem:[%s1217] sm:$0xf]
      %v1220 = vsel %vm470, %v1218, 0
      %v1223 = vsel %vm474, %v1215, 0
      %v1226 = vsel %vm474, %v1216, 0
      %1228 = vmatprep.subr.mxu0 %v1226
      %1229 = vmatpush1.msra.mxu0 %v1223
      %1230 = vmatprep.subr.mxu0 0.0
      %1231 = vmatpush1.msra.mxu0 0.0
      %1232 = vmatprep.subr.mxu0 0.0
      %1233 = vmatpush1.msra.mxu0 0.0
      %1234 = vmatprep.subr.mxu0 0.0
      %1235 = vmatpush1.msra.mxu0 0.0
      %1236 = vmatprep.subr.mxu0 0.0
      %1237 = vmatpush1.msra.mxu0 0.0
      %1238 = vmatprep.subr.mxu0 0.0
      %1239 = vmatpush1.msra.mxu0 0.0
      %1240 = vmatprep.subr.mxu0 0.0
      %1241 = vmatpush1.msra.mxu0 0.0
      %1242 = vmatprep.subr.mxu0 0.0
      %1243 = vmatpush1.msra.mxu0 0.0
      %1244 = vmatprep.subr.mxu0 0.0
      %1245 = vmatpush1.msra.mxu0 0.0
      %1246 = vmatprep.subr.mxu0 0.0
      %1247 = vmatpush1.msra.mxu0 0.0
      %1248 = vmatprep.subr.mxu0 0.0
      %1249 = vmatpush1.msra.mxu0 0.0
      %1250 = vmatprep.subr.mxu0 0.0
      %1251 = vmatpush1.msra.mxu0 0.0
      %1252 = vmatprep.subr.mxu0 0.0
      %1253 = vmatpush1.msra.mxu0 0.0
      %1254 = vmatprep.subr.mxu0 0.0
      %1255 = vmatpush1.msra.mxu0 0.0
      %1256 = vmatprep.subr.mxu0 0.0
      %1257 = vmatpush1.msra.mxu0 0.0
      %1258 = vmatprep.subr.mxu0 0.0
      %1259 = vmatpush1.msra.mxu0 0.0
      %1260 = vmatprep.subr.mxu0 0.0
      %1261 = vmatpush1.msra.mxu0 0.0
      %1262 = vmatprep.subr.mxu0 0.0
      %1263 = vmatpush1.msra.mxu0 0.0
      %1264 = vmatprep.subr.mxu0 0.0
      %1265 = vmatpush1.msra.mxu0 0.0
      %1266 = vmatprep.subr.mxu0 0.0
      %1267 = vmatpush1.msra.mxu0 0.0
      %1268 = vmatprep.subr.mxu0 0.0
      %1269 = vmatpush1.msra.mxu0 0.0
      %1270 = vmatprep.subr.mxu0 0.0
      %1271 = vmatpush1.msra.mxu0 0.0
      %1272 = vmatprep.subr.mxu0 0.0
      %1273 = vmatpush1.msra.mxu0 0.0
      %1274 = vmatprep.subr.mxu0 0.0
      %1275 = vmatpush1.msra.mxu0 0.0
      %1276 = vmatprep.subr.mxu0 0.0
      %1277 = vmatpush1.msra.mxu0 0.0
      %1278 = vmatprep.subr.mxu0 0.0
      %1279 = vmatpush1.msra.mxu0 0.0
      %1280 = vmatprep.subr.mxu0 0.0
      %1281 = vmatpush1.msra.mxu0 0.0
      %1282 = vmatprep.subr.mxu0 0.0
      %1283 = vmatpush1.msra.mxu0 0.0
      %1284 = vmatprep.subr.mxu0 0.0
      %1285 = vmatpush1.msra.mxu0 0.0
      %1286 = vmatprep.subr.mxu0 0.0
      %1287 = vmatpush1.msra.mxu0 0.0
      %1288 = vmatprep.subr.mxu0 0.0
      %1289 = vmatpush1.msra.mxu0 0.0
      %1290 = vmatprep.subr.mxu0 0.0
      %1291 = vmatpush1.msra.mxu0 0.0
      %1292 = vmatprep.mubr.f32.mxu0 0.0
      %1293 = vmatmul.mubr.f32.gmra.mrb[0].mxu0 %v1220
      %v1294 = vpop.f32.mrb[0].mxu0
      %v1295 = vadd.f32 0.0, %v1294
      %v1296 = vpop.f32.mrb[0].mxu0
      %v1297 = vadd.f32 0.0, %v1296
      %1298 = vdwg.mxu0
      %v1299 = vadd.f32 %v1202, %v1295
      %v1300 = vadd.f32 %v1203, %v1297
      %v1301 = vld [vmem:[%s6] sm:$0xf]
      %1303 = vset.pattern.permute.xlu0 0
      %1304 = vperm.xlu0 %1303, %v1301
      %v1305 = vpop.permute.xlu0 %1304
      %v1307 = vadd.f32 %v1299, %v1305
      %v1308 = vadd.f32 %v1300, %v1305
      %vm1309 = vcmp.ge.f32.partialorder %v1307, 0.0
      %vm1310 = vcmp.ge.f32.partialorder %v1308, 0.0
      %v1311 = vmul.f32 %v1307, 0.2
      %v1312 = vmul.f32 %v1308, 0.2
      %v1313 = vsel %vm1309, %v1307, %v1311
      %v1314 = vsel %vm1310, %v1308, %v1312
      %v1317 = vrot.slane %v1313, 4
      %v1318 = vrot.slane %v1314, 4
      %1319 = vrot.lane.b32.xlu0 %v1317, 17
      %v1320 = vpop.permute.xlu0 %1319
      %1321 = vrot.lane.b32.xlu0 %v1318, 17
      %v1322 = vpop.permute.xlu0 %1321
      %v1323 = vsel %vm405, %v1320, %v1322
      %vm1327 = vcmask 1047692
      %1328 = vst.msk [vmem:[#allocation2] sm:$0xf0] %vm1327, %v1320
      %1329 = vst [vmem:[#allocation2 + $0x8] sm:$0xf0] %v1323
      %vm1330 = vcmask 138244
      %1331 = vst.msk [vmem:[#allocation2 + $0x10] sm:$0xf0] %vm1330, %v1322
      %v1332 = vld [vmem:[#allocation2] sm:$0xff]
      %v1333 = vld [vmem:[#allocation2 + $0x8] sm:$0xff]
      %v1334 = vld [vmem:[#allocation2 + $0x10] sm:$0xff]
      %v1335 = vsel %vm451, %v1332, 0.0
      %v1336 = vsel %vm452, %v1333, 0.0
      %v1337 = vld [vmem:[%s2] sm:$0xf]
      %s1338 = scalar_lea.vmem %s2, 4
      %v1339 = vld [vmem:[%s1338] sm:$0xf]
      %1343 = vrot.lane.b32.xlu0 %v1332, 127
      %v1344 = vpop.permute.xlu0 %1343
      %1345 = vrot.lane.b32.xlu0 %v1333, 127
      %v1346 = vpop.permute.xlu0 %1345
      %1347 = vrot.lane.b32.xlu0 %v1334, 127
      %v1348 = vpop.permute.xlu0 %1347
      %v1349 = vsel %vm467, %v1344, %v1346
      %v1350 = vsel %vm467, %v1346, %v1348
      %vm1353 = vcmask 64512
      %v1355 = vsel %vm1353, %v1339, 0
      %1357 = vmatprep.subr.mxu0 %v1350
      %1358 = vmatpush1.msra.mxu0 %v1349
      %1359 = vmatprep.subr.mxu0 0.0
      %1360 = vmatpush1.msra.mxu0 0.0
      %1361 = vmatprep.subr.mxu0 0.0
      %1362 = vmatpush1.msra.mxu0 0.0
      %1363 = vmatprep.subr.mxu0 0.0
      %1364 = vmatpush1.msra.mxu0 0.0
      %1365 = vmatprep.subr.mxu0 0.0
      %1366 = vmatpush1.msra.mxu0 0.0
      %1367 = vmatprep.subr.mxu0 0.0
      %1368 = vmatpush1.msra.mxu0 0.0
      %1369 = vmatprep.subr.mxu0 0.0
      %1370 = vmatpush1.msra.mxu0 0.0
      %1371 = vmatprep.subr.mxu0 0.0
      %1372 = vmatpush1.msra.mxu0 0.0
      %1373 = vmatprep.subr.mxu0 0.0
      %1374 = vmatpush1.msra.mxu0 0.0
      %1375 = vmatprep.subr.mxu0 0.0
      %1376 = vmatpush1.msra.mxu0 0.0
      %1377 = vmatprep.subr.mxu0 0.0
      %1378 = vmatpush1.msra.mxu0 0.0
      %1379 = vmatprep.subr.mxu0 0.0
      %1380 = vmatpush1.msra.mxu0 0.0
      %1381 = vmatprep.subr.mxu0 0.0
      %1382 = vmatpush1.msra.mxu0 0.0
      %1383 = vmatprep.subr.mxu0 0.0
      %1384 = vmatpush1.msra.mxu0 0.0
      %1385 = vmatprep.subr.mxu0 0.0
      %1386 = vmatpush1.msra.mxu0 0.0
      %1387 = vmatprep.subr.mxu0 0.0
      %1388 = vmatpush1.msra.mxu0 0.0
      %1389 = vmatprep.subr.mxu0 0.0
      %1390 = vmatpush1.msra.mxu0 0.0
      %1391 = vmatprep.subr.mxu0 0.0
      %1392 = vmatpush1.msra.mxu0 0.0
      %1393 = vmatprep.subr.mxu0 0.0
      %1394 = vmatpush1.msra.mxu0 0.0
      %1395 = vmatprep.subr.mxu0 0.0
      %1396 = vmatpush1.msra.mxu0 0.0
      %1397 = vmatprep.subr.mxu0 0.0
      %1398 = vmatpush1.msra.mxu0 0.0
      %1399 = vmatprep.subr.mxu0 0.0
      %1400 = vmatpush1.msra.mxu0 0.0
      %1401 = vmatprep.subr.mxu0 0.0
      %1402 = vmatpush1.msra.mxu0 0.0
      %1403 = vmatprep.subr.mxu0 0.0
      %1404 = vmatpush1.msra.mxu0 0.0
      %1405 = vmatprep.subr.mxu0 0.0
      %1406 = vmatpush1.msra.mxu0 0.0
      %1407 = vmatprep.subr.mxu0 0.0
      %1408 = vmatpush1.msra.mxu0 0.0
      %1409 = vmatprep.subr.mxu0 0.0
      %1410 = vmatpush1.msra.mxu0 0.0
      %1411 = vmatprep.subr.mxu0 0.0
      %1412 = vmatpush1.msra.mxu0 0.0
      %1413 = vmatprep.subr.mxu0 0.0
      %1414 = vmatpush1.msra.mxu0 0.0
      %1415 = vmatprep.subr.mxu0 0.0
      %1416 = vmatpush1.msra.mxu0 0.0
      %1417 = vmatprep.subr.mxu0 0.0
      %1418 = vmatpush1.msra.mxu0 0.0
      %1419 = vmatprep.subr.mxu0 0.0
      %1420 = vmatpush1.msra.mxu0 0.0
      %1421 = vmatprep.mubr.f32.mxu0 0.0
      %1422 = vmatmul.mubr.f32.gmra.mrb[0].mxu0 %v1355
      %v1423 = vpop.f32.mrb[0].mxu0
      %v1424 = vadd.f32 0.0, %v1423
      %v1425 = vpop.f32.mrb[0].mxu0
      %v1426 = vadd.f32 0.0, %v1425
      %1427 = vdwg.mxu0
      %v1429 = vsel %vm1353, %v1337, 0
      %1431 = vmatprep.subr.mxu0 %v1336
      %1432 = vmatpush1.msra.mxu0 %v1335
      %1433 = vmatprep.subr.mxu0 0.0
      %1434 = vmatpush1.msra.mxu0 0.0
      %1435 = vmatprep.subr.mxu0 0.0
      %1436 = vmatpush1.msra.mxu0 0.0
      %1437 = vmatprep.subr.mxu0 0.0
      %1438 = vmatpush1.msra.mxu0 0.0
      %1439 = vmatprep.subr.mxu0 0.0
      %1440 = vmatpush1.msra.mxu0 0.0
      %1441 = vmatprep.subr.mxu0 0.0
      %1442 = vmatpush1.msra.mxu0 0.0
      %1443 = vmatprep.subr.mxu0 0.0
      %1444 = vmatpush1.msra.mxu0 0.0
      %1445 = vmatprep.subr.mxu0 0.0
      %1446 = vmatpush1.msra.mxu0 0.0
      %1447 = vmatprep.subr.mxu0 0.0
      %1448 = vmatpush1.msra.mxu0 0.0
      %1449 = vmatprep.subr.mxu0 0.0
      %1450 = vmatpush1.msra.mxu0 0.0
      %1451 = vmatprep.subr.mxu0 0.0
      %1452 = vmatpush1.msra.mxu0 0.0
      %1453 = vmatprep.subr.mxu0 0.0
      %1454 = vmatpush1.msra.mxu0 0.0
      %1455 = vmatprep.subr.mxu0 0.0
      %1456 = vmatpush1.msra.mxu0 0.0
      %1457 = vmatprep.subr.mxu0 0.0
      %1458 = vmatpush1.msra.mxu0 0.0
      %1459 = vmatprep.subr.mxu0 0.0
      %1460 = vmatpush1.msra.mxu0 0.0
      %1461 = vmatprep.subr.mxu0 0.0
      %1462 = vmatpush1.msra.mxu0 0.0
      %1463 = vmatprep.subr.mxu0 0.0
      %1464 = vmatpush1.msra.mxu0 0.0
      %1465 = vmatprep.subr.mxu0 0.0
      %1466 = vmatpush1.msra.mxu0 0.0
      %1467 = vmatprep.subr.mxu0 0.0
      %1468 = vmatpush1.msra.mxu0 0.0
      %1469 = vmatprep.subr.mxu0 0.0
      %1470 = vmatpush1.msra.mxu0 0.0
      %1471 = vmatprep.subr.mxu0 0.0
      %1472 = vmatpush1.msra.mxu0 0.0
      %1473 = vmatprep.subr.mxu0 0.0
      %1474 = vmatpush1.msra.mxu0 0.0
      %1475 = vmatprep.subr.mxu0 0.0
      %1476 = vmatpush1.msra.mxu0 0.0
      %1477 = vmatprep.subr.mxu0 0.0
      %1478 = vmatpush1.msra.mxu0 0.0
      %1479 = vmatprep.subr.mxu0 0.0
      %1480 = vmatpush1.msra.mxu0 0.0
      %1481 = vmatprep.subr.mxu0 0.0
      %1482 = vmatpush1.msra.mxu0 0.0
      %1483 = vmatprep.subr.mxu0 0.0
      %1484 = vmatpush1.msra.mxu0 0.0
      %1485 = vmatprep.subr.mxu0 0.0
      %1486 = vmatpush1.msra.mxu0 0.0
      %1487 = vmatprep.subr.mxu0 0.0
      %1488 = vmatpush1.msra.mxu0 0.0
      %1489 = vmatprep.subr.mxu0 0.0
      %1490 = vmatpush1.msra.mxu0 0.0
      %1491 = vmatprep.subr.mxu0 0.0
      %1492 = vmatpush1.msra.mxu0 0.0
      %1493 = vmatprep.subr.mxu0 0.0
      %1494 = vmatpush1.msra.mxu0 0.0
      %1495 = vmatprep.mubr.f32.mxu0 0.0
      %1496 = vmatmul.mubr.f32.gmra.mrb[0].mxu0 %v1429
      %v1497 = vpop.f32.mrb[0].mxu0
      %v1498 = vadd.f32 %v1424, %v1497
      %v1499 = vpop.f32.mrb[0].mxu0
      %v1500 = vadd.f32 %v1426, %v1499
      %1501 = vdwg.mxu0
      %1502 = vrot.lane.b32.xlu0 %v1332, 126
      %v1503 = vpop.permute.xlu0 %1502
      %1504 = vrot.lane.b32.xlu0 %v1333, 126
      %v1505 = vpop.permute.xlu0 %1504
      %1506 = vrot.lane.b32.xlu0 %v1334, 126
      %v1507 = vpop.permute.xlu0 %1506
      %v1508 = vsel %vm640, %v1503, %v1505
      %v1509 = vsel %vm640, %v1505, %v1507
      %v1512 = vsel %vm632, %v1508, 0.0
      %v1513 = vsel %vm633, %v1509, 0.0
      %s1514 = scalar_lea.vmem %s2, 8
      %v1515 = vld [vmem:[%s1514] sm:$0xf]
      %v1517 = vsel %vm1353, %v1515, 0
      %1519 = vmatprep.subr.mxu0 %v1513
      %1520 = vmatpush1.msra.mxu0 %v1512
      %1521 = vmatprep.subr.mxu0 0.0
      %1522 = vmatpush1.msra.mxu0 0.0
      %1523 = vmatprep.subr.mxu0 0.0
      %1524 = vmatpush1.msra.mxu0 0.0
      %1525 = vmatprep.subr.mxu0 0.0
      %1526 = vmatpush1.msra.mxu0 0.0
      %1527 = vmatprep.subr.mxu0 0.0
      %1528 = vmatpush1.msra.mxu0 0.0
      %1529 = vmatprep.subr.mxu0 0.0
      %1530 = vmatpush1.msra.mxu0 0.0
      %1531 = vmatprep.subr.mxu0 0.0
      %1532 = vmatpush1.msra.mxu0 0.0
      %1533 = vmatprep.subr.mxu0 0.0
      %1534 = vmatpush1.msra.mxu0 0.0
      %1535 = vmatprep.subr.mxu0 0.0
      %1536 = vmatpush1.msra.mxu0 0.0
      %1537 = vmatprep.subr.mxu0 0.0
      %1538 = vmatpush1.msra.mxu0 0.0
      %1539 = vmatprep.subr.mxu0 0.0
      %1540 = vmatpush1.msra.mxu0 0.0
      %1541 = vmatprep.subr.mxu0 0.0
      %1542 = vmatpush1.msra.mxu0 0.0
      %1543 = vmatprep.subr.mxu0 0.0
      %1544 = vmatpush1.msra.mxu0 0.0
      %1545 = vmatprep.subr.mxu0 0.0
      %1546 = vmatpush1.msra.mxu0 0.0
      %1547 = vmatprep.subr.mxu0 0.0
      %1548 = vmatpush1.msra.mxu0 0.0
      %1549 = vmatprep.subr.mxu0 0.0
      %1550 = vmatpush1.msra.mxu0 0.0
      %1551 = vmatprep.subr.mxu0 0.0
      %1552 = vmatpush1.msra.mxu0 0.0
      %1553 = vmatprep.subr.mxu0 0.0
      %1554 = vmatpush1.msra.mxu0 0.0
      %1555 = vmatprep.subr.mxu0 0.0
      %1556 = vmatpush1.msra.mxu0 0.0
      %1557 = vmatprep.subr.mxu0 0.0
      %1558 = vmatpush1.msra.mxu0 0.0
      %1559 = vmatprep.subr.mxu0 0.0
      %1560 = vmatpush1.msra.mxu0 0.0
      %1561 = vmatprep.subr.mxu0 0.0
      %1562 = vmatpush1.msra.mxu0 0.0
      %1563 = vmatprep.subr.mxu0 0.0
      %1564 = vmatpush1.msra.mxu0 0.0
      %1565 = vmatprep.subr.mxu0 0.0
      %1566 = vmatpush1.msra.mxu0 0.0
      %1567 = vmatprep.subr.mxu0 0.0
      %1568 = vmatpush1.msra.mxu0 0.0
      %1569 = vmatprep.subr.mxu0 0.0
      %1570 = vmatpush1.msra.mxu0 0.0
      %1571 = vmatprep.subr.mxu0 0.0
      %1572 = vmatpush1.msra.mxu0 0.0
      %1573 = vmatprep.subr.mxu0 0.0
      %1574 = vmatpush1.msra.mxu0 0.0
      %1575 = vmatprep.subr.mxu0 0.0
      %1576 = vmatpush1.msra.mxu0 0.0
      %1577 = vmatprep.subr.mxu0 0.0
      %1578 = vmatpush1.msra.mxu0 0.0
      %1579 = vmatprep.subr.mxu0 0.0
      %1580 = vmatpush1.msra.mxu0 0.0
      %1581 = vmatprep.subr.mxu0 0.0
      %1582 = vmatpush1.msra.mxu0 0.0
      %1583 = vmatprep.mubr.f32.mxu0 0.0
      %1584 = vmatmul.mubr.f32.gmra.mrb[0].mxu0 %v1517
      %v1585 = vpop.f32.mrb[0].mxu0
      %v1586 = vadd.f32 0.0, %v1585
      %v1587 = vpop.f32.mrb[0].mxu0
      %v1588 = vadd.f32 0.0, %v1587
      %1589 = vdwg.mxu0
      %v1590 = vadd.f32 %v1498, %v1586
      %v1591 = vadd.f32 %v1500, %v1588
      %1592 = vrot.lane.b32.xlu0 %v1332, 112
      %v1593 = vpop.permute.xlu0 %1592
      %1594 = vrot.lane.b32.xlu0 %v1333, 112
      %v1595 = vpop.permute.xlu0 %1594
      %1596 = vrot.lane.b32.xlu0 %v1334, 112
      %v1597 = vpop.permute.xlu0 %1596
      %v1598 = vsel %vm737, %v1593, %v1595
      %v1599 = vsel %vm737, %v1595, %v1597
      %v1602 = vsel %vm451, %v1598, 0.0
      %v1603 = vsel %vm452, %v1599, 0.0
      %s1604 = scalar_lea.vmem %s2, 12
      %v1605 = vld [vmem:[%s1604] sm:$0xf]
      %v1607 = vsel %vm1353, %v1605, 0
      %1609 = vmatprep.subr.mxu0 %v1603
      %1610 = vmatpush1.msra.mxu0 %v1602
      %1611 = vmatprep.subr.mxu0 0.0
      %1612 = vmatpush1.msra.mxu0 0.0
      %1613 = vmatprep.subr.mxu0 0.0
      %1614 = vmatpush1.msra.mxu0 0.0
      %1615 = vmatprep.subr.mxu0 0.0
      %1616 = vmatpush1.msra.mxu0 0.0
      %1617 = vmatprep.subr.mxu0 0.0
      %1618 = vmatpush1.msra.mxu0 0.0
      %1619 = vmatprep.subr.mxu0 0.0
      %1620 = vmatpush1.msra.mxu0 0.0
      %1621 = vmatprep.subr.mxu0 0.0
      %1622 = vmatpush1.msra.mxu0 0.0
      %1623 = vmatprep.subr.mxu0 0.0
      %1624 = vmatpush1.msra.mxu0 0.0
      %1625 = vmatprep.subr.mxu0 0.0
      %1626 = vmatpush1.msra.mxu0 0.0
      %1627 = vmatprep.subr.mxu0 0.0
      %1628 = vmatpush1.msra.mxu0 0.0
      %1629 = vmatprep.subr.mxu0 0.0
      %1630 = vmatpush1.msra.mxu0 0.0
      %1631 = vmatprep.subr.mxu0 0.0
      %1632 = vmatpush1.msra.mxu0 0.0
      %1633 = vmatprep.subr.mxu0 0.0
      %1634 = vmatpush1.msra.mxu0 0.0
      %1635 = vmatprep.subr.mxu0 0.0
      %1636 = vmatpush1.msra.mxu0 0.0
      %1637 = vmatprep.subr.mxu0 0.0
      %1638 = vmatpush1.msra.mxu0 0.0
      %1639 = vmatprep.subr.mxu0 0.0
      %1640 = vmatpush1.msra.mxu0 0.0
      %1641 = vmatprep.subr.mxu0 0.0
      %1642 = vmatpush1.msra.mxu0 0.0
      %1643 = vmatprep.subr.mxu0 0.0
      %1644 = vmatpush1.msra.mxu0 0.0
      %1645 = vmatprep.subr.mxu0 0.0
      %1646 = vmatpush1.msra.mxu0 0.0
      %1647 = vmatprep.subr.mxu0 0.0
      %1648 = vmatpush1.msra.mxu0 0.0
      %1649 = vmatprep.subr.mxu0 0.0
      %1650 = vmatpush1.msra.mxu0 0.0
      %1651 = vmatprep.subr.mxu0 0.0
      %1652 = vmatpush1.msra.mxu0 0.0
      %1653 = vmatprep.subr.mxu0 0.0
      %1654 = vmatpush1.msra.mxu0 0.0
      %1655 = vmatprep.subr.mxu0 0.0
      %1656 = vmatpush1.msra.mxu0 0.0
      %1657 = vmatprep.subr.mxu0 0.0
      %1658 = vmatpush1.msra.mxu0 0.0
      %1659 = vmatprep.subr.mxu0 0.0
      %1660 = vmatpush1.msra.mxu0 0.0
      %1661 = vmatprep.subr.mxu0 0.0
      %1662 = vmatpush1.msra.mxu0 0.0
      %1663 = vmatprep.subr.mxu0 0.0
      %1664 = vmatpush1.msra.mxu0 0.0
      %1665 = vmatprep.subr.mxu0 0.0
      %1666 = vmatpush1.msra.mxu0 0.0
      %1667 = vmatprep.subr.mxu0 0.0
      %1668 = vmatpush1.msra.mxu0 0.0
      %1669 = vmatprep.subr.mxu0 0.0
      %1670 = vmatpush1.msra.mxu0 0.0
      %1671 = vmatprep.subr.mxu0 0.0
      %1672 = vmatpush1.msra.mxu0 0.0
      %1673 = vmatprep.mubr.f32.mxu0 0.0
      %1674 = vmatmul.mubr.f32.gmra.mrb[0].mxu0 %v1607
      %v1675 = vpop.f32.mrb[0].mxu0
      %v1676 = vadd.f32 0.0, %v1675
      %v1677 = vpop.f32.mrb[0].mxu0
      %v1678 = vadd.f32 0.0, %v1677
      %1679 = vdwg.mxu0
      %v1680 = vadd.f32 %v1590, %v1676
      %v1681 = vadd.f32 %v1591, %v1678
      %s1682 = scalar_lea.vmem %s2, 16
      %v1683 = vld [vmem:[%s1682] sm:$0xf]
      %1684 = vrot.lane.b32.xlu0 %v1332, 111
      %v1685 = vpop.permute.xlu0 %1684
      %1686 = vrot.lane.b32.xlu0 %v1333, 111
      %v1687 = vpop.permute.xlu0 %1686
      %1688 = vrot.lane.b32.xlu0 %v1334, 111
      %v1689 = vpop.permute.xlu0 %1688
      %v1690 = vsel %vm836, %v1685, %v1687
      %v1691 = vsel %vm836, %v1687, %v1689
      %v1695 = vsel %vm1353, %v1683, 0
      %1697 = vmatprep.subr.mxu0 %v1691
      %1698 = vmatpush1.msra.mxu0 %v1690
      %1699 = vmatprep.subr.mxu0 0.0
      %1700 = vmatpush1.msra.mxu0 0.0
      %1701 = vmatprep.subr.mxu0 0.0
      %1702 = vmatpush1.msra.mxu0 0.0
      %1703 = vmatprep.subr.mxu0 0.0
      %1704 = vmatpush1.msra.mxu0 0.0
      %1705 = vmatprep.subr.mxu0 0.0
      %1706 = vmatpush1.msra.mxu0 0.0
      %1707 = vmatprep.subr.mxu0 0.0
      %1708 = vmatpush1.msra.mxu0 0.0
      %1709 = vmatprep.subr.mxu0 0.0
      %1710 = vmatpush1.msra.mxu0 0.0
      %1711 = vmatprep.subr.mxu0 0.0
      %1712 = vmatpush1.msra.mxu0 0.0
      %1713 = vmatprep.subr.mxu0 0.0
      %1714 = vmatpush1.msra.mxu0 0.0
      %1715 = vmatprep.subr.mxu0 0.0
      %1716 = vmatpush1.msra.mxu0 0.0
      %1717 = vmatprep.subr.mxu0 0.0
      %1718 = vmatpush1.msra.mxu0 0.0
      %1719 = vmatprep.subr.mxu0 0.0
      %1720 = vmatpush1.msra.mxu0 0.0
      %1721 = vmatprep.subr.mxu0 0.0
      %1722 = vmatpush1.msra.mxu0 0.0
      %1723 = vmatprep.subr.mxu0 0.0
      %1724 = vmatpush1.msra.mxu0 0.0
      %1725 = vmatprep.subr.mxu0 0.0
      %1726 = vmatpush1.msra.mxu0 0.0
      %1727 = vmatprep.subr.mxu0 0.0
      %1728 = vmatpush1.msra.mxu0 0.0
      %1729 = vmatprep.subr.mxu0 0.0
      %1730 = vmatpush1.msra.mxu0 0.0
      %1731 = vmatprep.subr.mxu0 0.0
      %1732 = vmatpush1.msra.mxu0 0.0
      %1733 = vmatprep.subr.mxu0 0.0
      %1734 = vmatpush1.msra.mxu0 0.0
      %1735 = vmatprep.subr.mxu0 0.0
      %1736 = vmatpush1.msra.mxu0 0.0
      %1737 = vmatprep.subr.mxu0 0.0
      %1738 = vmatpush1.msra.mxu0 0.0
      %1739 = vmatprep.subr.mxu0 0.0
      %1740 = vmatpush1.msra.mxu0 0.0
      %1741 = vmatprep.subr.mxu0 0.0
      %1742 = vmatpush1.msra.mxu0 0.0
      %1743 = vmatprep.subr.mxu0 0.0
      %1744 = vmatpush1.msra.mxu0 0.0
      %1745 = vmatprep.subr.mxu0 0.0
      %1746 = vmatpush1.msra.mxu0 0.0
      %1747 = vmatprep.subr.mxu0 0.0
      %1748 = vmatpush1.msra.mxu0 0.0
      %1749 = vmatprep.subr.mxu0 0.0
      %1750 = vmatpush1.msra.mxu0 0.0
      %1751 = vmatprep.subr.mxu0 0.0
      %1752 = vmatpush1.msra.mxu0 0.0
      %1753 = vmatprep.subr.mxu0 0.0
      %1754 = vmatpush1.msra.mxu0 0.0
      %1755 = vmatprep.subr.mxu0 0.0
      %1756 = vmatpush1.msra.mxu0 0.0
      %1757 = vmatprep.subr.mxu0 0.0
      %1758 = vmatpush1.msra.mxu0 0.0
      %1759 = vmatprep.subr.mxu0 0.0
      %1760 = vmatpush1.msra.mxu0 0.0
      %1761 = vmatprep.mubr.f32.mxu0 0.0
      %1762 = vmatmul.mubr.f32.gmra.mrb[0].mxu0 %v1695
      %v1763 = vpop.f32.mrb[0].mxu0
      %v1764 = vadd.f32 0.0, %v1763
      %v1765 = vpop.f32.mrb[0].mxu0
      %v1766 = vadd.f32 0.0, %v1765
      %1767 = vdwg.mxu0
      %v1768 = vadd.f32 %v1680, %v1764
      %v1769 = vadd.f32 %v1681, %v1766
      %1770 = vrot.lane.b32.xlu0 %v1332, 110
      %v1771 = vpop.permute.xlu0 %1770
      %1772 = vrot.lane.b32.xlu0 %v1333, 110
      %v1773 = vpop.permute.xlu0 %1772
      %1774 = vrot.lane.b32.xlu0 %v1334, 110
      %v1775 = vpop.permute.xlu0 %1774
      %v1776 = vsel %vm925, %v1771, %v1773
      %v1777 = vsel %vm925, %v1773, %v1775
      %v1780 = vsel %vm632, %v1776, 0.0
      %v1781 = vsel %vm633, %v1777, 0.0
      %s1782 = scalar_lea.vmem %s2, 20
      %v1783 = vld [vmem:[%s1782] sm:$0xf]
      %v1785 = vsel %vm1353, %v1783, 0
      %1787 = vmatprep.subr.mxu0 %v1781
      %1788 = vmatpush1.msra.mxu0 %v1780
      %1789 = vmatprep.subr.mxu0 0.0
      %1790 = vmatpush1.msra.mxu0 0.0
      %1791 = vmatprep.subr.mxu0 0.0
      %1792 = vmatpush1.msra.mxu0 0.0
      %1793 = vmatprep.subr.mxu0 0.0
      %1794 = vmatpush1.msra.mxu0 0.0
      %1795 = vmatprep.subr.mxu0 0.0
      %1796 = vmatpush1.msra.mxu0 0.0
      %1797 = vmatprep.subr.mxu0 0.0
      %1798 = vmatpush1.msra.mxu0 0.0
      %1799 = vmatprep.subr.mxu0 0.0
      %1800 = vmatpush1.msra.mxu0 0.0
      %1801 = vmatprep.subr.mxu0 0.0
      %1802 = vmatpush1.msra.mxu0 0.0
      %1803 = vmatprep.subr.mxu0 0.0
      %1804 = vmatpush1.msra.mxu0 0.0
      %1805 = vmatprep.subr.mxu0 0.0
      %1806 = vmatpush1.msra.mxu0 0.0
      %1807 = vmatprep.subr.mxu0 0.0
      %1808 = vmatpush1.msra.mxu0 0.0
      %1809 = vmatprep.subr.mxu0 0.0
      %1810 = vmatpush1.msra.mxu0 0.0
      %1811 = vmatprep.subr.mxu0 0.0
      %1812 = vmatpush1.msra.mxu0 0.0
      %1813 = vmatprep.subr.mxu0 0.0
      %1814 = vmatpush1.msra.mxu0 0.0
      %1815 = vmatprep.subr.mxu0 0.0
      %1816 = vmatpush1.msra.mxu0 0.0
      %1817 = vmatprep.subr.mxu0 0.0
      %1818 = vmatpush1.msra.mxu0 0.0
      %1819 = vmatprep.subr.mxu0 0.0
      %1820 = vmatpush1.msra.mxu0 0.0
      %1821 = vmatprep.subr.mxu0 0.0
      %1822 = vmatpush1.msra.mxu0 0.0
      %1823 = vmatprep.subr.mxu0 0.0
      %1824 = vmatpush1.msra.mxu0 0.0
      %1825 = vmatprep.subr.mxu0 0.0
      %1826 = vmatpush1.msra.mxu0 0.0
      %1827 = vmatprep.subr.mxu0 0.0
      %1828 = vmatpush1.msra.mxu0 0.0
      %1829 = vmatprep.subr.mxu0 0.0
      %1830 = vmatpush1.msra.mxu0 0.0
      %1831 = vmatprep.subr.mxu0 0.0
      %1832 = vmatpush1.msra.mxu0 0.0
      %1833 = vmatprep.subr.mxu0 0.0
      %1834 = vmatpush1.msra.mxu0 0.0
      %1835 = vmatprep.subr.mxu0 0.0
      %1836 = vmatpush1.msra.mxu0 0.0
      %1837 = vmatprep.subr.mxu0 0.0
      %1838 = vmatpush1.msra.mxu0 0.0
      %1839 = vmatprep.subr.mxu0 0.0
      %1840 = vmatpush1.msra.mxu0 0.0
      %1841 = vmatprep.subr.mxu0 0.0
      %1842 = vmatpush1.msra.mxu0 0.0
      %1843 = vmatprep.subr.mxu0 0.0
      %1844 = vmatpush1.msra.mxu0 0.0
      %1845 = vmatprep.subr.mxu0 0.0
      %1846 = vmatpush1.msra.mxu0 0.0
      %1847 = vmatprep.subr.mxu0 0.0
      %1848 = vmatpush1.msra.mxu0 0.0
      %1849 = vmatprep.subr.mxu0 0.0
      %1850 = vmatpush1.msra.mxu0 0.0
      %1851 = vmatprep.mubr.f32.mxu0 0.0
      %1852 = vmatmul.mubr.f32.gmra.mrb[0].mxu0 %v1785
      %v1853 = vpop.f32.mrb[0].mxu0
      %v1854 = vadd.f32 0.0, %v1853
      %v1855 = vpop.f32.mrb[0].mxu0
      %v1856 = vadd.f32 0.0, %v1855
      %1857 = vdwg.mxu0
      %v1858 = vadd.f32 %v1768, %v1854
      %v1859 = vadd.f32 %v1769, %v1856
      %1860 = vrot.lane.b32.xlu0 %v1332, 96
      %v1861 = vpop.permute.xlu0 %1860
      %1862 = vrot.lane.b32.xlu0 %v1333, 96
      %v1863 = vpop.permute.xlu0 %1862
      %1864 = vrot.lane.b32.xlu0 %v1334, 96
      %v1865 = vpop.permute.xlu0 %1864
      %v1866 = vsel %vm1022, %v1861, %v1863
      %v1867 = vsel %vm1022, %v1863, %v1865
      %v1870 = vsel %vm451, %v1866, 0.0
      %v1871 = vsel %vm452, %v1867, 0.0
      %s1872 = scalar_lea.vmem %s2, 24
      %v1873 = vld [vmem:[%s1872] sm:$0xf]
      %v1875 = vsel %vm1353, %v1873, 0
      %1877 = vmatprep.subr.mxu0 %v1871
      %1878 = vmatpush1.msra.mxu0 %v1870
      %1879 = vmatprep.subr.mxu0 0.0
      %1880 = vmatpush1.msra.mxu0 0.0
      %1881 = vmatprep.subr.mxu0 0.0
      %1882 = vmatpush1.msra.mxu0 0.0
      %1883 = vmatprep.subr.mxu0 0.0
      %1884 = vmatpush1.msra.mxu0 0.0
      %1885 = vmatprep.subr.mxu0 0.0
      %1886 = vmatpush1.msra.mxu0 0.0
      %1887 = vmatprep.subr.mxu0 0.0
      %1888 = vmatpush1.msra.mxu0 0.0
      %1889 = vmatprep.subr.mxu0 0.0
      %1890 = vmatpush1.msra.mxu0 0.0
      %1891 = vmatprep.subr.mxu0 0.0
      %1892 = vmatpush1.msra.mxu0 0.0
      %1893 = vmatprep.subr.mxu0 0.0
      %1894 = vmatpush1.msra.mxu0 0.0
      %1895 = vmatprep.subr.mxu0 0.0
      %1896 = vmatpush1.msra.mxu0 0.0
      %1897 = vmatprep.subr.mxu0 0.0
      %1898 = vmatpush1.msra.mxu0 0.0
      %1899 = vmatprep.subr.mxu0 0.0
      %1900 = vmatpush1.msra.mxu0 0.0
      %1901 = vmatprep.subr.mxu0 0.0
      %1902 = vmatpush1.msra.mxu0 0.0
      %1903 = vmatprep.subr.mxu0 0.0
      %1904 = vmatpush1.msra.mxu0 0.0
      %1905 = vmatprep.subr.mxu0 0.0
      %1906 = vmatpush1.msra.mxu0 0.0
      %1907 = vmatprep.subr.mxu0 0.0
      %1908 = vmatpush1.msra.mxu0 0.0
      %1909 = vmatprep.subr.mxu0 0.0
      %1910 = vmatpush1.msra.mxu0 0.0
      %1911 = vmatprep.subr.mxu0 0.0
      %1912 = vmatpush1.msra.mxu0 0.0
      %1913 = vmatprep.subr.mxu0 0.0
      %1914 = vmatpush1.msra.mxu0 0.0
      %1915 = vmatprep.subr.mxu0 0.0
      %1916 = vmatpush1.msra.mxu0 0.0
      %1917 = vmatprep.subr.mxu0 0.0
      %1918 = vmatpush1.msra.mxu0 0.0
      %1919 = vmatprep.subr.mxu0 0.0
      %1920 = vmatpush1.msra.mxu0 0.0
      %1921 = vmatprep.subr.mxu0 0.0
      %1922 = vmatpush1.msra.mxu0 0.0
      %1923 = vmatprep.subr.mxu0 0.0
      %1924 = vmatpush1.msra.mxu0 0.0
      %1925 = vmatprep.subr.mxu0 0.0
      %1926 = vmatpush1.msra.mxu0 0.0
      %1927 = vmatprep.subr.mxu0 0.0
      %1928 = vmatpush1.msra.mxu0 0.0
      %1929 = vmatprep.subr.mxu0 0.0
      %1930 = vmatpush1.msra.mxu0 0.0
      %1931 = vmatprep.subr.mxu0 0.0
      %1932 = vmatpush1.msra.mxu0 0.0
      %1933 = vmatprep.subr.mxu0 0.0
      %1934 = vmatpush1.msra.mxu0 0.0
      %1935 = vmatprep.subr.mxu0 0.0
      %1936 = vmatpush1.msra.mxu0 0.0
      %1937 = vmatprep.subr.mxu0 0.0
      %1938 = vmatpush1.msra.mxu0 0.0
      %1939 = vmatprep.subr.mxu0 0.0
      %1940 = vmatpush1.msra.mxu0 0.0
      %1941 = vmatprep.mubr.f32.mxu0 0.0
      %1942 = vmatmul.mubr.f32.gmra.mrb[0].mxu0 %v1875
      %v1943 = vpop.f32.mrb[0].mxu0
      %v1944 = vadd.f32 0.0, %v1943
      %v1945 = vpop.f32.mrb[0].mxu0
      %v1946 = vadd.f32 0.0, %v1945
      %1947 = vdwg.mxu0
      %v1948 = vadd.f32 %v1858, %v1944
      %v1949 = vadd.f32 %v1859, %v1946
      %s1950 = scalar_lea.vmem %s2, 28
      %v1951 = vld [vmem:[%s1950] sm:$0xf]
      %1952 = vrot.lane.b32.xlu0 %v1332, 95
      %v1953 = vpop.permute.xlu0 %1952
      %1954 = vrot.lane.b32.xlu0 %v1333, 95
      %v1955 = vpop.permute.xlu0 %1954
      %1956 = vrot.lane.b32.xlu0 %v1334, 95
      %v1957 = vpop.permute.xlu0 %1956
      %v1958 = vsel %vm1121, %v1953, %v1955
      %v1959 = vsel %vm1121, %v1955, %v1957
      %v1963 = vsel %vm1353, %v1951, 0
      %1965 = vmatprep.subr.mxu0 %v1959
      %1966 = vmatpush1.msra.mxu0 %v1958
      %1967 = vmatprep.subr.mxu0 0.0
      %1968 = vmatpush1.msra.mxu0 0.0
      %1969 = vmatprep.subr.mxu0 0.0
      %1970 = vmatpush1.msra.mxu0 0.0
      %1971 = vmatprep.subr.mxu0 0.0
      %1972 = vmatpush1.msra.mxu0 0.0
      %1973 = vmatprep.subr.mxu0 0.0
      %1974 = vmatpush1.msra.mxu0 0.0
      %1975 = vmatprep.subr.mxu0 0.0
      %1976 = vmatpush1.msra.mxu0 0.0
      %1977 = vmatprep.subr.mxu0 0.0
      %1978 = vmatpush1.msra.mxu0 0.0
      %1979 = vmatprep.subr.mxu0 0.0
      %1980 = vmatpush1.msra.mxu0 0.0
      %1981 = vmatprep.subr.mxu0 0.0
      %1982 = vmatpush1.msra.mxu0 0.0
      %1983 = vmatprep.subr.mxu0 0.0
      %1984 = vmatpush1.msra.mxu0 0.0
      %1985 = vmatprep.subr.mxu0 0.0
      %1986 = vmatpush1.msra.mxu0 0.0
      %1987 = vmatprep.subr.mxu0 0.0
      %1988 = vmatpush1.msra.mxu0 0.0
      %1989 = vmatprep.subr.mxu0 0.0
      %1990 = vmatpush1.msra.mxu0 0.0
      %1991 = vmatprep.subr.mxu0 0.0
      %1992 = vmatpush1.msra.mxu0 0.0
      %1993 = vmatprep.subr.mxu0 0.0
      %1994 = vmatpush1.msra.mxu0 0.0
      %1995 = vmatprep.subr.mxu0 0.0
      %1996 = vmatpush1.msra.mxu0 0.0
      %1997 = vmatprep.subr.mxu0 0.0
      %1998 = vmatpush1.msra.mxu0 0.0
      %1999 = vmatprep.subr.mxu0 0.0
      %2000 = vmatpush1.msra.mxu0 0.0
      %2001 = vmatprep.subr.mxu0 0.0
      %2002 = vmatpush1.msra.mxu0 0.0
      %2003 = vmatprep.subr.mxu0 0.0
      %2004 = vmatpush1.msra.mxu0 0.0
      %2005 = vmatprep.subr.mxu0 0.0
      %2006 = vmatpush1.msra.mxu0 0.0
      %2007 = vmatprep.subr.mxu0 0.0
      %2008 = vmatpush1.msra.mxu0 0.0
      %2009 = vmatprep.subr.mxu0 0.0
      %2010 = vmatpush1.msra.mxu0 0.0
      %2011 = vmatprep.subr.mxu0 0.0
      %2012 = vmatpush1.msra.mxu0 0.0
      %2013 = vmatprep.subr.mxu0 0.0
      %2014 = vmatpush1.msra.mxu0 0.0
      %2015 = vmatprep.subr.mxu0 0.0
      %2016 = vmatpush1.msra.mxu0 0.0
      %2017 = vmatprep.subr.mxu0 0.0
      %2018 = vmatpush1.msra.mxu0 0.0
      %2019 = vmatprep.subr.mxu0 0.0
      %2020 = vmatpush1.msra.mxu0 0.0
      %2021 = vmatprep.subr.mxu0 0.0
      %2022 = vmatpush1.msra.mxu0 0.0
      %2023 = vmatprep.subr.mxu0 0.0
      %2024 = vmatpush1.msra.mxu0 0.0
      %2025 = vmatprep.subr.mxu0 0.0
      %2026 = vmatpush1.msra.mxu0 0.0
      %2027 = vmatprep.subr.mxu0 0.0
      %2028 = vmatpush1.msra.mxu0 0.0
      %2029 = vmatprep.mubr.f32.mxu0 0.0
      %2030 = vmatmul.mubr.f32.gmra.mrb[0].mxu0 %v1963
      %v2031 = vpop.f32.mrb[0].mxu0
      %v2032 = vadd.f32 0.0, %v2031
      %v2033 = vpop.f32.mrb[0].mxu0
      %v2034 = vadd.f32 0.0, %v2033
      %2035 = vdwg.mxu0
      %v2036 = vadd.f32 %v1948, %v2032
      %v2037 = vadd.f32 %v1949, %v2034
      %2038 = vrot.lane.b32.xlu0 %v1332, 94
      %v2039 = vpop.permute.xlu0 %2038
      %2040 = vrot.lane.b32.xlu0 %v1333, 94
      %v2041 = vpop.permute.xlu0 %2040
      %2042 = vrot.lane.b32.xlu0 %v1334, 94
      %v2043 = vpop.permute.xlu0 %2042
      %v2044 = vsel %vm1210, %v2039, %v2041
      %v2045 = vsel %vm1210, %v2041, %v2043
      %v2048 = vsel %vm632, %v2044, 0.0
      %v2049 = vsel %vm633, %v2045, 0.0
      %s2050 = scalar_lea.vmem %s2, 32
      %v2051 = vld [vmem:[%s2050] sm:$0xf]
      %v2053 = vsel %vm1353, %v2051, 0
      %2055 = vmatprep.subr.mxu0 %v2049
      %2056 = vmatpush1.msra.mxu0 %v2048
      %2057 = vmatprep.subr.mxu0 0.0
      %2058 = vmatpush1.msra.mxu0 0.0
      %2059 = vmatprep.subr.mxu0 0.0
      %2060 = vmatpush1.msra.mxu0 0.0
      %2061 = vmatprep.subr.mxu0 0.0
      %2062 = vmatpush1.msra.mxu0 0.0
      %2063 = vmatprep.subr.mxu0 0.0
      %2064 = vmatpush1.msra.mxu0 0.0
      %2065 = vmatprep.subr.mxu0 0.0
      %2066 = vmatpush1.msra.mxu0 0.0
      %2067 = vmatprep.subr.mxu0 0.0
      %2068 = vmatpush1.msra.mxu0 0.0
      %2069 = vmatprep.subr.mxu0 0.0
      %2070 = vmatpush1.msra.mxu0 0.0
      %2071 = vmatprep.subr.mxu0 0.0
      %2072 = vmatpush1.msra.mxu0 0.0
      %2073 = vmatprep.subr.mxu0 0.0
      %2074 = vmatpush1.msra.mxu0 0.0
      %2075 = vmatprep.subr.mxu0 0.0
      %2076 = vmatpush1.msra.mxu0 0.0
      %2077 = vmatprep.subr.mxu0 0.0
      %2078 = vmatpush1.msra.mxu0 0.0
      %2079 = vmatprep.subr.mxu0 0.0
      %2080 = vmatpush1.msra.mxu0 0.0
      %2081 = vmatprep.subr.mxu0 0.0
      %2082 = vmatpush1.msra.mxu0 0.0
      %2083 = vmatprep.subr.mxu0 0.0
      %2084 = vmatpush1.msra.mxu0 0.0
      %2085 = vmatprep.subr.mxu0 0.0
      %2086 = vmatpush1.msra.mxu0 0.0
      %2087 = vmatprep.subr.mxu0 0.0
      %2088 = vmatpush1.msra.mxu0 0.0
      %2089 = vmatprep.subr.mxu0 0.0
      %2090 = vmatpush1.msra.mxu0 0.0
      %2091 = vmatprep.subr.mxu0 0.0
      %2092 = vmatpush1.msra.mxu0 0.0
      %2093 = vmatprep.subr.mxu0 0.0
      %2094 = vmatpush1.msra.mxu0 0.0
      %2095 = vmatprep.subr.mxu0 0.0
      %2096 = vmatpush1.msra.mxu0 0.0
      %2097 = vmatprep.subr.mxu0 0.0
      %2098 = vmatpush1.msra.mxu0 0.0
      %2099 = vmatprep.subr.mxu0 0.0
      %2100 = vmatpush1.msra.mxu0 0.0
      %2101 = vmatprep.subr.mxu0 0.0
      %2102 = vmatpush1.msra.mxu0 0.0
      %2103 = vmatprep.subr.mxu0 0.0
      %2104 = vmatpush1.msra.mxu0 0.0
      %2105 = vmatprep.subr.mxu0 0.0
      %2106 = vmatpush1.msra.mxu0 0.0
      %2107 = vmatprep.subr.mxu0 0.0
      %2108 = vmatpush1.msra.mxu0 0.0
      %2109 = vmatprep.subr.mxu0 0.0
      %2110 = vmatpush1.msra.mxu0 0.0
      %2111 = vmatprep.subr.mxu0 0.0
      %2112 = vmatpush1.msra.mxu0 0.0
      %2113 = vmatprep.subr.mxu0 0.0
      %2114 = vmatpush1.msra.mxu0 0.0
      %2115 = vmatprep.subr.mxu0 0.0
      %2116 = vmatpush1.msra.mxu0 0.0
      %2117 = vmatprep.subr.mxu0 0.0
      %2118 = vmatpush1.msra.mxu0 0.0
      %2119 = vmatprep.mubr.f32.mxu0 0.0
      %2120 = vmatmul.mubr.f32.gmra.mrb[0].mxu0 %v2053
      %v2121 = vpop.f32.mrb[0].mxu0
      %v2122 = vadd.f32 0.0, %v2121
      %v2123 = vpop.f32.mrb[0].mxu0
      %v2124 = vadd.f32 0.0, %v2123
      %2125 = vdwg.mxu0
      %v2126 = vadd.f32 %v2036, %v2122
      %v2127 = vadd.f32 %v2037, %v2124
      %v2128 = vld [vmem:[%s7] sm:$0xf]
      %2130 = vset.pattern.permute.xlu0 0
      %2131 = vperm.xlu0 %2130, %v2128
      %v2132 = vpop.permute.xlu0 %2131
      %v2134 = vadd.f32 %v2126, %v2132
      %v2135 = vadd.f32 %v2127, %v2132
      %vm2136 = vcmp.ge.f32.partialorder %v2134, 0.0
      %vm2137 = vcmp.ge.f32.partialorder %v2135, 0.0
      %v2138 = vmul.f32 %v2134, 0.2
      %v2139 = vmul.f32 %v2135, 0.2
      %v2140 = vsel %vm2136, %v2134, %v2138
      %v2141 = vsel %vm2137, %v2135, %v2139
      %2144 = vrot.lane.b32.xlu0 %v2140, 17
      %v2145 = vpop.permute.xlu0 %2144
      %2146 = vrot.lane.b32.xlu0 %v2141, 17
      %v2147 = vpop.permute.xlu0 %2146
      %v2148 = vsel %vm405, %v2145, %v2147
      %2152 = vst.msk [vmem:[#allocation2 + $0x18] sm:$0xf] %vm410, %v2145
      %2153 = vst [vmem:[#allocation2 + $0x20] sm:$0xf] %v2148
      %2154 = vst.msk [vmem:[#allocation2 + $0x28] sm:$0xf] %vm413, %v2147
      %v2155 = vld [vmem:[#allocation2] sm:$0xff]
      %v2156 = vld [vmem:[#allocation2 + $0x8] sm:$0xff]
      %v2157 = vld [vmem:[#allocation2 + $0x10] sm:$0xff]
      %v2158 = vld [vmem:[#allocation2 + $0x18] sm:$0xf]
      %v2159 = vld [vmem:[#allocation2 + $0x20] sm:$0xf]
      %v2160 = vld [vmem:[#allocation2 + $0x28] sm:$0xf]
      %v2161 = vsel %vm451, %v2155, 0.0
      %v2162 = vsel %vm452, %v2156, 0.0
      %v2163 = vsel %vm451, %v2158, 0.0
      %v2164 = vsel %vm452, %v2159, 0.0
      %v2165 = vld [vmem:[%s3] sm:$0xf]
      %s2166 = scalar_lea.vmem %s3, 4
      %v2167 = vld [vmem:[%s2166] sm:$0xf]
      %2174 = vrot.lane.b32.xlu0 %v2155, 127
      %v2175 = vpop.permute.xlu0 %2174
      %2176 = vrot.lane.b32.xlu0 %v2156, 127
      %v2177 = vpop.permute.xlu0 %2176
      %2178 = vrot.lane.b32.xlu0 %v2157, 127
      %v2179 = vpop.permute.xlu0 %2178
      %2180 = vrot.lane.b32.xlu0 %v2158, 127
      %v2181 = vpop.permute.xlu0 %2180
      %2182 = vrot.lane.b32.xlu0 %v2159, 127
      %v2183 = vpop.permute.xlu0 %2182
      %2184 = vrot.lane.b32.xlu0 %v2160, 127
      %v2185 = vpop.permute.xlu0 %2184
      %v2186 = vsel %vm467, %v2175, %v2177
      %v2187 = vsel %vm467, %v2177, %v2179
      %v2188 = vsel %vm467, %v2181, %v2183
      %v2189 = vsel %vm467, %v2183, %v2185
      %vm2192 = vcmask 97280
      %v2194 = vsel %vm2192, %v2167, 0
      %v2196 = vsel %vm474, %v2188, 0
      %v2198 = vsel %vm474, %v2189, 0
      %2200 = vmatprep.subr.mxu0 %v2187
      %2201 = vmatpush1.msra.mxu0 %v2186
      %2202 = vmatprep.subr.mxu0 %v2198
      %2203 = vmatpush1.msra.mxu0 %v2196
      %2204 = vmatprep.subr.mxu0 0.0
      %2205 = vmatpush1.msra.mxu0 0.0
      %2206 = vmatprep.subr.mxu0 0.0
      %2207 = vmatpush1.msra.mxu0 0.0
      %2208 = vmatprep.subr.mxu0 0.0
      %2209 = vmatpush1.msra.mxu0 0.0
      %2210 = vmatprep.subr.mxu0 0.0
      %2211 = vmatpush1.msra.mxu0 0.0
      %2212 = vmatprep.subr.mxu0 0.0
      %2213 = vmatpush1.msra.mxu0 0.0
      %2214 = vmatprep.subr.mxu0 0.0
      %2215 = vmatpush1.msra.mxu0 0.0
      %2216 = vmatprep.subr.mxu0 0.0
      %2217 = vmatpush1.msra.mxu0 0.0
      %2218 = vmatprep.subr.mxu0 0.0
      %2219 = vmatpush1.msra.mxu0 0.0
      %2220 = vmatprep.subr.mxu0 0.0
      %2221 = vmatpush1.msra.mxu0 0.0
      %2222 = vmatprep.subr.mxu0 0.0
      %2223 = vmatpush1.msra.mxu0 0.0
      %2224 = vmatprep.subr.mxu0 0.0
      %2225 = vmatpush1.msra.mxu0 0.0
      %2226 = vmatprep.subr.mxu0 0.0
      %2227 = vmatpush1.msra.mxu0 0.0
      %2228 = vmatprep.subr.mxu0 0.0
      %2229 = vmatpush1.msra.mxu0 0.0
      %2230 = vmatprep.subr.mxu0 0.0
      %2231 = vmatpush1.msra.mxu0 0.0
      %2232 = vmatprep.subr.mxu0 0.0
      %2233 = vmatpush1.msra.mxu0 0.0
      %2234 = vmatprep.subr.mxu0 0.0
      %2235 = vmatpush1.msra.mxu0 0.0
      %2236 = vmatprep.subr.mxu0 0.0
      %2237 = vmatpush1.msra.mxu0 0.0
      %2238 = vmatprep.subr.mxu0 0.0
      %2239 = vmatpush1.msra.mxu0 0.0
      %2240 = vmatprep.subr.mxu0 0.0
      %2241 = vmatpush1.msra.mxu0 0.0
      %2242 = vmatprep.subr.mxu0 0.0
      %2243 = vmatpush1.msra.mxu0 0.0
      %2244 = vmatprep.subr.mxu0 0.0
      %2245 = vmatpush1.msra.mxu0 0.0
      %2246 = vmatprep.subr.mxu0 0.0
      %2247 = vmatpush1.msra.mxu0 0.0
      %2248 = vmatprep.subr.mxu0 0.0
      %2249 = vmatpush1.msra.mxu0 0.0
      %2250 = vmatprep.subr.mxu0 0.0
      %2251 = vmatpush1.msra.mxu0 0.0
      %2252 = vmatprep.subr.mxu0 0.0
      %2253 = vmatpush1.msra.mxu0 0.0
      %2254 = vmatprep.subr.mxu0 0.0
      %2255 = vmatpush1.msra.mxu0 0.0
      %2256 = vmatprep.subr.mxu0 0.0
      %2257 = vmatpush1.msra.mxu0 0.0
      %2258 = vmatprep.subr.mxu0 0.0
      %2259 = vmatpush1.msra.mxu0 0.0
      %2260 = vmatprep.subr.mxu0 0.0
      %2261 = vmatpush1.msra.mxu0 0.0
      %2262 = vmatprep.subr.mxu0 0.0
      %2263 = vmatpush1.msra.mxu0 0.0
      %2264 = vmatprep.mubr.f32.mxu0 0.0
      %2265 = vmatmul.mubr.f32.gmra.mrb[0].mxu0 %v2194
      %v2266 = vpop.f32.mrb[0].mxu0
      %v2267 = vadd.f32 0.0, %v2266
      %v2268 = vpop.f32.mrb[0].mxu0
      %v2269 = vadd.f32 0.0, %v2268
      %2270 = vdwg.mxu0
      %v2272 = vsel %vm2192, %v2165, 0
      %v2275 = vsel %vm474, %v2163, 0
      %v2278 = vsel %vm474, %v2164, 0
      %2280 = vmatprep.subr.mxu0 %v2162
      %2281 = vmatpush1.msra.mxu0 %v2161
      %2282 = vmatprep.subr.mxu0 %v2278
      %2283 = vmatpush1.msra.mxu0 %v2275
      %2284 = vmatprep.subr.mxu0 0.0
      %2285 = vmatpush1.msra.mxu0 0.0
      %2286 = vmatprep.subr.mxu0 0.0
      %2287 = vmatpush1.msra.mxu0 0.0
      %2288 = vmatprep.subr.mxu0 0.0
      %2289 = vmatpush1.msra.mxu0 0.0
      %2290 = vmatprep.subr.mxu0 0.0
      %2291 = vmatpush1.msra.mxu0 0.0
      %2292 = vmatprep.subr.mxu0 0.0
      %2293 = vmatpush1.msra.mxu0 0.0
      %2294 = vmatprep.subr.mxu0 0.0
      %2295 = vmatpush1.msra.mxu0 0.0
      %2296 = vmatprep.subr.mxu0 0.0
      %2297 = vmatpush1.msra.mxu0 0.0
      %2298 = vmatprep.subr.mxu0 0.0
      %2299 = vmatpush1.msra.mxu0 0.0
      %2300 = vmatprep.subr.mxu0 0.0
      %2301 = vmatpush1.msra.mxu0 0.0
      %2302 = vmatprep.subr.mxu0 0.0
      %2303 = vmatpush1.msra.mxu0 0.0
      %2304 = vmatprep.subr.mxu0 0.0
      %2305 = vmatpush1.msra.mxu0 0.0
      %2306 = vmatprep.subr.mxu0 0.0
      %2307 = vmatpush1.msra.mxu0 0.0
      %2308 = vmatprep.subr.mxu0 0.0
      %2309 = vmatpush1.msra.mxu0 0.0
      %2310 = vmatprep.subr.mxu0 0.0
      %2311 = vmatpush1.msra.mxu0 0.0
      %2312 = vmatprep.subr.mxu0 0.0
      %2313 = vmatpush1.msra.mxu0 0.0
      %2314 = vmatprep.subr.mxu0 0.0
      %2315 = vmatpush1.msra.mxu0 0.0
      %2316 = vmatprep.subr.mxu0 0.0
      %2317 = vmatpush1.msra.mxu0 0.0
      %2318 = vmatprep.subr.mxu0 0.0
      %2319 = vmatpush1.msra.mxu0 0.0
      %2320 = vmatprep.subr.mxu0 0.0
      %2321 = vmatpush1.msra.mxu0 0.0
      %2322 = vmatprep.subr.mxu0 0.0
      %2323 = vmatpush1.msra.mxu0 0.0
      %2324 = vmatprep.subr.mxu0 0.0
      %2325 = vmatpush1.msra.mxu0 0.0
      %2326 = vmatprep.subr.mxu0 0.0
      %2327 = vmatpush1.msra.mxu0 0.0
      %2328 = vmatprep.subr.mxu0 0.0
      %2329 = vmatpush1.msra.mxu0 0.0
      %2330 = vmatprep.subr.mxu0 0.0
      %2331 = vmatpush1.msra.mxu0 0.0
      %2332 = vmatprep.subr.mxu0 0.0
      %2333 = vmatpush1.msra.mxu0 0.0
      %2334 = vmatprep.subr.mxu0 0.0
      %2335 = vmatpush1.msra.mxu0 0.0
      %2336 = vmatprep.subr.mxu0 0.0
      %2337 = vmatpush1.msra.mxu0 0.0
      %2338 = vmatprep.subr.mxu0 0.0
      %2339 = vmatpush1.msra.mxu0 0.0
      %2340 = vmatprep.subr.mxu0 0.0
      %2341 = vmatpush1.msra.mxu0 0.0
      %2342 = vmatprep.subr.mxu0 0.0
      %2343 = vmatpush1.msra.mxu0 0.0
      %2344 = vmatprep.mubr.f32.mxu0 0.0
      %2345 = vmatmul.mubr.f32.gmra.mrb[0].mxu0 %v2272
      %v2346 = vpop.f32.mrb[0].mxu0
      %v2347 = vadd.f32 %v2267, %v2346
      %v2348 = vpop.f32.mrb[0].mxu0
      %v2349 = vadd.f32 %v2269, %v2348
      %2350 = vdwg.mxu0
      %2351 = vrot.lane.b32.xlu0 %v2155, 126
      %v2352 = vpop.permute.xlu0 %2351
      %2353 = vrot.lane.b32.xlu0 %v2156, 126
      %v2354 = vpop.permute.xlu0 %2353
      %2355 = vrot.lane.b32.xlu0 %v2157, 126
      %v2356 = vpop.permute.xlu0 %2355
      %2357 = vrot.lane.b32.xlu0 %v2158, 126
      %v2358 = vpop.permute.xlu0 %2357
      %2359 = vrot.lane.b32.xlu0 %v2159, 126
      %v2360 = vpop.permute.xlu0 %2359
      %2361 = vrot.lane.b32.xlu0 %v2160, 126
      %v2362 = vpop.permute.xlu0 %2361
      %v2363 = vsel %vm640, %v2352, %v2354
      %v2364 = vsel %vm640, %v2354, %v2356
      %v2365 = vsel %vm640, %v2358, %v2360
      %v2366 = vsel %vm640, %v2360, %v2362
      %v2371 = vsel %vm632, %v2363, 0.0
      %v2372 = vsel %vm633, %v2364, 0.0
      %v2373 = vsel %vm632, %v2365, 0.0
      %v2374 = vsel %vm633, %v2366, 0.0
      %s2375 = scalar_lea.vmem %s3, 8
      %v2376 = vld [vmem:[%s2375] sm:$0xf]
      %v2378 = vsel %vm2192, %v2376, 0
      %v2381 = vsel %vm474, %v2373, 0
      %v2384 = vsel %vm474, %v2374, 0
      %2386 = vmatprep.subr.mxu0 %v2372
      %2387 = vmatpush1.msra.mxu0 %v2371
      %2388 = vmatprep.subr.mxu0 %v2384
      %2389 = vmatpush1.msra.mxu0 %v2381
      %2390 = vmatprep.subr.mxu0 0.0
      %2391 = vmatpush1.msra.mxu0 0.0
      %2392 = vmatprep.subr.mxu0 0.0
      %2393 = vmatpush1.msra.mxu0 0.0
      %2394 = vmatprep.subr.mxu0 0.0
      %2395 = vmatpush1.msra.mxu0 0.0
      %2396 = vmatprep.subr.mxu0 0.0
      %2397 = vmatpush1.msra.mxu0 0.0
      %2398 = vmatprep.subr.mxu0 0.0
      %2399 = vmatpush1.msra.mxu0 0.0
      %2400 = vmatprep.subr.mxu0 0.0
      %2401 = vmatpush1.msra.mxu0 0.0
      %2402 = vmatprep.subr.mxu0 0.0
      %2403 = vmatpush1.msra.mxu0 0.0
      %2404 = vmatprep.subr.mxu0 0.0
      %2405 = vmatpush1.msra.mxu0 0.0
      %2406 = vmatprep.subr.mxu0 0.0
      %2407 = vmatpush1.msra.mxu0 0.0
      %2408 = vmatprep.subr.mxu0 0.0
      %2409 = vmatpush1.msra.mxu0 0.0
      %2410 = vmatprep.subr.mxu0 0.0
      %2411 = vmatpush1.msra.mxu0 0.0
      %2412 = vmatprep.subr.mxu0 0.0
      %2413 = vmatpush1.msra.mxu0 0.0
      %2414 = vmatprep.subr.mxu0 0.0
      %2415 = vmatpush1.msra.mxu0 0.0
      %2416 = vmatprep.subr.mxu0 0.0
      %2417 = vmatpush1.msra.mxu0 0.0
      %2418 = vmatprep.subr.mxu0 0.0
      %2419 = vmatpush1.msra.mxu0 0.0
      %2420 = vmatprep.subr.mxu0 0.0
      %2421 = vmatpush1.msra.mxu0 0.0
      %2422 = vmatprep.subr.mxu0 0.0
      %2423 = vmatpush1.msra.mxu0 0.0
      %2424 = vmatprep.subr.mxu0 0.0
      %2425 = vmatpush1.msra.mxu0 0.0
      %2426 = vmatprep.subr.mxu0 0.0
      %2427 = vmatpush1.msra.mxu0 0.0
      %2428 = vmatprep.subr.mxu0 0.0
      %2429 = vmatpush1.msra.mxu0 0.0
      %2430 = vmatprep.subr.mxu0 0.0
      %2431 = vmatpush1.msra.mxu0 0.0
      %2432 = vmatprep.subr.mxu0 0.0
      %2433 = vmatpush1.msra.mxu0 0.0
      %2434 = vmatprep.subr.mxu0 0.0
      %2435 = vmatpush1.msra.mxu0 0.0
      %2436 = vmatprep.subr.mxu0 0.0
      %2437 = vmatpush1.msra.mxu0 0.0
      %2438 = vmatprep.subr.mxu0 0.0
      %2439 = vmatpush1.msra.mxu0 0.0
      %2440 = vmatprep.subr.mxu0 0.0
      %2441 = vmatpush1.msra.mxu0 0.0
      %2442 = vmatprep.subr.mxu0 0.0
      %2443 = vmatpush1.msra.mxu0 0.0
      %2444 = vmatprep.subr.mxu0 0.0
      %2445 = vmatpush1.msra.mxu0 0.0
      %2446 = vmatprep.subr.mxu0 0.0
      %2447 = vmatpush1.msra.mxu0 0.0
      %2448 = vmatprep.subr.mxu0 0.0
      %2449 = vmatpush1.msra.mxu0 0.0
      %2450 = vmatprep.mubr.f32.mxu0 0.0
      %2451 = vmatmul.mubr.f32.gmra.mrb[0].mxu0 %v2378
      %v2452 = vpop.f32.mrb[0].mxu0
      %v2453 = vadd.f32 0.0, %v2452
      %v2454 = vpop.f32.mrb[0].mxu0
      %v2455 = vadd.f32 0.0, %v2454
      %2456 = vdwg.mxu0
      %v2457 = vadd.f32 %v2347, %v2453
      %v2458 = vadd.f32 %v2349, %v2455
      %2459 = vrot.lane.b32.xlu0 %v2155, 112
      %v2460 = vpop.permute.xlu0 %2459
      %2461 = vrot.lane.b32.xlu0 %v2156, 112
      %v2462 = vpop.permute.xlu0 %2461
      %2463 = vrot.lane.b32.xlu0 %v2157, 112
      %v2464 = vpop.permute.xlu0 %2463
      %2465 = vrot.lane.b32.xlu0 %v2158, 112
      %v2466 = vpop.permute.xlu0 %2465
      %2467 = vrot.lane.b32.xlu0 %v2159, 112
      %v2468 = vpop.permute.xlu0 %2467
      %2469 = vrot.lane.b32.xlu0 %v2160, 112
      %v2470 = vpop.permute.xlu0 %2469
      %v2471 = vsel %vm737, %v2460, %v2462
      %v2472 = vsel %vm737, %v2462, %v2464
      %v2473 = vsel %vm737, %v2466, %v2468
      %v2474 = vsel %vm737, %v2468, %v2470
      %v2479 = vsel %vm451, %v2471, 0.0
      %v2480 = vsel %vm452, %v2472, 0.0
      %v2481 = vsel %vm451, %v2473, 0.0
      %v2482 = vsel %vm452, %v2474, 0.0
      %s2483 = scalar_lea.vmem %s3, 12
      %v2484 = vld [vmem:[%s2483] sm:$0xf]
      %v2486 = vsel %vm2192, %v2484, 0
      %v2489 = vsel %vm474, %v2481, 0
      %v2492 = vsel %vm474, %v2482, 0
      %2494 = vmatprep.subr.mxu0 %v2480
      %2495 = vmatpush1.msra.mxu0 %v2479
      %2496 = vmatprep.subr.mxu0 %v2492
      %2497 = vmatpush1.msra.mxu0 %v2489
      %2498 = vmatprep.subr.mxu0 0.0
      %2499 = vmatpush1.msra.mxu0 0.0
      %2500 = vmatprep.subr.mxu0 0.0
      %2501 = vmatpush1.msra.mxu0 0.0
      %2502 = vmatprep.subr.mxu0 0.0
      %2503 = vmatpush1.msra.mxu0 0.0
      %2504 = vmatprep.subr.mxu0 0.0
      %2505 = vmatpush1.msra.mxu0 0.0
      %2506 = vmatprep.subr.mxu0 0.0
      %2507 = vmatpush1.msra.mxu0 0.0
      %2508 = vmatprep.subr.mxu0 0.0
      %2509 = vmatpush1.msra.mxu0 0.0
      %2510 = vmatprep.subr.mxu0 0.0
      %2511 = vmatpush1.msra.mxu0 0.0
      %2512 = vmatprep.subr.mxu0 0.0
      %2513 = vmatpush1.msra.mxu0 0.0
      %2514 = vmatprep.subr.mxu0 0.0
      %2515 = vmatpush1.msra.mxu0 0.0
      %2516 = vmatprep.subr.mxu0 0.0
      %2517 = vmatpush1.msra.mxu0 0.0
      %2518 = vmatprep.subr.mxu0 0.0
      %2519 = vmatpush1.msra.mxu0 0.0
      %2520 = vmatprep.subr.mxu0 0.0
      %2521 = vmatpush1.msra.mxu0 0.0
      %2522 = vmatprep.subr.mxu0 0.0
      %2523 = vmatpush1.msra.mxu0 0.0
      %2524 = vmatprep.subr.mxu0 0.0
      %2525 = vmatpush1.msra.mxu0 0.0
      %2526 = vmatprep.subr.mxu0 0.0
      %2527 = vmatpush1.msra.mxu0 0.0
      %2528 = vmatprep.subr.mxu0 0.0
      %2529 = vmatpush1.msra.mxu0 0.0
      %2530 = vmatprep.subr.mxu0 0.0
      %2531 = vmatpush1.msra.mxu0 0.0
      %2532 = vmatprep.subr.mxu0 0.0
      %2533 = vmatpush1.msra.mxu0 0.0
      %2534 = vmatprep.subr.mxu0 0.0
      %2535 = vmatpush1.msra.mxu0 0.0
      %2536 = vmatprep.subr.mxu0 0.0
      %2537 = vmatpush1.msra.mxu0 0.0
      %2538 = vmatprep.subr.mxu0 0.0
      %2539 = vmatpush1.msra.mxu0 0.0
      %2540 = vmatprep.subr.mxu0 0.0
      %2541 = vmatpush1.msra.mxu0 0.0
      %2542 = vmatprep.subr.mxu0 0.0
      %2543 = vmatpush1.msra.mxu0 0.0
      %2544 = vmatprep.subr.mxu0 0.0
      %2545 = vmatpush1.msra.mxu0 0.0
      %2546 = vmatprep.subr.mxu0 0.0
      %2547 = vmatpush1.msra.mxu0 0.0
      %2548 = vmatprep.subr.mxu0 0.0
      %2549 = vmatpush1.msra.mxu0 0.0
      %2550 = vmatprep.subr.mxu0 0.0
      %2551 = vmatpush1.msra.mxu0 0.0
      %2552 = vmatprep.subr.mxu0 0.0
      %2553 = vmatpush1.msra.mxu0 0.0
      %2554 = vmatprep.subr.mxu0 0.0
      %2555 = vmatpush1.msra.mxu0 0.0
      %2556 = vmatprep.subr.mxu0 0.0
      %2557 = vmatpush1.msra.mxu0 0.0
      %2558 = vmatprep.mubr.f32.mxu0 0.0
      %2559 = vmatmul.mubr.f32.gmra.mrb[0].mxu0 %v2486
      %v2560 = vpop.f32.mrb[0].mxu0
      %v2561 = vadd.f32 0.0, %v2560
      %v2562 = vpop.f32.mrb[0].mxu0
      %v2563 = vadd.f32 0.0, %v2562
      %2564 = vdwg.mxu0
      %v2565 = vadd.f32 %v2457, %v2561
      %v2566 = vadd.f32 %v2458, %v2563
      %s2567 = scalar_lea.vmem %s3, 16
      %v2568 = vld [vmem:[%s2567] sm:$0xf]
      %2569 = vrot.lane.b32.xlu0 %v2155, 111
      %v2570 = vpop.permute.xlu0 %2569
      %2571 = vrot.lane.b32.xlu0 %v2156, 111
      %v2572 = vpop.permute.xlu0 %2571
      %2573 = vrot.lane.b32.xlu0 %v2157, 111
      %v2574 = vpop.permute.xlu0 %2573
      %2575 = vrot.lane.b32.xlu0 %v2158, 111
      %v2576 = vpop.permute.xlu0 %2575
      %2577 = vrot.lane.b32.xlu0 %v2159, 111
      %v2578 = vpop.permute.xlu0 %2577
      %2579 = vrot.lane.b32.xlu0 %v2160, 111
      %v2580 = vpop.permute.xlu0 %2579
      %v2581 = vsel %vm836, %v2570, %v2572
      %v2582 = vsel %vm836, %v2572, %v2574
      %v2583 = vsel %vm836, %v2576, %v2578
      %v2584 = vsel %vm836, %v2578, %v2580
      %v2588 = vsel %vm2192, %v2568, 0
      %v2590 = vsel %vm474, %v2583, 0
      %v2592 = vsel %vm474, %v2584, 0
      %2594 = vmatprep.subr.mxu0 %v2582
      %2595 = vmatpush1.msra.mxu0 %v2581
      %2596 = vmatprep.subr.mxu0 %v2592
      %2597 = vmatpush1.msra.mxu0 %v2590
      %2598 = vmatprep.subr.mxu0 0.0
      %2599 = vmatpush1.msra.mxu0 0.0
      %2600 = vmatprep.subr.mxu0 0.0
      %2601 = vmatpush1.msra.mxu0 0.0
      %2602 = vmatprep.subr.mxu0 0.0
      %2603 = vmatpush1.msra.mxu0 0.0
      %2604 = vmatprep.subr.mxu0 0.0
      %2605 = vmatpush1.msra.mxu0 0.0
      %2606 = vmatprep.subr.mxu0 0.0
      %2607 = vmatpush1.msra.mxu0 0.0
      %2608 = vmatprep.subr.mxu0 0.0
      %2609 = vmatpush1.msra.mxu0 0.0
      %2610 = vmatprep.subr.mxu0 0.0
      %2611 = vmatpush1.msra.mxu0 0.0
      %2612 = vmatprep.subr.mxu0 0.0
      %2613 = vmatpush1.msra.mxu0 0.0
      %2614 = vmatprep.subr.mxu0 0.0
      %2615 = vmatpush1.msra.mxu0 0.0
      %2616 = vmatprep.subr.mxu0 0.0
      %2617 = vmatpush1.msra.mxu0 0.0
      %2618 = vmatprep.subr.mxu0 0.0
      %2619 = vmatpush1.msra.mxu0 0.0
      %2620 = vmatprep.subr.mxu0 0.0
      %2621 = vmatpush1.msra.mxu0 0.0
      %2622 = vmatprep.subr.mxu0 0.0
      %2623 = vmatpush1.msra.mxu0 0.0
      %2624 = vmatprep.subr.mxu0 0.0
      %2625 = vmatpush1.msra.mxu0 0.0
      %2626 = vmatprep.subr.mxu0 0.0
      %2627 = vmatpush1.msra.mxu0 0.0
      %2628 = vmatprep.subr.mxu0 0.0
      %2629 = vmatpush1.msra.mxu0 0.0
      %2630 = vmatprep.subr.mxu0 0.0
      %2631 = vmatpush1.msra.mxu0 0.0
      %2632 = vmatprep.subr.mxu0 0.0
      %2633 = vmatpush1.msra.mxu0 0.0
      %2634 = vmatprep.subr.mxu0 0.0
      %2635 = vmatpush1.msra.mxu0 0.0
      %2636 = vmatprep.subr.mxu0 0.0
      %2637 = vmatpush1.msra.mxu0 0.0
      %2638 = vmatprep.subr.mxu0 0.0
      %2639 = vmatpush1.msra.mxu0 0.0
      %2640 = vmatprep.subr.mxu0 0.0
      %2641 = vmatpush1.msra.mxu0 0.0
      %2642 = vmatprep.subr.mxu0 0.0
      %2643 = vmatpush1.msra.mxu0 0.0
      %2644 = vmatprep.subr.mxu0 0.0
      %2645 = vmatpush1.msra.mxu0 0.0
      %2646 = vmatprep.subr.mxu0 0.0
      %2647 = vmatpush1.msra.mxu0 0.0
      %2648 = vmatprep.subr.mxu0 0.0
      %2649 = vmatpush1.msra.mxu0 0.0
      %2650 = vmatprep.subr.mxu0 0.0
      %2651 = vmatpush1.msra.mxu0 0.0
      %2652 = vmatprep.subr.mxu0 0.0
      %2653 = vmatpush1.msra.mxu0 0.0
      %2654 = vmatprep.subr.mxu0 0.0
      %2655 = vmatpush1.msra.mxu0 0.0
      %2656 = vmatprep.subr.mxu0 0.0
      %2657 = vmatpush1.msra.mxu0 0.0
      %2658 = vmatprep.mubr.f32.mxu0 0.0
      %2659 = vmatmul.mubr.f32.gmra.mrb[0].mxu0 %v2588
      %v2660 = vpop.f32.mrb[0].mxu0
      %v2661 = vadd.f32 0.0, %v2660
      %v2662 = vpop.f32.mrb[0].mxu0
      %v2663 = vadd.f32 0.0, %v2662
      %2664 = vdwg.mxu0
      %v2665 = vadd.f32 %v2565, %v2661
      %v2666 = vadd.f32 %v2566, %v2663
      %2667 = vrot.lane.b32.xlu0 %v2155, 110
      %v2668 = vpop.permute.xlu0 %2667
      %2669 = vrot.lane.b32.xlu0 %v2156, 110
      %v2670 = vpop.permute.xlu0 %2669
      %2671 = vrot.lane.b32.xlu0 %v2157, 110
      %v2672 = vpop.permute.xlu0 %2671
      %2673 = vrot.lane.b32.xlu0 %v2158, 110
      %v2674 = vpop.permute.xlu0 %2673
      %2675 = vrot.lane.b32.xlu0 %v2159, 110
      %v2676 = vpop.permute.xlu0 %2675
      %2677 = vrot.lane.b32.xlu0 %v2160, 110
      %v2678 = vpop.permute.xlu0 %2677
      %v2679 = vsel %vm925, %v2668, %v2670
      %v2680 = vsel %vm925, %v2670, %v2672
      %v2681 = vsel %vm925, %v2674, %v2676
      %v2682 = vsel %vm925, %v2676, %v2678
      %v2687 = vsel %vm632, %v2679, 0.0
      %v2688 = vsel %vm633, %v2680, 0.0
      %v2689 = vsel %vm632, %v2681, 0.0
      %v2690 = vsel %vm633, %v2682, 0.0
      %s2691 = scalar_lea.vmem %s3, 20
      %v2692 = vld [vmem:[%s2691] sm:$0xf]
      %v2694 = vsel %vm2192, %v2692, 0
      %v2697 = vsel %vm474, %v2689, 0
      %v2700 = vsel %vm474, %v2690, 0
      %2702 = vmatprep.subr.mxu0 %v2688
      %2703 = vmatpush1.msra.mxu0 %v2687
      %2704 = vmatprep.subr.mxu0 %v2700
      %2705 = vmatpush1.msra.mxu0 %v2697
      %2706 = vmatprep.subr.mxu0 0.0
      %2707 = vmatpush1.msra.mxu0 0.0
      %2708 = vmatprep.subr.mxu0 0.0
      %2709 = vmatpush1.msra.mxu0 0.0
      %2710 = vmatprep.subr.mxu0 0.0
      %2711 = vmatpush1.msra.mxu0 0.0
      %2712 = vmatprep.subr.mxu0 0.0
      %2713 = vmatpush1.msra.mxu0 0.0
      %2714 = vmatprep.subr.mxu0 0.0
      %2715 = vmatpush1.msra.mxu0 0.0
      %2716 = vmatprep.subr.mxu0 0.0
      %2717 = vmatpush1.msra.mxu0 0.0
      %2718 = vmatprep.subr.mxu0 0.0
      %2719 = vmatpush1.msra.mxu0 0.0
      %2720 = vmatprep.subr.mxu0 0.0
      %2721 = vmatpush1.msra.mxu0 0.0
      %2722 = vmatprep.subr.mxu0 0.0
      %2723 = vmatpush1.msra.mxu0 0.0
      %2724 = vmatprep.subr.mxu0 0.0
      %2725 = vmatpush1.msra.mxu0 0.0
      %2726 = vmatprep.subr.mxu0 0.0
      %2727 = vmatpush1.msra.mxu0 0.0
      %2728 = vmatprep.subr.mxu0 0.0
      %2729 = vmatpush1.msra.mxu0 0.0
      %2730 = vmatprep.subr.mxu0 0.0
      %2731 = vmatpush1.msra.mxu0 0.0
      %2732 = vmatprep.subr.mxu0 0.0
      %2733 = vmatpush1.msra.mxu0 0.0
      %2734 = vmatprep.subr.mxu0 0.0
      %2735 = vmatpush1.msra.mxu0 0.0
      %2736 = vmatprep.subr.mxu0 0.0
      %2737 = vmatpush1.msra.mxu0 0.0
      %2738 = vmatprep.subr.mxu0 0.0
      %2739 = vmatpush1.msra.mxu0 0.0
      %2740 = vmatprep.subr.mxu0 0.0
      %2741 = vmatpush1.msra.mxu0 0.0
      %2742 = vmatprep.subr.mxu0 0.0
      %2743 = vmatpush1.msra.mxu0 0.0
      %2744 = vmatprep.subr.mxu0 0.0
      %2745 = vmatpush1.msra.mxu0 0.0
      %2746 = vmatprep.subr.mxu0 0.0
      %2747 = vmatpush1.msra.mxu0 0.0
      %2748 = vmatprep.subr.mxu0 0.0
      %2749 = vmatpush1.msra.mxu0 0.0
      %2750 = vmatprep.subr.mxu0 0.0
      %2751 = vmatpush1.msra.mxu0 0.0
      %2752 = vmatprep.subr.mxu0 0.0
      %2753 = vmatpush1.msra.mxu0 0.0
      %2754 = vmatprep.subr.mxu0 0.0
      %2755 = vmatpush1.msra.mxu0 0.0
      %2756 = vmatprep.subr.mxu0 0.0
      %2757 = vmatpush1.msra.mxu0 0.0
      %2758 = vmatprep.subr.mxu0 0.0
      %2759 = vmatpush1.msra.mxu0 0.0
      %2760 = vmatprep.subr.mxu0 0.0
      %2761 = vmatpush1.msra.mxu0 0.0
      %2762 = vmatprep.subr.mxu0 0.0
      %2763 = vmatpush1.msra.mxu0 0.0
      %2764 = vmatprep.subr.mxu0 0.0
      %2765 = vmatpush1.msra.mxu0 0.0
      %2766 = vmatprep.mubr.f32.mxu0 0.0
      %2767 = vmatmul.mubr.f32.gmra.mrb[0].mxu0 %v2694
      %v2768 = vpop.f32.mrb[0].mxu0
      %v2769 = vadd.f32 0.0, %v2768
      %v2770 = vpop.f32.mrb[0].mxu0
      %v2771 = vadd.f32 0.0, %v2770
      %2772 = vdwg.mxu0
      %v2773 = vadd.f32 %v2665, %v2769
      %v2774 = vadd.f32 %v2666, %v2771
      %2775 = vrot.lane.b32.xlu0 %v2155, 96
      %v2776 = vpop.permute.xlu0 %2775
      %2777 = vrot.lane.b32.xlu0 %v2156, 96
      %v2778 = vpop.permute.xlu0 %2777
      %2779 = vrot.lane.b32.xlu0 %v2157, 96
      %v2780 = vpop.permute.xlu0 %2779
      %2781 = vrot.lane.b32.xlu0 %v2158, 96
      %v2782 = vpop.permute.xlu0 %2781
      %2783 = vrot.lane.b32.xlu0 %v2159, 96
      %v2784 = vpop.permute.xlu0 %2783
      %2785 = vrot.lane.b32.xlu0 %v2160, 96
      %v2786 = vpop.permute.xlu0 %2785
      %v2787 = vsel %vm1022, %v2776, %v2778
      %v2788 = vsel %vm1022, %v2778, %v2780
      %v2789 = vsel %vm1022, %v2782, %v2784
      %v2790 = vsel %vm1022, %v2784, %v2786
      %v2795 = vsel %vm451, %v2787, 0.0
      %v2796 = vsel %vm452, %v2788, 0.0
      %v2797 = vsel %vm451, %v2789, 0.0
      %v2798 = vsel %vm452, %v2790, 0.0
      %s2799 = scalar_lea.vmem %s3, 24
      %v2800 = vld [vmem:[%s2799] sm:$0xf]
      %v2802 = vsel %vm2192, %v2800, 0
      %v2805 = vsel %vm474, %v2797, 0
      %v2808 = vsel %vm474, %v2798, 0
      %2810 = vmatprep.subr.mxu0 %v2796
      %2811 = vmatpush1.msra.mxu0 %v2795
      %2812 = vmatprep.subr.mxu0 %v2808
      %2813 = vmatpush1.msra.mxu0 %v2805
      %2814 = vmatprep.subr.mxu0 0.0
      %2815 = vmatpush1.msra.mxu0 0.0
      %2816 = vmatprep.subr.mxu0 0.0
      %2817 = vmatpush1.msra.mxu0 0.0
      %2818 = vmatprep.subr.mxu0 0.0
      %2819 = vmatpush1.msra.mxu0 0.0
      %2820 = vmatprep.subr.mxu0 0.0
      %2821 = vmatpush1.msra.mxu0 0.0
      %2822 = vmatprep.subr.mxu0 0.0
      %2823 = vmatpush1.msra.mxu0 0.0
      %2824 = vmatprep.subr.mxu0 0.0
      %2825 = vmatpush1.msra.mxu0 0.0
      %2826 = vmatprep.subr.mxu0 0.0
      %2827 = vmatpush1.msra.mxu0 0.0
      %2828 = vmatprep.subr.mxu0 0.0
      %2829 = vmatpush1.msra.mxu0 0.0
      %2830 = vmatprep.subr.mxu0 0.0
      %2831 = vmatpush1.msra.mxu0 0.0
      %2832 = vmatprep.subr.mxu0 0.0
      %2833 = vmatpush1.msra.mxu0 0.0
      %2834 = vmatprep.subr.mxu0 0.0
      %2835 = vmatpush1.msra.mxu0 0.0
      %2836 = vmatprep.subr.mxu0 0.0
      %2837 = vmatpush1.msra.mxu0 0.0
      %2838 = vmatprep.subr.mxu0 0.0
      %2839 = vmatpush1.msra.mxu0 0.0
      %2840 = vmatprep.subr.mxu0 0.0
      %2841 = vmatpush1.msra.mxu0 0.0
      %2842 = vmatprep.subr.mxu0 0.0
      %2843 = vmatpush1.msra.mxu0 0.0
      %2844 = vmatprep.subr.mxu0 0.0
      %2845 = vmatpush1.msra.mxu0 0.0
      %2846 = vmatprep.subr.mxu0 0.0
      %2847 = vmatpush1.msra.mxu0 0.0
      %2848 = vmatprep.subr.mxu0 0.0
      %2849 = vmatpush1.msra.mxu0 0.0
      %2850 = vmatprep.subr.mxu0 0.0
      %2851 = vmatpush1.msra.mxu0 0.0
      %2852 = vmatprep.subr.mxu0 0.0
      %2853 = vmatpush1.msra.mxu0 0.0
      %2854 = vmatprep.subr.mxu0 0.0
      %2855 = vmatpush1.msra.mxu0 0.0
      %2856 = vmatprep.subr.mxu0 0.0
      %2857 = vmatpush1.msra.mxu0 0.0
      %2858 = vmatprep.subr.mxu0 0.0
      %2859 = vmatpush1.msra.mxu0 0.0
      %2860 = vmatprep.subr.mxu0 0.0
      %2861 = vmatpush1.msra.mxu0 0.0
      %2862 = vmatprep.subr.mxu0 0.0
      %2863 = vmatpush1.msra.mxu0 0.0
      %2864 = vmatprep.subr.mxu0 0.0
      %2865 = vmatpush1.msra.mxu0 0.0
      %2866 = vmatprep.subr.mxu0 0.0
      %2867 = vmatpush1.msra.mxu0 0.0
      %2868 = vmatprep.subr.mxu0 0.0
      %2869 = vmatpush1.msra.mxu0 0.0
      %2870 = vmatprep.subr.mxu0 0.0
      %2871 = vmatpush1.msra.mxu0 0.0
      %2872 = vmatprep.subr.mxu0 0.0
      %2873 = vmatpush1.msra.mxu0 0.0
      %2874 = vmatprep.mubr.f32.mxu0 0.0
      %2875 = vmatmul.mubr.f32.gmra.mrb[0].mxu0 %v2802
      %v2876 = vpop.f32.mrb[0].mxu0
      %v2877 = vadd.f32 0.0, %v2876
      %v2878 = vpop.f32.mrb[0].mxu0
      %v2879 = vadd.f32 0.0, %v2878
      %2880 = vdwg.mxu0
      %v2881 = vadd.f32 %v2773, %v2877
      %v2882 = vadd.f32 %v2774, %v2879
      %s2883 = scalar_lea.vmem %s3, 28
      %v2884 = vld [vmem:[%s2883] sm:$0xf]
      %2885 = vrot.lane.b32.xlu0 %v2155, 95
      %v2886 = vpop.permute.xlu0 %2885
      %2887 = vrot.lane.b32.xlu0 %v2156, 95
      %v2888 = vpop.permute.xlu0 %2887
      %2889 = vrot.lane.b32.xlu0 %v2157, 95
      %v2890 = vpop.permute.xlu0 %2889
      %2891 = vrot.lane.b32.xlu0 %v2158, 95
      %v2892 = vpop.permute.xlu0 %2891
      %2893 = vrot.lane.b32.xlu0 %v2159, 95
      %v2894 = vpop.permute.xlu0 %2893
      %2895 = vrot.lane.b32.xlu0 %v2160, 95
      %v2896 = vpop.permute.xlu0 %2895
      %v2897 = vsel %vm1121, %v2886, %v2888
      %v2898 = vsel %vm1121, %v2888, %v2890
      %v2899 = vsel %vm1121, %v2892, %v2894
      %v2900 = vsel %vm1121, %v2894, %v2896
      %v2904 = vsel %vm2192, %v2884, 0
      %v2906 = vsel %vm474, %v2899, 0
      %v2908 = vsel %vm474, %v2900, 0
      %2910 = vmatprep.subr.mxu0 %v2898
      %2911 = vmatpush1.msra.mxu0 %v2897
      %2912 = vmatprep.subr.mxu0 %v2908
      %2913 = vmatpush1.msra.mxu0 %v2906
      %2914 = vmatprep.subr.mxu0 0.0
      %2915 = vmatpush1.msra.mxu0 0.0
      %2916 = vmatprep.subr.mxu0 0.0
      %2917 = vmatpush1.msra.mxu0 0.0
      %2918 = vmatprep.subr.mxu0 0.0
      %2919 = vmatpush1.msra.mxu0 0.0
      %2920 = vmatprep.subr.mxu0 0.0
      %2921 = vmatpush1.msra.mxu0 0.0
      %2922 = vmatprep.subr.mxu0 0.0
      %2923 = vmatpush1.msra.mxu0 0.0
      %2924 = vmatprep.subr.mxu0 0.0
      %2925 = vmatpush1.msra.mxu0 0.0
      %2926 = vmatprep.subr.mxu0 0.0
      %2927 = vmatpush1.msra.mxu0 0.0
      %2928 = vmatprep.subr.mxu0 0.0
      %2929 = vmatpush1.msra.mxu0 0.0
      %2930 = vmatprep.subr.mxu0 0.0
      %2931 = vmatpush1.msra.mxu0 0.0
      %2932 = vmatprep.subr.mxu0 0.0
      %2933 = vmatpush1.msra.mxu0 0.0
      %2934 = vmatprep.subr.mxu0 0.0
      %2935 = vmatpush1.msra.mxu0 0.0
      %2936 = vmatprep.subr.mxu0 0.0
      %2937 = vmatpush1.msra.mxu0 0.0
      %2938 = vmatprep.subr.mxu0 0.0
      %2939 = vmatpush1.msra.mxu0 0.0
      %2940 = vmatprep.subr.mxu0 0.0
      %2941 = vmatpush1.msra.mxu0 0.0
      %2942 = vmatprep.subr.mxu0 0.0
      %2943 = vmatpush1.msra.mxu0 0.0
      %2944 = vmatprep.subr.mxu0 0.0
      %2945 = vmatpush1.msra.mxu0 0.0
      %2946 = vmatprep.subr.mxu0 0.0
      %2947 = vmatpush1.msra.mxu0 0.0
      %2948 = vmatprep.subr.mxu0 0.0
      %2949 = vmatpush1.msra.mxu0 0.0
      %2950 = vmatprep.subr.mxu0 0.0
      %2951 = vmatpush1.msra.mxu0 0.0
      %2952 = vmatprep.subr.mxu0 0.0
      %2953 = vmatpush1.msra.mxu0 0.0
      %2954 = vmatprep.subr.mxu0 0.0
      %2955 = vmatpush1.msra.mxu0 0.0
      %2956 = vmatprep.subr.mxu0 0.0
      %2957 = vmatpush1.msra.mxu0 0.0
      %2958 = vmatprep.subr.mxu0 0.0
      %2959 = vmatpush1.msra.mxu0 0.0
      %2960 = vmatprep.subr.mxu0 0.0
      %2961 = vmatpush1.msra.mxu0 0.0
      %2962 = vmatprep.subr.mxu0 0.0
      %2963 = vmatpush1.msra.mxu0 0.0
      %2964 = vmatprep.subr.mxu0 0.0
      %2965 = vmatpush1.msra.mxu0 0.0
      %2966 = vmatprep.subr.mxu0 0.0
      %2967 = vmatpush1.msra.mxu0 0.0
      %2968 = vmatprep.subr.mxu0 0.0
      %2969 = vmatpush1.msra.mxu0 0.0
      %2970 = vmatprep.subr.mxu0 0.0
      %2971 = vmatpush1.msra.mxu0 0.0
      %2972 = vmatprep.subr.mxu0 0.0
      %2973 = vmatpush1.msra.mxu0 0.0
      %2974 = vmatprep.mubr.f32.mxu0 0.0
      %2975 = vmatmul.mubr.f32.gmra.mrb[0].mxu0 %v2904
      %v2976 = vpop.f32.mrb[0].mxu0
      %v2977 = vadd.f32 0.0, %v2976
      %v2978 = vpop.f32.mrb[0].mxu0
      %v2979 = vadd.f32 0.0, %v2978
      %2980 = vdwg.mxu0
      %v2981 = vadd.f32 %v2881, %v2977
      %v2982 = vadd.f32 %v2882, %v2979
      %2983 = vrot.lane.b32.xlu0 %v2155, 94
      %v2984 = vpop.permute.xlu0 %2983
      %2985 = vrot.lane.b32.xlu0 %v2156, 94
      %v2986 = vpop.permute.xlu0 %2985
      %2987 = vrot.lane.b32.xlu0 %v2157, 94
      %v2988 = vpop.permute.xlu0 %2987
      %2989 = vrot.lane.b32.xlu0 %v2158, 94
      %v2990 = vpop.permute.xlu0 %2989
      %2991 = vrot.lane.b32.xlu0 %v2159, 94
      %v2992 = vpop.permute.xlu0 %2991
      %2993 = vrot.lane.b32.xlu0 %v2160, 94
      %v2994 = vpop.permute.xlu0 %2993
      %v2995 = vsel %vm1210, %v2984, %v2986
      %v2996 = vsel %vm1210, %v2986, %v2988
      %v2997 = vsel %vm1210, %v2990, %v2992
      %v2998 = vsel %vm1210, %v2992, %v2994
      %v3003 = vsel %vm632, %v2995, 0.0
      %v3004 = vsel %vm633, %v2996, 0.0
      %v3005 = vsel %vm632, %v2997, 0.0
      %v3006 = vsel %vm633, %v2998, 0.0
      %s3007 = scalar_lea.vmem %s3, 32
      %v3008 = vld [vmem:[%s3007] sm:$0xf]
      %v3010 = vsel %vm2192, %v3008, 0
      %v3013 = vsel %vm474, %v3005, 0
      %v3016 = vsel %vm474, %v3006, 0
      %3018 = vmatprep.subr.mxu0 %v3004
      %3019 = vmatpush1.msra.mxu0 %v3003
      %3020 = vmatprep.subr.mxu0 %v3016
      %3021 = vmatpush1.msra.mxu0 %v3013
      %3022 = vmatprep.subr.mxu0 0.0
      %3023 = vmatpush1.msra.mxu0 0.0
      %3024 = vmatprep.subr.mxu0 0.0
      %3025 = vmatpush1.msra.mxu0 0.0
      %3026 = vmatprep.subr.mxu0 0.0
      %3027 = vmatpush1.msra.mxu0 0.0
      %3028 = vmatprep.subr.mxu0 0.0
      %3029 = vmatpush1.msra.mxu0 0.0
      %3030 = vmatprep.subr.mxu0 0.0
      %3031 = vmatpush1.msra.mxu0 0.0
      %3032 = vmatprep.subr.mxu0 0.0
      %3033 = vmatpush1.msra.mxu0 0.0
      %3034 = vmatprep.subr.mxu0 0.0
      %3035 = vmatpush1.msra.mxu0 0.0
      %3036 = vmatprep.subr.mxu0 0.0
      %3037 = vmatpush1.msra.mxu0 0.0
      %3038 = vmatprep.subr.mxu0 0.0
      %3039 = vmatpush1.msra.mxu0 0.0
      %3040 = vmatprep.subr.mxu0 0.0
      %3041 = vmatpush1.msra.mxu0 0.0
      %3042 = vmatprep.subr.mxu0 0.0
      %3043 = vmatpush1.msra.mxu0 0.0
      %3044 = vmatprep.subr.mxu0 0.0
      %3045 = vmatpush1.msra.mxu0 0.0
      %3046 = vmatprep.subr.mxu0 0.0
      %3047 = vmatpush1.msra.mxu0 0.0
      %3048 = vmatprep.subr.mxu0 0.0
      %3049 = vmatpush1.msra.mxu0 0.0
      %3050 = vmatprep.subr.mxu0 0.0
      %3051 = vmatpush1.msra.mxu0 0.0
      %3052 = vmatprep.subr.mxu0 0.0
      %3053 = vmatpush1.msra.mxu0 0.0
      %3054 = vmatprep.subr.mxu0 0.0
      %3055 = vmatpush1.msra.mxu0 0.0
      %3056 = vmatprep.subr.mxu0 0.0
      %3057 = vmatpush1.msra.mxu0 0.0
      %3058 = vmatprep.subr.mxu0 0.0
      %3059 = vmatpush1.msra.mxu0 0.0
      %3060 = vmatprep.subr.mxu0 0.0
      %3061 = vmatpush1.msra.mxu0 0.0
      %3062 = vmatprep.subr.mxu0 0.0
      %3063 = vmatpush1.msra.mxu0 0.0
      %3064 = vmatprep.subr.mxu0 0.0
      %3065 = vmatpush1.msra.mxu0 0.0
      %3066 = vmatprep.subr.mxu0 0.0
      %3067 = vmatpush1.msra.mxu0 0.0
      %3068 = vmatprep.subr.mxu0 0.0
      %3069 = vmatpush1.msra.mxu0 0.0
      %3070 = vmatprep.subr.mxu0 0.0
      %3071 = vmatpush1.msra.mxu0 0.0
      %3072 = vmatprep.subr.mxu0 0.0
      %3073 = vmatpush1.msra.mxu0 0.0
      %3074 = vmatprep.subr.mxu0 0.0
      %3075 = vmatpush1.msra.mxu0 0.0
      %3076 = vmatprep.subr.mxu0 0.0
      %3077 = vmatpush1.msra.mxu0 0.0
      %3078 = vmatprep.subr.mxu0 0.0
      %3079 = vmatpush1.msra.mxu0 0.0
      %3080 = vmatprep.subr.mxu0 0.0
      %3081 = vmatpush1.msra.mxu0 0.0
      %3082 = vmatprep.mubr.f32.mxu0 0.0
      %3083 = vmatmul.mubr.f32.gmra.mrb[0].mxu0 %v3010
      %v3084 = vpop.f32.mrb[0].mxu0
      %v3085 = vadd.f32 0.0, %v3084
      %v3086 = vpop.f32.mrb[0].mxu0
      %v3087 = vadd.f32 0.0, %v3086
      %3088 = vdwg.mxu0
      %v3089 = vadd.f32 %v2981, %v3085
      %v3090 = vadd.f32 %v2982, %v3087
      %v3091 = vld [vmem:[%s8] sm:$0xf]
      %3093 = vset.pattern.permute.xlu0 0
      %3094 = vperm.xlu0 %3093, %v3091
      %v3095 = vpop.permute.xlu0 %3094
      %v3097 = vadd.f32 %v3089, %v3095
      %v3098 = vadd.f32 %v3090, %v3095
      %vm3099 = vcmp.ge.f32.partialorder %v3097, 0.0
      %vm3100 = vcmp.ge.f32.partialorder %v3098, 0.0
      %v3101 = vmul.f32 %v3097, 0.2
      %v3102 = vmul.f32 %v3098, 0.2
      %v3103 = vsel %vm3099, %v3097, %v3101
      %v3104 = vsel %vm3100, %v3098, %v3102
      %v3107 = vrot.slane %v3103, 4
      %v3108 = vrot.slane %v3104, 4
      %3109 = vrot.lane.b32.xlu0 %v3107, 17
      %v3110 = vpop.permute.xlu0 %3109
      %3111 = vrot.lane.b32.xlu0 %v3108, 17
      %v3112 = vpop.permute.xlu0 %3111
      %v3113 = vsel %vm405, %v3110, %v3112
      %3117 = vst.msk [vmem:[#allocation2 + $0x18] sm:$0xf0] %vm1327, %v3110
      %3118 = vst [vmem:[#allocation2 + $0x20] sm:$0xf0] %v3113
      %3119 = vst.msk [vmem:[#allocation2 + $0x28] sm:$0xf0] %vm1330, %v3112
      %v3120 = vld [vmem:[#allocation2] sm:$0xff]
      %v3121 = vld [vmem:[#allocation2 + $0x8] sm:$0xff]
      %v3122 = vld [vmem:[#allocation2 + $0x10] sm:$0xff]
      %v3123 = vld [vmem:[#allocation2 + $0x18] sm:$0xff]
      %v3124 = vld [vmem:[#allocation2 + $0x20] sm:$0xff]
      %v3125 = vld [vmem:[#allocation2 + $0x28] sm:$0xff]
      %v3126 = vsel %vm451, %v3120, 0.0
      %v3127 = vsel %vm452, %v3121, 0.0
      %v3128 = vsel %vm451, %v3123, 0.0
      %v3129 = vsel %vm452, %v3124, 0.0
      %v3130 = vld [vmem:[%s4] sm:$0xf]
      %s3131 = scalar_lea.vmem %s4, 4
      %v3132 = vld [vmem:[%s3131] sm:$0xf]
      %3139 = vrot.lane.b32.xlu0 %v3120, 127
      %v3140 = vpop.permute.xlu0 %3139
      %3141 = vrot.lane.b32.xlu0 %v3121, 127
      %v3142 = vpop.permute.xlu0 %3141
      %3143 = vrot.lane.b32.xlu0 %v3122, 127
      %v3144 = vpop.permute.xlu0 %3143
      %3145 = vrot.lane.b32.xlu0 %v3123, 127
      %v3146 = vpop.permute.xlu0 %3145
      %3147 = vrot.lane.b32.xlu0 %v3124, 127
      %v3148 = vpop.permute.xlu0 %3147
      %3149 = vrot.lane.b32.xlu0 %v3125, 127
      %v3150 = vpop.permute.xlu0 %3149
      %v3151 = vsel %vm467, %v3140, %v3142
      %v3152 = vsel %vm467, %v3142, %v3144
      %v3153 = vsel %vm467, %v3146, %v3148
      %v3154 = vsel %vm467, %v3148, %v3150
      %vm3159 = vcmask 130048
      %v3161 = vsel %vm3159, %v3132, 0
      %3163 = vmatprep.subr.mxu0 %v3152
      %3164 = vmatpush1.msra.mxu0 %v3151
      %3165 = vmatprep.subr.mxu0 %v3154
      %3166 = vmatpush1.msra.mxu0 %v3153
      %3167 = vmatprep.subr.mxu0 0.0
      %3168 = vmatpush1.msra.mxu0 0.0
      %3169 = vmatprep.subr.mxu0 0.0
      %3170 = vmatpush1.msra.mxu0 0.0
      %3171 = vmatprep.subr.mxu0 0.0
      %3172 = vmatpush1.msra.mxu0 0.0
      %3173 = vmatprep.subr.mxu0 0.0
      %3174 = vmatpush1.msra.mxu0 0.0
      %3175 = vmatprep.subr.mxu0 0.0
      %3176 = vmatpush1.msra.mxu0 0.0
      %3177 = vmatprep.subr.mxu0 0.0
      %3178 = vmatpush1.msra.mxu0 0.0
      %3179 = vmatprep.subr.mxu0 0.0
      %3180 = vmatpush1.msra.mxu0 0.0
      %3181 = vmatprep.subr.mxu0 0.0
      %3182 = vmatpush1.msra.mxu0 0.0
      %3183 = vmatprep.subr.mxu0 0.0
      %3184 = vmatpush1.msra.mxu0 0.0
      %3185 = vmatprep.subr.mxu0 0.0
      %3186 = vmatpush1.msra.mxu0 0.0
      %3187 = vmatprep.subr.mxu0 0.0
      %3188 = vmatpush1.msra.mxu0 0.0
      %3189 = vmatprep.subr.mxu0 0.0
      %3190 = vmatpush1.msra.mxu0 0.0
      %3191 = vmatprep.subr.mxu0 0.0
      %3192 = vmatpush1.msra.mxu0 0.0
      %3193 = vmatprep.subr.mxu0 0.0
      %3194 = vmatpush1.msra.mxu0 0.0
      %3195 = vmatprep.subr.mxu0 0.0
      %3196 = vmatpush1.msra.mxu0 0.0
      %3197 = vmatprep.subr.mxu0 0.0
      %3198 = vmatpush1.msra.mxu0 0.0
      %3199 = vmatprep.subr.mxu0 0.0
      %3200 = vmatpush1.msra.mxu0 0.0
      %3201 = vmatprep.subr.mxu0 0.0
      %3202 = vmatpush1.msra.mxu0 0.0
      %3203 = vmatprep.subr.mxu0 0.0
      %3204 = vmatpush1.msra.mxu0 0.0
      %3205 = vmatprep.subr.mxu0 0.0
      %3206 = vmatpush1.msra.mxu0 0.0
      %3207 = vmatprep.subr.mxu0 0.0
      %3208 = vmatpush1.msra.mxu0 0.0
      %3209 = vmatprep.subr.mxu0 0.0
      %3210 = vmatpush1.msra.mxu0 0.0
      %3211 = vmatprep.subr.mxu0 0.0
      %3212 = vmatpush1.msra.mxu0 0.0
      %3213 = vmatprep.subr.mxu0 0.0
      %3214 = vmatpush1.msra.mxu0 0.0
      %3215 = vmatprep.subr.mxu0 0.0
      %3216 = vmatpush1.msra.mxu0 0.0
      %3217 = vmatprep.subr.mxu0 0.0
      %3218 = vmatpush1.msra.mxu0 0.0
      %3219 = vmatprep.subr.mxu0 0.0
      %3220 = vmatpush1.msra.mxu0 0.0
      %3221 = vmatprep.subr.mxu0 0.0
      %3222 = vmatpush1.msra.mxu0 0.0
      %3223 = vmatprep.subr.mxu0 0.0
      %3224 = vmatpush1.msra.mxu0 0.0
      %3225 = vmatprep.subr.mxu0 0.0
      %3226 = vmatpush1.msra.mxu0 0.0
      %3227 = vmatprep.mubr.f32.mxu0 0.0
      %3228 = vmatmul.mubr.f32.gmra.mrb[0].mxu0 %v3161
      %v3229 = vpop.f32.mrb[0].mxu0
      %v3230 = vadd.f32 0.0, %v3229
      %v3231 = vpop.f32.mrb[0].mxu0
      %v3232 = vadd.f32 0.0, %v3231
      %3233 = vdwg.mxu0
      %v3235 = vsel %vm3159, %v3130, 0
      %3237 = vmatprep.subr.mxu0 %v3127
      %3238 = vmatpush1.msra.mxu0 %v3126
      %3239 = vmatprep.subr.mxu0 %v3129
      %3240 = vmatpush1.msra.mxu0 %v3128
      %3241 = vmatprep.subr.mxu0 0.0
      %3242 = vmatpush1.msra.mxu0 0.0
      %3243 = vmatprep.subr.mxu0 0.0
      %3244 = vmatpush1.msra.mxu0 0.0
      %3245 = vmatprep.subr.mxu0 0.0
      %3246 = vmatpush1.msra.mxu0 0.0
      %3247 = vmatprep.subr.mxu0 0.0
      %3248 = vmatpush1.msra.mxu0 0.0
      %3249 = vmatprep.subr.mxu0 0.0
      %3250 = vmatpush1.msra.mxu0 0.0
      %3251 = vmatprep.subr.mxu0 0.0
      %3252 = vmatpush1.msra.mxu0 0.0
      %3253 = vmatprep.subr.mxu0 0.0
      %3254 = vmatpush1.msra.mxu0 0.0
      %3255 = vmatprep.subr.mxu0 0.0
      %3256 = vmatpush1.msra.mxu0 0.0
      %3257 = vmatprep.subr.mxu0 0.0
      %3258 = vmatpush1.msra.mxu0 0.0
      %3259 = vmatprep.subr.mxu0 0.0
      %3260 = vmatpush1.msra.mxu0 0.0
      %3261 = vmatprep.subr.mxu0 0.0
      %3262 = vmatpush1.msra.mxu0 0.0
      %3263 = vmatprep.subr.mxu0 0.0
      %3264 = vmatpush1.msra.mxu0 0.0
      %3265 = vmatprep.subr.mxu0 0.0
      %3266 = vmatpush1.msra.mxu0 0.0
      %3267 = vmatprep.subr.mxu0 0.0
      %3268 = vmatpush1.msra.mxu0 0.0
      %3269 = vmatprep.subr.mxu0 0.0
      %3270 = vmatpush1.msra.mxu0 0.0
      %3271 = vmatprep.subr.mxu0 0.0
      %3272 = vmatpush1.msra.mxu0 0.0
      %3273 = vmatprep.subr.mxu0 0.0
      %3274 = vmatpush1.msra.mxu0 0.0
      %3275 = vmatprep.subr.mxu0 0.0
      %3276 = vmatpush1.msra.mxu0 0.0
      %3277 = vmatprep.subr.mxu0 0.0
      %3278 = vmatpush1.msra.mxu0 0.0
      %3279 = vmatprep.subr.mxu0 0.0
      %3280 = vmatpush1.msra.mxu0 0.0
      %3281 = vmatprep.subr.mxu0 0.0
      %3282 = vmatpush1.msra.mxu0 0.0
      %3283 = vmatprep.subr.mxu0 0.0
      %3284 = vmatpush1.msra.mxu0 0.0
      %3285 = vmatprep.subr.mxu0 0.0
      %3286 = vmatpush1.msra.mxu0 0.0
      %3287 = vmatprep.subr.mxu0 0.0
      %3288 = vmatpush1.msra.mxu0 0.0
      %3289 = vmatprep.subr.mxu0 0.0
      %3290 = vmatpush1.msra.mxu0 0.0
      %3291 = vmatprep.subr.mxu0 0.0
      %3292 = vmatpush1.msra.mxu0 0.0
      %3293 = vmatprep.subr.mxu0 0.0
      %3294 = vmatpush1.msra.mxu0 0.0
      %3295 = vmatprep.subr.mxu0 0.0
      %3296 = vmatpush1.msra.mxu0 0.0
      %3297 = vmatprep.subr.mxu0 0.0
      %3298 = vmatpush1.msra.mxu0 0.0
      %3299 = vmatprep.subr.mxu0 0.0
      %3300 = vmatpush1.msra.mxu0 0.0
      %3301 = vmatprep.mubr.f32.mxu0 0.0
      %3302 = vmatmul.mubr.f32.gmra.mrb[0].mxu0 %v3235
      %v3303 = vpop.f32.mrb[0].mxu0
      %v3304 = vadd.f32 %v3230, %v3303
      %v3305 = vpop.f32.mrb[0].mxu0
      %v3306 = vadd.f32 %v3232, %v3305
      %3307 = vdwg.mxu0
      %3308 = vrot.lane.b32.xlu0 %v3120, 126
      %v3309 = vpop.permute.xlu0 %3308
      %3310 = vrot.lane.b32.xlu0 %v3121, 126
      %v3311 = vpop.permute.xlu0 %3310
      %3312 = vrot.lane.b32.xlu0 %v3122, 126
      %v3313 = vpop.permute.xlu0 %3312
      %3314 = vrot.lane.b32.xlu0 %v3123, 126
      %v3315 = vpop.permute.xlu0 %3314
      %3316 = vrot.lane.b32.xlu0 %v3124, 126
      %v3317 = vpop.permute.xlu0 %3316
      %3318 = vrot.lane.b32.xlu0 %v3125, 126
      %v3319 = vpop.permute.xlu0 %3318
      %v3320 = vsel %vm640, %v3309, %v3311
      %v3321 = vsel %vm640, %v3311, %v3313
      %v3322 = vsel %vm640, %v3315, %v3317
      %v3323 = vsel %vm640, %v3317, %v3319
      %v3328 = vsel %vm632, %v3320, 0.0
      %v3329 = vsel %vm633, %v3321, 0.0
      %v3330 = vsel %vm632, %v3322, 0.0
      %v3331 = vsel %vm633, %v3323, 0.0
      %s3332 = scalar_lea.vmem %s4, 8
      %v3333 = vld [vmem:[%s3332] sm:$0xf]
      %v3335 = vsel %vm3159, %v3333, 0
      %3337 = vmatprep.subr.mxu0 %v3329
      %3338 = vmatpush1.msra.mxu0 %v3328
      %3339 = vmatprep.subr.mxu0 %v3331
      %3340 = vmatpush1.msra.mxu0 %v3330
      %3341 = vmatprep.subr.mxu0 0.0
      %3342 = vmatpush1.msra.mxu0 0.0
      %3343 = vmatprep.subr.mxu0 0.0
      %3344 = vmatpush1.msra.mxu0 0.0
      %3345 = vmatprep.subr.mxu0 0.0
      %3346 = vmatpush1.msra.mxu0 0.0
      %3347 = vmatprep.subr.mxu0 0.0
      %3348 = vmatpush1.msra.mxu0 0.0
      %3349 = vmatprep.subr.mxu0 0.0
      %3350 = vmatpush1.msra.mxu0 0.0
      %3351 = vmatprep.subr.mxu0 0.0
      %3352 = vmatpush1.msra.mxu0 0.0
      %3353 = vmatprep.subr.mxu0 0.0
      %3354 = vmatpush1.msra.mxu0 0.0
      %3355 = vmatprep.subr.mxu0 0.0
      %3356 = vmatpush1.msra.mxu0 0.0
      %3357 = vmatprep.subr.mxu0 0.0
      %3358 = vmatpush1.msra.mxu0 0.0
      %3359 = vmatprep.subr.mxu0 0.0
      %3360 = vmatpush1.msra.mxu0 0.0
      %3361 = vmatprep.subr.mxu0 0.0
      %3362 = vmatpush1.msra.mxu0 0.0
      %3363 = vmatprep.subr.mxu0 0.0
      %3364 = vmatpush1.msra.mxu0 0.0
      %3365 = vmatprep.subr.mxu0 0.0
      %3366 = vmatpush1.msra.mxu0 0.0
      %3367 = vmatprep.subr.mxu0 0.0
      %3368 = vmatpush1.msra.mxu0 0.0
      %3369 = vmatprep.subr.mxu0 0.0
      %3370 = vmatpush1.msra.mxu0 0.0
      %3371 = vmatprep.subr.mxu0 0.0
      %3372 = vmatpush1.msra.mxu0 0.0
      %3373 = vmatprep.subr.mxu0 0.0
      %3374 = vmatpush1.msra.mxu0 0.0
      %3375 = vmatprep.subr.mxu0 0.0
      %3376 = vmatpush1.msra.mxu0 0.0
      %3377 = vmatprep.subr.mxu0 0.0
      %3378 = vmatpush1.msra.mxu0 0.0
      %3379 = vmatprep.subr.mxu0 0.0
      %3380 = vmatpush1.msra.mxu0 0.0
      %3381 = vmatprep.subr.mxu0 0.0
      %3382 = vmatpush1.msra.mxu0 0.0
      %3383 = vmatprep.subr.mxu0 0.0
      %3384 = vmatpush1.msra.mxu0 0.0
      %3385 = vmatprep.subr.mxu0 0.0
      %3386 = vmatpush1.msra.mxu0 0.0
      %3387 = vmatprep.subr.mxu0 0.0
      %3388 = vmatpush1.msra.mxu0 0.0
      %3389 = vmatprep.subr.mxu0 0.0
      %3390 = vmatpush1.msra.mxu0 0.0
      %3391 = vmatprep.subr.mxu0 0.0
      %3392 = vmatpush1.msra.mxu0 0.0
      %3393 = vmatprep.subr.mxu0 0.0
      %3394 = vmatpush1.msra.mxu0 0.0
      %3395 = vmatprep.subr.mxu0 0.0
      %3396 = vmatpush1.msra.mxu0 0.0
      %3397 = vmatprep.subr.mxu0 0.0
      %3398 = vmatpush1.msra.mxu0 0.0
      %3399 = vmatprep.subr.mxu0 0.0
      %3400 = vmatpush1.msra.mxu0 0.0
      %3401 = vmatprep.mubr.f32.mxu0 0.0
      %3402 = vmatmul.mubr.f32.gmra.mrb[0].mxu0 %v3335
      %v3403 = vpop.f32.mrb[0].mxu0
      %v3404 = vadd.f32 0.0, %v3403
      %v3405 = vpop.f32.mrb[0].mxu0
      %v3406 = vadd.f32 0.0, %v3405
      %3407 = vdwg.mxu0
      %v3408 = vadd.f32 %v3304, %v3404
      %v3409 = vadd.f32 %v3306, %v3406
      %3410 = vrot.lane.b32.xlu0 %v3120, 112
      %v3411 = vpop.permute.xlu0 %3410
      %3412 = vrot.lane.b32.xlu0 %v3121, 112
      %v3413 = vpop.permute.xlu0 %3412
      %3414 = vrot.lane.b32.xlu0 %v3122, 112
      %v3415 = vpop.permute.xlu0 %3414
      %3416 = vrot.lane.b32.xlu0 %v3123, 112
      %v3417 = vpop.permute.xlu0 %3416
      %3418 = vrot.lane.b32.xlu0 %v3124, 112
      %v3419 = vpop.permute.xlu0 %3418
      %3420 = vrot.lane.b32.xlu0 %v3125, 112
      %v3421 = vpop.permute.xlu0 %3420
      %v3422 = vsel %vm737, %v3411, %v3413
      %v3423 = vsel %vm737, %v3413, %v3415
      %v3424 = vsel %vm737, %v3417, %v3419
      %v3425 = vsel %vm737, %v3419, %v3421
      %v3430 = vsel %vm451, %v3422, 0.0
      %v3431 = vsel %vm452, %v3423, 0.0
      %v3432 = vsel %vm451, %v3424, 0.0
      %v3433 = vsel %vm452, %v3425, 0.0
      %s3434 = scalar_lea.vmem %s4, 12
      %v3435 = vld [vmem:[%s3434] sm:$0xf]
      %v3437 = vsel %vm3159, %v3435, 0
      %3439 = vmatprep.subr.mxu0 %v3431
      %3440 = vmatpush1.msra.mxu0 %v3430
      %3441 = vmatprep.subr.mxu0 %v3433
      %3442 = vmatpush1.msra.mxu0 %v3432
      %3443 = vmatprep.subr.mxu0 0.0
      %3444 = vmatpush1.msra.mxu0 0.0
      %3445 = vmatprep.subr.mxu0 0.0
      %3446 = vmatpush1.msra.mxu0 0.0
      %3447 = vmatprep.subr.mxu0 0.0
      %3448 = vmatpush1.msra.mxu0 0.0
      %3449 = vmatprep.subr.mxu0 0.0
      %3450 = vmatpush1.msra.mxu0 0.0
      %3451 = vmatprep.subr.mxu0 0.0
      %3452 = vmatpush1.msra.mxu0 0.0
      %3453 = vmatprep.subr.mxu0 0.0
      %3454 = vmatpush1.msra.mxu0 0.0
      %3455 = vmatprep.subr.mxu0 0.0
      %3456 = vmatpush1.msra.mxu0 0.0
      %3457 = vmatprep.subr.mxu0 0.0
      %3458 = vmatpush1.msra.mxu0 0.0
      %3459 = vmatprep.subr.mxu0 0.0
      %3460 = vmatpush1.msra.mxu0 0.0
      %3461 = vmatprep.subr.mxu0 0.0
      %3462 = vmatpush1.msra.mxu0 0.0
      %3463 = vmatprep.subr.mxu0 0.0
      %3464 = vmatpush1.msra.mxu0 0.0
      %3465 = vmatprep.subr.mxu0 0.0
      %3466 = vmatpush1.msra.mxu0 0.0
      %3467 = vmatprep.subr.mxu0 0.0
      %3468 = vmatpush1.msra.mxu0 0.0
      %3469 = vmatprep.subr.mxu0 0.0
      %3470 = vmatpush1.msra.mxu0 0.0
      %3471 = vmatprep.subr.mxu0 0.0
      %3472 = vmatpush1.msra.mxu0 0.0
      %3473 = vmatprep.subr.mxu0 0.0
      %3474 = vmatpush1.msra.mxu0 0.0
      %3475 = vmatprep.subr.mxu0 0.0
      %3476 = vmatpush1.msra.mxu0 0.0
      %3477 = vmatprep.subr.mxu0 0.0
      %3478 = vmatpush1.msra.mxu0 0.0
      %3479 = vmatprep.subr.mxu0 0.0
      %3480 = vmatpush1.msra.mxu0 0.0
      %3481 = vmatprep.subr.mxu0 0.0
      %3482 = vmatpush1.msra.mxu0 0.0
      %3483 = vmatprep.subr.mxu0 0.0
      %3484 = vmatpush1.msra.mxu0 0.0
      %3485 = vmatprep.subr.mxu0 0.0
      %3486 = vmatpush1.msra.mxu0 0.0
      %3487 = vmatprep.subr.mxu0 0.0
      %3488 = vmatpush1.msra.mxu0 0.0
      %3489 = vmatprep.subr.mxu0 0.0
      %3490 = vmatpush1.msra.mxu0 0.0
      %3491 = vmatprep.subr.mxu0 0.0
      %3492 = vmatpush1.msra.mxu0 0.0
      %3493 = vmatprep.subr.mxu0 0.0
      %3494 = vmatpush1.msra.mxu0 0.0
      %3495 = vmatprep.subr.mxu0 0.0
      %3496 = vmatpush1.msra.mxu0 0.0
      %3497 = vmatprep.subr.mxu0 0.0
      %3498 = vmatpush1.msra.mxu0 0.0
      %3499 = vmatprep.subr.mxu0 0.0
      %3500 = vmatpush1.msra.mxu0 0.0
      %3501 = vmatprep.subr.mxu0 0.0
      %3502 = vmatpush1.msra.mxu0 0.0
      %3503 = vmatprep.mubr.f32.mxu0 0.0
      %3504 = vmatmul.mubr.f32.gmra.mrb[0].mxu0 %v3437
      %v3505 = vpop.f32.mrb[0].mxu0
      %v3506 = vadd.f32 0.0, %v3505
      %v3507 = vpop.f32.mrb[0].mxu0
      %v3508 = vadd.f32 0.0, %v3507
      %3509 = vdwg.mxu0
      %v3510 = vadd.f32 %v3408, %v3506
      %v3511 = vadd.f32 %v3409, %v3508
      %s3512 = scalar_lea.vmem %s4, 16
      %v3513 = vld [vmem:[%s3512] sm:$0xf]
      %3514 = vrot.lane.b32.xlu0 %v3120, 111
      %v3515 = vpop.permute.xlu0 %3514
      %3516 = vrot.lane.b32.xlu0 %v3121, 111
      %v3517 = vpop.permute.xlu0 %3516
      %3518 = vrot.lane.b32.xlu0 %v3122, 111
      %v3519 = vpop.permute.xlu0 %3518
      %3520 = vrot.lane.b32.xlu0 %v3123, 111
      %v3521 = vpop.permute.xlu0 %3520
      %3522 = vrot.lane.b32.xlu0 %v3124, 111
      %v3523 = vpop.permute.xlu0 %3522
      %3524 = vrot.lane.b32.xlu0 %v3125, 111
      %v3525 = vpop.permute.xlu0 %3524
      %v3526 = vsel %vm836, %v3515, %v3517
      %v3527 = vsel %vm836, %v3517, %v3519
      %v3528 = vsel %vm836, %v3521, %v3523
      %v3529 = vsel %vm836, %v3523, %v3525
      %v3535 = vsel %vm3159, %v3513, 0
      %3537 = vmatprep.subr.mxu0 %v3527
      %3538 = vmatpush1.msra.mxu0 %v3526
      %3539 = vmatprep.subr.mxu0 %v3529
      %3540 = vmatpush1.msra.mxu0 %v3528
      %3541 = vmatprep.subr.mxu0 0.0
      %3542 = vmatpush1.msra.mxu0 0.0
      %3543 = vmatprep.subr.mxu0 0.0
      %3544 = vmatpush1.msra.mxu0 0.0
      %3545 = vmatprep.subr.mxu0 0.0
      %3546 = vmatpush1.msra.mxu0 0.0
      %3547 = vmatprep.subr.mxu0 0.0
      %3548 = vmatpush1.msra.mxu0 0.0
      %3549 = vmatprep.subr.mxu0 0.0
      %3550 = vmatpush1.msra.mxu0 0.0
      %3551 = vmatprep.subr.mxu0 0.0
      %3552 = vmatpush1.msra.mxu0 0.0
      %3553 = vmatprep.subr.mxu0 0.0
      %3554 = vmatpush1.msra.mxu0 0.0
      %3555 = vmatprep.subr.mxu0 0.0
      %3556 = vmatpush1.msra.mxu0 0.0
      %3557 = vmatprep.subr.mxu0 0.0
      %3558 = vmatpush1.msra.mxu0 0.0
      %3559 = vmatprep.subr.mxu0 0.0
      %3560 = vmatpush1.msra.mxu0 0.0
      %3561 = vmatprep.subr.mxu0 0.0
      %3562 = vmatpush1.msra.mxu0 0.0
      %3563 = vmatprep.subr.mxu0 0.0
      %3564 = vmatpush1.msra.mxu0 0.0
      %3565 = vmatprep.subr.mxu0 0.0
      %3566 = vmatpush1.msra.mxu0 0.0
      %3567 = vmatprep.subr.mxu0 0.0
      %3568 = vmatpush1.msra.mxu0 0.0
      %3569 = vmatprep.subr.mxu0 0.0
      %3570 = vmatpush1.msra.mxu0 0.0
      %3571 = vmatprep.subr.mxu0 0.0
      %3572 = vmatpush1.msra.mxu0 0.0
      %3573 = vmatprep.subr.mxu0 0.0
      %3574 = vmatpush1.msra.mxu0 0.0
      %3575 = vmatprep.subr.mxu0 0.0
      %3576 = vmatpush1.msra.mxu0 0.0
      %3577 = vmatprep.subr.mxu0 0.0
      %3578 = vmatpush1.msra.mxu0 0.0
      %3579 = vmatprep.subr.mxu0 0.0
      %3580 = vmatpush1.msra.mxu0 0.0
      %3581 = vmatprep.subr.mxu0 0.0
      %3582 = vmatpush1.msra.mxu0 0.0
      %3583 = vmatprep.subr.mxu0 0.0
      %3584 = vmatpush1.msra.mxu0 0.0
      %3585 = vmatprep.subr.mxu0 0.0
      %3586 = vmatpush1.msra.mxu0 0.0
      %3587 = vmatprep.subr.mxu0 0.0
      %3588 = vmatpush1.msra.mxu0 0.0
      %3589 = vmatprep.subr.mxu0 0.0
      %3590 = vmatpush1.msra.mxu0 0.0
      %3591 = vmatprep.subr.mxu0 0.0
      %3592 = vmatpush1.msra.mxu0 0.0
      %3593 = vmatprep.subr.mxu0 0.0
      %3594 = vmatpush1.msra.mxu0 0.0
      %3595 = vmatprep.subr.mxu0 0.0
      %3596 = vmatpush1.msra.mxu0 0.0
      %3597 = vmatprep.subr.mxu0 0.0
      %3598 = vmatpush1.msra.mxu0 0.0
      %3599 = vmatprep.subr.mxu0 0.0
      %3600 = vmatpush1.msra.mxu0 0.0
      %3601 = vmatprep.mubr.f32.mxu0 0.0
      %3602 = vmatmul.mubr.f32.gmra.mrb[0].mxu0 %v3535
      %v3603 = vpop.f32.mrb[0].mxu0
      %v3604 = vadd.f32 0.0, %v3603
      %v3605 = vpop.f32.mrb[0].mxu0
      %v3606 = vadd.f32 0.0, %v3605
      %3607 = vdwg.mxu0
      %v3608 = vadd.f32 %v3510, %v3604
      %v3609 = vadd.f32 %v3511, %v3606
      %3610 = vrot.lane.b32.xlu0 %v3120, 110
      %v3611 = vpop.permute.xlu0 %3610
      %3612 = vrot.lane.b32.xlu0 %v3121, 110
      %v3613 = vpop.permute.xlu0 %3612
      %3614 = vrot.lane.b32.xlu0 %v3122, 110
      %v3615 = vpop.permute.xlu0 %3614
      %3616 = vrot.lane.b32.xlu0 %v3123, 110
      %v3617 = vpop.permute.xlu0 %3616
      %3618 = vrot.lane.b32.xlu0 %v3124, 110
      %v3619 = vpop.permute.xlu0 %3618
      %3620 = vrot.lane.b32.xlu0 %v3125, 110
      %v3621 = vpop.permute.xlu0 %3620
      %v3622 = vsel %vm925, %v3611, %v3613
      %v3623 = vsel %vm925, %v3613, %v3615
      %v3624 = vsel %vm925, %v3617, %v3619
      %v3625 = vsel %vm925, %v3619, %v3621
      %v3630 = vsel %vm632, %v3622, 0.0
      %v3631 = vsel %vm633, %v3623, 0.0
      %v3632 = vsel %vm632, %v3624, 0.0
      %v3633 = vsel %vm633, %v3625, 0.0
      %s3634 = scalar_lea.vmem %s4, 20
      %v3635 = vld [vmem:[%s3634] sm:$0xf]
      %v3637 = vsel %vm3159, %v3635, 0
      %3639 = vmatprep.subr.mxu0 %v3631
      %3640 = vmatpush1.msra.mxu0 %v3630
      %3641 = vmatprep.subr.mxu0 %v3633
      %3642 = vmatpush1.msra.mxu0 %v3632
      %3643 = vmatprep.subr.mxu0 0.0
      %3644 = vmatpush1.msra.mxu0 0.0
      %3645 = vmatprep.subr.mxu0 0.0
      %3646 = vmatpush1.msra.mxu0 0.0
      %3647 = vmatprep.subr.mxu0 0.0
      %3648 = vmatpush1.msra.mxu0 0.0
      %3649 = vmatprep.subr.mxu0 0.0
      %3650 = vmatpush1.msra.mxu0 0.0
      %3651 = vmatprep.subr.mxu0 0.0
      %3652 = vmatpush1.msra.mxu0 0.0
      %3653 = vmatprep.subr.mxu0 0.0
      %3654 = vmatpush1.msra.mxu0 0.0
      %3655 = vmatprep.subr.mxu0 0.0
      %3656 = vmatpush1.msra.mxu0 0.0
      %3657 = vmatprep.subr.mxu0 0.0
      %3658 = vmatpush1.msra.mxu0 0.0
      %3659 = vmatprep.subr.mxu0 0.0
      %3660 = vmatpush1.msra.mxu0 0.0
      %3661 = vmatprep.subr.mxu0 0.0
      %3662 = vmatpush1.msra.mxu0 0.0
      %3663 = vmatprep.subr.mxu0 0.0
      %3664 = vmatpush1.msra.mxu0 0.0
      %3665 = vmatprep.subr.mxu0 0.0
      %3666 = vmatpush1.msra.mxu0 0.0
      %3667 = vmatprep.subr.mxu0 0.0
      %3668 = vmatpush1.msra.mxu0 0.0
      %3669 = vmatprep.subr.mxu0 0.0
      %3670 = vmatpush1.msra.mxu0 0.0
      %3671 = vmatprep.subr.mxu0 0.0
      %3672 = vmatpush1.msra.mxu0 0.0
      %3673 = vmatprep.subr.mxu0 0.0
      %3674 = vmatpush1.msra.mxu0 0.0
      %3675 = vmatprep.subr.mxu0 0.0
      %3676 = vmatpush1.msra.mxu0 0.0
      %3677 = vmatprep.subr.mxu0 0.0
      %3678 = vmatpush1.msra.mxu0 0.0
      %3679 = vmatprep.subr.mxu0 0.0
      %3680 = vmatpush1.msra.mxu0 0.0
      %3681 = vmatprep.subr.mxu0 0.0
      %3682 = vmatpush1.msra.mxu0 0.0
      %3683 = vmatprep.subr.mxu0 0.0
      %3684 = vmatpush1.msra.mxu0 0.0
      %3685 = vmatprep.subr.mxu0 0.0
      %3686 = vmatpush1.msra.mxu0 0.0
      %3687 = vmatprep.subr.mxu0 0.0
      %3688 = vmatpush1.msra.mxu0 0.0
      %3689 = vmatprep.subr.mxu0 0.0
      %3690 = vmatpush1.msra.mxu0 0.0
      %3691 = vmatprep.subr.mxu0 0.0
      %3692 = vmatpush1.msra.mxu0 0.0
      %3693 = vmatprep.subr.mxu0 0.0
      %3694 = vmatpush1.msra.mxu0 0.0
      %3695 = vmatprep.subr.mxu0 0.0
      %3696 = vmatpush1.msra.mxu0 0.0
      %3697 = vmatprep.subr.mxu0 0.0
      %3698 = vmatpush1.msra.mxu0 0.0
      %3699 = vmatprep.subr.mxu0 0.0
      %3700 = vmatpush1.msra.mxu0 0.0
      %3701 = vmatprep.subr.mxu0 0.0
      %3702 = vmatpush1.msra.mxu0 0.0
      %3703 = vmatprep.mubr.f32.mxu0 0.0
      %3704 = vmatmul.mubr.f32.gmra.mrb[0].mxu0 %v3637
      %v3705 = vpop.f32.mrb[0].mxu0
      %v3706 = vadd.f32 0.0, %v3705
      %v3707 = vpop.f32.mrb[0].mxu0
      %v3708 = vadd.f32 0.0, %v3707
      %3709 = vdwg.mxu0
      %v3710 = vadd.f32 %v3608, %v3706
      %v3711 = vadd.f32 %v3609, %v3708
      %3712 = vrot.lane.b32.xlu0 %v3120, 96
      %v3713 = vpop.permute.xlu0 %3712
      %3714 = vrot.lane.b32.xlu0 %v3121, 96
      %v3715 = vpop.permute.xlu0 %3714
      %3716 = vrot.lane.b32.xlu0 %v3122, 96
      %v3717 = vpop.permute.xlu0 %3716
      %3718 = vrot.lane.b32.xlu0 %v3123, 96
      %v3719 = vpop.permute.xlu0 %3718
      %3720 = vrot.lane.b32.xlu0 %v3124, 96
      %v3721 = vpop.permute.xlu0 %3720
      %3722 = vrot.lane.b32.xlu0 %v3125, 96
      %v3723 = vpop.permute.xlu0 %3722
      %v3724 = vsel %vm1022, %v3713, %v3715
      %v3725 = vsel %vm1022, %v3715, %v3717
      %v3726 = vsel %vm1022, %v3719, %v3721
      %v3727 = vsel %vm1022, %v3721, %v3723
      %v3732 = vsel %vm451, %v3724, 0.0
      %v3733 = vsel %vm452, %v3725, 0.0
      %v3734 = vsel %vm451, %v3726, 0.0
      %v3735 = vsel %vm452, %v3727, 0.0
      %s3736 = scalar_lea.vmem %s4, 24
      %v3737 = vld [vmem:[%s3736] sm:$0xf]
      %v3739 = vsel %vm3159, %v3737, 0
      %3741 = vmatprep.subr.mxu0 %v3733
      %3742 = vmatpush1.msra.mxu0 %v3732
      %3743 = vmatprep.subr.mxu0 %v3735
      %3744 = vmatpush1.msra.mxu0 %v3734
      %3745 = vmatprep.subr.mxu0 0.0
      %3746 = vmatpush1.msra.mxu0 0.0
      %3747 = vmatprep.subr.mxu0 0.0
      %3748 = vmatpush1.msra.mxu0 0.0
      %3749 = vmatprep.subr.mxu0 0.0
      %3750 = vmatpush1.msra.mxu0 0.0
      %3751 = vmatprep.subr.mxu0 0.0
      %3752 = vmatpush1.msra.mxu0 0.0
      %3753 = vmatprep.subr.mxu0 0.0
      %3754 = vmatpush1.msra.mxu0 0.0
      %3755 = vmatprep.subr.mxu0 0.0
      %3756 = vmatpush1.msra.mxu0 0.0
      %3757 = vmatprep.subr.mxu0 0.0
      %3758 = vmatpush1.msra.mxu0 0.0
      %3759 = vmatprep.subr.mxu0 0.0
      %3760 = vmatpush1.msra.mxu0 0.0
      %3761 = vmatprep.subr.mxu0 0.0
      %3762 = vmatpush1.msra.mxu0 0.0
      %3763 = vmatprep.subr.mxu0 0.0
      %3764 = vmatpush1.msra.mxu0 0.0
      %3765 = vmatprep.subr.mxu0 0.0
      %3766 = vmatpush1.msra.mxu0 0.0
      %3767 = vmatprep.subr.mxu0 0.0
      %3768 = vmatpush1.msra.mxu0 0.0
      %3769 = vmatprep.subr.mxu0 0.0
      %3770 = vmatpush1.msra.mxu0 0.0
      %3771 = vmatprep.subr.mxu0 0.0
      %3772 = vmatpush1.msra.mxu0 0.0
      %3773 = vmatprep.subr.mxu0 0.0
      %3774 = vmatpush1.msra.mxu0 0.0
      %3775 = vmatprep.subr.mxu0 0.0
      %3776 = vmatpush1.msra.mxu0 0.0
      %3777 = vmatprep.subr.mxu0 0.0
      %3778 = vmatpush1.msra.mxu0 0.0
      %3779 = vmatprep.subr.mxu0 0.0
      %3780 = vmatpush1.msra.mxu0 0.0
      %3781 = vmatprep.subr.mxu0 0.0
      %3782 = vmatpush1.msra.mxu0 0.0
      %3783 = vmatprep.subr.mxu0 0.0
      %3784 = vmatpush1.msra.mxu0 0.0
      %3785 = vmatprep.subr.mxu0 0.0
      %3786 = vmatpush1.msra.mxu0 0.0
      %3787 = vmatprep.subr.mxu0 0.0
      %3788 = vmatpush1.msra.mxu0 0.0
      %3789 = vmatprep.subr.mxu0 0.0
      %3790 = vmatpush1.msra.mxu0 0.0
      %3791 = vmatprep.subr.mxu0 0.0
      %3792 = vmatpush1.msra.mxu0 0.0
      %3793 = vmatprep.subr.mxu0 0.0
      %3794 = vmatpush1.msra.mxu0 0.0
      %3795 = vmatprep.subr.mxu0 0.0
      %3796 = vmatpush1.msra.mxu0 0.0
      %3797 = vmatprep.subr.mxu0 0.0
      %3798 = vmatpush1.msra.mxu0 0.0
      %3799 = vmatprep.subr.mxu0 0.0
      %3800 = vmatpush1.msra.mxu0 0.0
      %3801 = vmatprep.subr.mxu0 0.0
      %3802 = vmatpush1.msra.mxu0 0.0
      %3803 = vmatprep.subr.mxu0 0.0
      %3804 = vmatpush1.msra.mxu0 0.0
      %3805 = vmatprep.mubr.f32.mxu0 0.0
      %3806 = vmatmul.mubr.f32.gmra.mrb[0].mxu0 %v3739
      %v3807 = vpop.f32.mrb[0].mxu0
      %v3808 = vadd.f32 0.0, %v3807
      %v3809 = vpop.f32.mrb[0].mxu0
      %v3810 = vadd.f32 0.0, %v3809
      %3811 = vdwg.mxu0
      %v3812 = vadd.f32 %v3710, %v3808
      %v3813 = vadd.f32 %v3711, %v3810
      %s3814 = scalar_lea.vmem %s4, 28
      %v3815 = vld [vmem:[%s3814] sm:$0xf]
      %3816 = vrot.lane.b32.xlu0 %v3120, 95
      %v3817 = vpop.permute.xlu0 %3816
      %3818 = vrot.lane.b32.xlu0 %v3121, 95
      %v3819 = vpop.permute.xlu0 %3818
      %3820 = vrot.lane.b32.xlu0 %v3122, 95
      %v3821 = vpop.permute.xlu0 %3820
      %3822 = vrot.lane.b32.xlu0 %v3123, 95
      %v3823 = vpop.permute.xlu0 %3822
      %3824 = vrot.lane.b32.xlu0 %v3124, 95
      %v3825 = vpop.permute.xlu0 %3824
      %3826 = vrot.lane.b32.xlu0 %v3125, 95
      %v3827 = vpop.permute.xlu0 %3826
      %v3828 = vsel %vm1121, %v3817, %v3819
      %v3829 = vsel %vm1121, %v3819, %v3821
      %v3830 = vsel %vm1121, %v3823, %v3825
      %v3831 = vsel %vm1121, %v3825, %v3827
      %v3837 = vsel %vm3159, %v3815, 0
      %3839 = vmatprep.subr.mxu0 %v3829
      %3840 = vmatpush1.msra.mxu0 %v3828
      %3841 = vmatprep.subr.mxu0 %v3831
      %3842 = vmatpush1.msra.mxu0 %v3830
      %3843 = vmatprep.subr.mxu0 0.0
      %3844 = vmatpush1.msra.mxu0 0.0
      %3845 = vmatprep.subr.mxu0 0.0
      %3846 = vmatpush1.msra.mxu0 0.0
      %3847 = vmatprep.subr.mxu0 0.0
      %3848 = vmatpush1.msra.mxu0 0.0
      %3849 = vmatprep.subr.mxu0 0.0
      %3850 = vmatpush1.msra.mxu0 0.0
      %3851 = vmatprep.subr.mxu0 0.0
      %3852 = vmatpush1.msra.mxu0 0.0
      %3853 = vmatprep.subr.mxu0 0.0
      %3854 = vmatpush1.msra.mxu0 0.0
      %3855 = vmatprep.subr.mxu0 0.0
      %3856 = vmatpush1.msra.mxu0 0.0
      %3857 = vmatprep.subr.mxu0 0.0
      %3858 = vmatpush1.msra.mxu0 0.0
      %3859 = vmatprep.subr.mxu0 0.0
      %3860 = vmatpush1.msra.mxu0 0.0
      %3861 = vmatprep.subr.mxu0 0.0
      %3862 = vmatpush1.msra.mxu0 0.0
      %3863 = vmatprep.subr.mxu0 0.0
      %3864 = vmatpush1.msra.mxu0 0.0
      %3865 = vmatprep.subr.mxu0 0.0
      %3866 = vmatpush1.msra.mxu0 0.0
      %3867 = vmatprep.subr.mxu0 0.0
      %3868 = vmatpush1.msra.mxu0 0.0
      %3869 = vmatprep.subr.mxu0 0.0
      %3870 = vmatpush1.msra.mxu0 0.0
      %3871 = vmatprep.subr.mxu0 0.0
      %3872 = vmatpush1.msra.mxu0 0.0
      %3873 = vmatprep.subr.mxu0 0.0
      %3874 = vmatpush1.msra.mxu0 0.0
      %3875 = vmatprep.subr.mxu0 0.0
      %3876 = vmatpush1.msra.mxu0 0.0
      %3877 = vmatprep.subr.mxu0 0.0
      %3878 = vmatpush1.msra.mxu0 0.0
      %3879 = vmatprep.subr.mxu0 0.0
      %3880 = vmatpush1.msra.mxu0 0.0
      %3881 = vmatprep.subr.mxu0 0.0
      %3882 = vmatpush1.msra.mxu0 0.0
      %3883 = vmatprep.subr.mxu0 0.0
      %3884 = vmatpush1.msra.mxu0 0.0
      %3885 = vmatprep.subr.mxu0 0.0
      %3886 = vmatpush1.msra.mxu0 0.0
      %3887 = vmatprep.subr.mxu0 0.0
      %3888 = vmatpush1.msra.mxu0 0.0
      %3889 = vmatprep.subr.mxu0 0.0
      %3890 = vmatpush1.msra.mxu0 0.0
      %3891 = vmatprep.subr.mxu0 0.0
      %3892 = vmatpush1.msra.mxu0 0.0
      %3893 = vmatprep.subr.mxu0 0.0
      %3894 = vmatpush1.msra.mxu0 0.0
      %3895 = vmatprep.subr.mxu0 0.0
      %3896 = vmatpush1.msra.mxu0 0.0
      %3897 = vmatprep.subr.mxu0 0.0
      %3898 = vmatpush1.msra.mxu0 0.0
      %3899 = vmatprep.subr.mxu0 0.0
      %3900 = vmatpush1.msra.mxu0 0.0
      %3901 = vmatprep.subr.mxu0 0.0
      %3902 = vmatpush1.msra.mxu0 0.0
      %3903 = vmatprep.mubr.f32.mxu0 0.0
      %3904 = vmatmul.mubr.f32.gmra.mrb[0].mxu0 %v3837
      %v3905 = vpop.f32.mrb[0].mxu0
      %v3906 = vadd.f32 0.0, %v3905
      %v3907 = vpop.f32.mrb[0].mxu0
      %v3908 = vadd.f32 0.0, %v3907
      %3909 = vdwg.mxu0
      %v3910 = vadd.f32 %v3812, %v3906
      %v3911 = vadd.f32 %v3813, %v3908
      %3912 = vrot.lane.b32.xlu0 %v3120, 94
      %v3913 = vpop.permute.xlu0 %3912
      %3914 = vrot.lane.b32.xlu0 %v3121, 94
      %v3915 = vpop.permute.xlu0 %3914
      %3916 = vrot.lane.b32.xlu0 %v3122, 94
      %v3917 = vpop.permute.xlu0 %3916
      %3918 = vrot.lane.b32.xlu0 %v3123, 94
      %v3919 = vpop.permute.xlu0 %3918
      %3920 = vrot.lane.b32.xlu0 %v3124, 94
      %v3921 = vpop.permute.xlu0 %3920
      %3922 = vrot.lane.b32.xlu0 %v3125, 94
      %v3923 = vpop.permute.xlu0 %3922
      %v3924 = vsel %vm1210, %v3913, %v3915
      %v3925 = vsel %vm1210, %v3915, %v3917
      %v3926 = vsel %vm1210, %v3919, %v3921
      %v3927 = vsel %vm1210, %v3921, %v3923
      %v3932 = vsel %vm632, %v3924, 0.0
      %v3933 = vsel %vm633, %v3925, 0.0
      %v3934 = vsel %vm632, %v3926, 0.0
      %v3935 = vsel %vm633, %v3927, 0.0
      %s3936 = scalar_lea.vmem %s4, 32
      %v3937 = vld [vmem:[%s3936] sm:$0xf]
      %v3939 = vsel %vm3159, %v3937, 0
      %3941 = vmatprep.subr.mxu0 %v3933
      %3942 = vmatpush1.msra.mxu0 %v3932
      %3943 = vmatprep.subr.mxu0 %v3935
      %3944 = vmatpush1.msra.mxu0 %v3934
      %3945 = vmatprep.subr.mxu0 0.0
      %3946 = vmatpush1.msra.mxu0 0.0
      %3947 = vmatprep.subr.mxu0 0.0
      %3948 = vmatpush1.msra.mxu0 0.0
      %3949 = vmatprep.subr.mxu0 0.0
      %3950 = vmatpush1.msra.mxu0 0.0
      %3951 = vmatprep.subr.mxu0 0.0
      %3952 = vmatpush1.msra.mxu0 0.0
      %3953 = vmatprep.subr.mxu0 0.0
      %3954 = vmatpush1.msra.mxu0 0.0
      %3955 = vmatprep.subr.mxu0 0.0
      %3956 = vmatpush1.msra.mxu0 0.0
      %3957 = vmatprep.subr.mxu0 0.0
      %3958 = vmatpush1.msra.mxu0 0.0
      %3959 = vmatprep.subr.mxu0 0.0
      %3960 = vmatpush1.msra.mxu0 0.0
      %3961 = vmatprep.subr.mxu0 0.0
      %3962 = vmatpush1.msra.mxu0 0.0
      %3963 = vmatprep.subr.mxu0 0.0
      %3964 = vmatpush1.msra.mxu0 0.0
      %3965 = vmatprep.subr.mxu0 0.0
      %3966 = vmatpush1.msra.mxu0 0.0
      %3967 = vmatprep.subr.mxu0 0.0
      %3968 = vmatpush1.msra.mxu0 0.0
      %3969 = vmatprep.subr.mxu0 0.0
      %3970 = vmatpush1.msra.mxu0 0.0
      %3971 = vmatprep.subr.mxu0 0.0
      %3972 = vmatpush1.msra.mxu0 0.0
      %3973 = vmatprep.subr.mxu0 0.0
      %3974 = vmatpush1.msra.mxu0 0.0
      %3975 = vmatprep.subr.mxu0 0.0
      %3976 = vmatpush1.msra.mxu0 0.0
      %3977 = vmatprep.subr.mxu0 0.0
      %3978 = vmatpush1.msra.mxu0 0.0
      %3979 = vmatprep.subr.mxu0 0.0
      %3980 = vmatpush1.msra.mxu0 0.0
      %3981 = vmatprep.subr.mxu0 0.0
      %3982 = vmatpush1.msra.mxu0 0.0
      %3983 = vmatprep.subr.mxu0 0.0
      %3984 = vmatpush1.msra.mxu0 0.0
      %3985 = vmatprep.subr.mxu0 0.0
      %3986 = vmatpush1.msra.mxu0 0.0
      %3987 = vmatprep.subr.mxu0 0.0
      %3988 = vmatpush1.msra.mxu0 0.0
      %3989 = vmatprep.subr.mxu0 0.0
      %3990 = vmatpush1.msra.mxu0 0.0
      %3991 = vmatprep.subr.mxu0 0.0
      %3992 = vmatpush1.msra.mxu0 0.0
      %3993 = vmatprep.subr.mxu0 0.0
      %3994 = vmatpush1.msra.mxu0 0.0
      %3995 = vmatprep.subr.mxu0 0.0
      %3996 = vmatpush1.msra.mxu0 0.0
      %3997 = vmatprep.subr.mxu0 0.0
      %3998 = vmatpush1.msra.mxu0 0.0
      %3999 = vmatprep.subr.mxu0 0.0
      %4000 = vmatpush1.msra.mxu0 0.0
      %4001 = vmatprep.subr.mxu0 0.0
      %4002 = vmatpush1.msra.mxu0 0.0
      %4003 = vmatprep.subr.mxu0 0.0
      %4004 = vmatpush1.msra.mxu0 0.0
      %4005 = vmatprep.mubr.f32.mxu0 0.0
      %4006 = vmatmul.mubr.f32.gmra.mrb[0].mxu0 %v3939
      %v4007 = vpop.f32.mrb[0].mxu0
      %v4008 = vadd.f32 0.0, %v4007
      %v4009 = vpop.f32.mrb[0].mxu0
      %v4010 = vadd.f32 0.0, %v4009
      %4011 = vdwg.mxu0
      %v4012 = vadd.f32 %v3910, %v4008
      %v4013 = vadd.f32 %v3911, %v4010
      %v4014 = vld [vmem:[%s9] sm:$0xf]
      %4016 = vset.pattern.permute.xlu0 0
      %4017 = vperm.xlu0 %4016, %v4014
      %v4018 = vpop.permute.xlu0 %4017
      %v4020 = vadd.f32 %v4012, %v4018
      %v4021 = vadd.f32 %v4013, %v4018
      %vm4022 = vcmp.ge.f32.partialorder %v4020, 0.0
      %vm4023 = vcmp.ge.f32.partialorder %v4021, 0.0
      %v4024 = vmul.f32 %v4020, 0.2
      %v4025 = vmul.f32 %v4021, 0.2
      %v4026 = vsel %vm4022, %v4020, %v4024
      %v4027 = vsel %vm4023, %v4021, %v4025
      %4030 = vrot.lane.b32.xlu0 %v4026, 17
      %v4031 = vpop.permute.xlu0 %4030
      %4032 = vrot.lane.b32.xlu0 %v4027, 17
      %v4033 = vpop.permute.xlu0 %4032
      %v4034 = vsel %vm405, %v4031, %v4033
      %4038 = vst.msk [vmem:[#allocation2 + $0x30] sm:$0xf] %vm410, %v4031
      %4039 = vst [vmem:[#allocation2 + $0x38] sm:$0xf] %v4034
      %4040 = vst.msk [vmem:[#allocation2 + $0x40] sm:$0xf] %vm413, %v4033
      %v4041 = vld [vmem:[#allocation2] sm:$0xff]
      %v4042 = vld [vmem:[#allocation2 + $0x8] sm:$0xff]
      %v4043 = vld [vmem:[#allocation2 + $0x10] sm:$0xff]
      %v4044 = vld [vmem:[#allocation2 + $0x18] sm:$0xff]
      %v4045 = vld [vmem:[#allocation2 + $0x20] sm:$0xff]
      %v4046 = vld [vmem:[#allocation2 + $0x28] sm:$0xff]
      %v4047 = vld [vmem:[#allocation2 + $0x30] sm:$0xf]
      %v4048 = vld [vmem:[#allocation2 + $0x38] sm:$0xf]
      %v4049 = vld [vmem:[#allocation2 + $0x40] sm:$0xf]
      %v4050 = vsel %vm451, %v4041, 0.0
      %v4051 = vsel %vm452, %v4042, 0.0
      %v4052 = vsel %vm451, %v4044, 0.0
      %v4053 = vsel %vm452, %v4045, 0.0
      %v4054 = vsel %vm451, %v4047, 0.0
      %v4055 = vsel %vm452, %v4048, 0.0
      %v4056 = vld [vmem:[%s5] sm:$0xf]
      %s4057 = scalar_lea.vmem %s5, 4
      %v4058 = vld [vmem:[%s4057] sm:$0xf]
      %4068 = vrot.lane.b32.xlu0 %v4041, 127
      %v4069 = vpop.permute.xlu0 %4068
      %4070 = vrot.lane.b32.xlu0 %v4042, 127
      %v4071 = vpop.permute.xlu0 %4070
      %4072 = vrot.lane.b32.xlu0 %v4043, 127
      %v4073 = vpop.permute.xlu0 %4072
      %4074 = vrot.lane.b32.xlu0 %v4044, 127
      %v4075 = vpop.permute.xlu0 %4074
      %4076 = vrot.lane.b32.xlu0 %v4045, 127
      %v4077 = vpop.permute.xlu0 %4076
      %4078 = vrot.lane.b32.xlu0 %v4046, 127
      %v4079 = vpop.permute.xlu0 %4078
      %4080 = vrot.lane.b32.xlu0 %v4047, 127
      %v4081 = vpop.permute.xlu0 %4080
      %4082 = vrot.lane.b32.xlu0 %v4048, 127
      %v4083 = vpop.permute.xlu0 %4082
      %4084 = vrot.lane.b32.xlu0 %v4049, 127
      %v4085 = vpop.permute.xlu0 %4084
      %v4086 = vsel %vm467, %v4069, %v4071
      %v4087 = vsel %vm467, %v4071, %v4073
      %v4088 = vsel %vm467, %v4075, %v4077
      %v4089 = vsel %vm467, %v4077, %v4079
      %v4090 = vsel %vm467, %v4081, %v4083
      %v4091 = vsel %vm467, %v4083, %v4085
      %vm4096 = vcmask 162816
      %v4098 = vsel %vm4096, %v4058, 0
      %v4100 = vsel %vm474, %v4090, 0
      %v4102 = vsel %vm474, %v4091, 0
      %4104 = vmatprep.subr.mxu0 %v4087
      %4105 = vmatpush1.msra.mxu0 %v4086
      %4106 = vmatprep.subr.mxu0 %v4089
      %4107 = vmatpush1.msra.mxu0 %v4088
      %4108 = vmatprep.subr.mxu0 %v4102
      %4109 = vmatpush1.msra.mxu0 %v4100
      %4110 = vmatprep.subr.mxu0 0.0
      %4111 = vmatpush1.msra.mxu0 0.0
      %4112 = vmatprep.subr.mxu0 0.0
      %4113 = vmatpush1.msra.mxu0 0.0
      %4114 = vmatprep.subr.mxu0 0.0
      %4115 = vmatpush1.msra.mxu0 0.0
      %4116 = vmatprep.subr.mxu0 0.0
      %4117 = vmatpush1.msra.mxu0 0.0
      %4118 = vmatprep.subr.mxu0 0.0
      %4119 = vmatpush1.msra.mxu0 0.0
      %4120 = vmatprep.subr.mxu0 0.0
      %4121 = vmatpush1.msra.mxu0 0.0
      %4122 = vmatprep.subr.mxu0 0.0
      %4123 = vmatpush1.msra.mxu0 0.0
      %4124 = vmatprep.subr.mxu0 0.0
      %4125 = vmatpush1.msra.mxu0 0.0
      %4126 = vmatprep.subr.mxu0 0.0
      %4127 = vmatpush1.msra.mxu0 0.0
      %4128 = vmatprep.subr.mxu0 0.0
      %4129 = vmatpush1.msra.mxu0 0.0
      %4130 = vmatprep.subr.mxu0 0.0
      %4131 = vmatpush1.msra.mxu0 0.0
      %4132 = vmatprep.subr.mxu0 0.0
      %4133 = vmatpush1.msra.mxu0 0.0
      %4134 = vmatprep.subr.mxu0 0.0
      %4135 = vmatpush1.msra.mxu0 0.0
      %4136 = vmatprep.subr.mxu0 0.0
      %4137 = vmatpush1.msra.mxu0 0.0
      %4138 = vmatprep.subr.mxu0 0.0
      %4139 = vmatpush1.msra.mxu0 0.0
      %4140 = vmatprep.subr.mxu0 0.0
      %4141 = vmatpush1.msra.mxu0 0.0
      %4142 = vmatprep.subr.mxu0 0.0
      %4143 = vmatpush1.msra.mxu0 0.0
      %4144 = vmatprep.subr.mxu0 0.0
      %4145 = vmatpush1.msra.mxu0 0.0
      %4146 = vmatprep.subr.mxu0 0.0
      %4147 = vmatpush1.msra.mxu0 0.0
      %4148 = vmatprep.subr.mxu0 0.0
      %4149 = vmatpush1.msra.mxu0 0.0
      %4150 = vmatprep.subr.mxu0 0.0
      %4151 = vmatpush1.msra.mxu0 0.0
      %4152 = vmatprep.subr.mxu0 0.0
      %4153 = vmatpush1.msra.mxu0 0.0
      %4154 = vmatprep.subr.mxu0 0.0
      %4155 = vmatpush1.msra.mxu0 0.0
      %4156 = vmatprep.subr.mxu0 0.0
      %4157 = vmatpush1.msra.mxu0 0.0
      %4158 = vmatprep.subr.mxu0 0.0
      %4159 = vmatpush1.msra.mxu0 0.0
      %4160 = vmatprep.subr.mxu0 0.0
      %4161 = vmatpush1.msra.mxu0 0.0
      %4162 = vmatprep.subr.mxu0 0.0
      %4163 = vmatpush1.msra.mxu0 0.0
      %4164 = vmatprep.subr.mxu0 0.0
      %4165 = vmatpush1.msra.mxu0 0.0
      %4166 = vmatprep.subr.mxu0 0.0
      %4167 = vmatpush1.msra.mxu0 0.0
      %4168 = vmatprep.mubr.f32.mxu0 0.0
      %4169 = vmatmul.mubr.f32.gmra.mrb[0].mxu0 %v4098
      %v4170 = vpop.f32.mrb[0].mxu0
      %v4171 = vadd.f32 0.0, %v4170
      %v4172 = vpop.f32.mrb[0].mxu0
      %v4173 = vadd.f32 0.0, %v4172
      %4174 = vdwg.mxu0
      %v4176 = vsel %vm4096, %v4056, 0
      %v4179 = vsel %vm474, %v4054, 0
      %v4182 = vsel %vm474, %v4055, 0
      %4184 = vmatprep.subr.mxu0 %v4051
      %4185 = vmatpush1.msra.mxu0 %v4050
      %4186 = vmatprep.subr.mxu0 %v4053
      %4187 = vmatpush1.msra.mxu0 %v4052
      %4188 = vmatprep.subr.mxu0 %v4182
      %4189 = vmatpush1.msra.mxu0 %v4179
      %4190 = vmatprep.subr.mxu0 0.0
      %4191 = vmatpush1.msra.mxu0 0.0
      %4192 = vmatprep.subr.mxu0 0.0
      %4193 = vmatpush1.msra.mxu0 0.0
      %4194 = vmatprep.subr.mxu0 0.0
      %4195 = vmatpush1.msra.mxu0 0.0
      %4196 = vmatprep.subr.mxu0 0.0
      %4197 = vmatpush1.msra.mxu0 0.0
      %4198 = vmatprep.subr.mxu0 0.0
      %4199 = vmatpush1.msra.mxu0 0.0
      %4200 = vmatprep.subr.mxu0 0.0
      %4201 = vmatpush1.msra.mxu0 0.0
      %4202 = vmatprep.subr.mxu0 0.0
      %4203 = vmatpush1.msra.mxu0 0.0
      %4204 = vmatprep.subr.mxu0 0.0
      %4205 = vmatpush1.msra.mxu0 0.0
      %4206 = vmatprep.subr.mxu0 0.0
      %4207 = vmatpush1.msra.mxu0 0.0
      %4208 = vmatprep.subr.mxu0 0.0
      %4209 = vmatpush1.msra.mxu0 0.0
      %4210 = vmatprep.subr.mxu0 0.0
      %4211 = vmatpush1.msra.mxu0 0.0
      %4212 = vmatprep.subr.mxu0 0.0
      %4213 = vmatpush1.msra.mxu0 0.0
      %4214 = vmatprep.subr.mxu0 0.0
      %4215 = vmatpush1.msra.mxu0 0.0
      %4216 = vmatprep.subr.mxu0 0.0
      %4217 = vmatpush1.msra.mxu0 0.0
      %4218 = vmatprep.subr.mxu0 0.0
      %4219 = vmatpush1.msra.mxu0 0.0
      %4220 = vmatprep.subr.mxu0 0.0
      %4221 = vmatpush1.msra.mxu0 0.0
      %4222 = vmatprep.subr.mxu0 0.0
      %4223 = vmatpush1.msra.mxu0 0.0
      %4224 = vmatprep.subr.mxu0 0.0
      %4225 = vmatpush1.msra.mxu0 0.0
      %4226 = vmatprep.subr.mxu0 0.0
      %4227 = vmatpush1.msra.mxu0 0.0
      %4228 = vmatprep.subr.mxu0 0.0
      %4229 = vmatpush1.msra.mxu0 0.0
      %4230 = vmatprep.subr.mxu0 0.0
      %4231 = vmatpush1.msra.mxu0 0.0
      %4232 = vmatprep.subr.mxu0 0.0
      %4233 = vmatpush1.msra.mxu0 0.0
      %4234 = vmatprep.subr.mxu0 0.0
      %4235 = vmatpush1.msra.mxu0 0.0
      %4236 = vmatprep.subr.mxu0 0.0
      %4237 = vmatpush1.msra.mxu0 0.0
      %4238 = vmatprep.subr.mxu0 0.0
      %4239 = vmatpush1.msra.mxu0 0.0
      %4240 = vmatprep.subr.mxu0 0.0
      %4241 = vmatpush1.msra.mxu0 0.0
      %4242 = vmatprep.subr.mxu0 0.0
      %4243 = vmatpush1.msra.mxu0 0.0
      %4244 = vmatprep.subr.mxu0 0.0
      %4245 = vmatpush1.msra.mxu0 0.0
      %4246 = vmatprep.subr.mxu0 0.0
      %4247 = vmatpush1.msra.mxu0 0.0
      %4248 = vmatprep.mubr.f32.mxu0 0.0
      %4249 = vmatmul.mubr.f32.gmra.mrb[0].mxu0 %v4176
      %v4250 = vpop.f32.mrb[0].mxu0
      %v4251 = vadd.f32 %v4171, %v4250
      %v4252 = vpop.f32.mrb[0].mxu0
      %v4253 = vadd.f32 %v4173, %v4252
      %4254 = vdwg.mxu0
      %4255 = vrot.lane.b32.xlu0 %v4041, 126
      %v4256 = vpop.permute.xlu0 %4255
      %4257 = vrot.lane.b32.xlu0 %v4042, 126
      %v4258 = vpop.permute.xlu0 %4257
      %4259 = vrot.lane.b32.xlu0 %v4043, 126
      %v4260 = vpop.permute.xlu0 %4259
      %4261 = vrot.lane.b32.xlu0 %v4044, 126
      %v4262 = vpop.permute.xlu0 %4261
      %4263 = vrot.lane.b32.xlu0 %v4045, 126
      %v4264 = vpop.permute.xlu0 %4263
      %4265 = vrot.lane.b32.xlu0 %v4046, 126
      %v4266 = vpop.permute.xlu0 %4265
      %4267 = vrot.lane.b32.xlu0 %v4047, 126
      %v4268 = vpop.permute.xlu0 %4267
      %4269 = vrot.lane.b32.xlu0 %v4048, 126
      %v4270 = vpop.permute.xlu0 %4269
      %4271 = vrot.lane.b32.xlu0 %v4049, 126
      %v4272 = vpop.permute.xlu0 %4271
      %v4273 = vsel %vm640, %v4256, %v4258
      %v4274 = vsel %vm640, %v4258, %v4260
      %v4275 = vsel %vm640, %v4262, %v4264
      %v4276 = vsel %vm640, %v4264, %v4266
      %v4277 = vsel %vm640, %v4268, %v4270
      %v4278 = vsel %vm640, %v4270, %v4272
      %v4285 = vsel %vm632, %v4273, 0.0
      %v4286 = vsel %vm633, %v4274, 0.0
      %v4287 = vsel %vm632, %v4275, 0.0
      %v4288 = vsel %vm633, %v4276, 0.0
      %v4289 = vsel %vm632, %v4277, 0.0
      %v4290 = vsel %vm633, %v4278, 0.0
      %s4291 = scalar_lea.vmem %s5, 8
      %v4292 = vld [vmem:[%s4291] sm:$0xf]
      %v4294 = vsel %vm4096, %v4292, 0
      %v4297 = vsel %vm474, %v4289, 0
      %v4300 = vsel %vm474, %v4290, 0
      %4302 = vmatprep.subr.mxu0 %v4286
      %4303 = vmatpush1.msra.mxu0 %v4285
      %4304 = vmatprep.subr.mxu0 %v4288
      %4305 = vmatpush1.msra.mxu0 %v4287
      %4306 = vmatprep.subr.mxu0 %v4300
      %4307 = vmatpush1.msra.mxu0 %v4297
      %4308 = vmatprep.subr.mxu0 0.0
      %4309 = vmatpush1.msra.mxu0 0.0
      %4310 = vmatprep.subr.mxu0 0.0
      %4311 = vmatpush1.msra.mxu0 0.0
      %4312 = vmatprep.subr.mxu0 0.0
      %4313 = vmatpush1.msra.mxu0 0.0
      %4314 = vmatprep.subr.mxu0 0.0
      %4315 = vmatpush1.msra.mxu0 0.0
      %4316 = vmatprep.subr.mxu0 0.0
      %4317 = vmatpush1.msra.mxu0 0.0
      %4318 = vmatprep.subr.mxu0 0.0
      %4319 = vmatpush1.msra.mxu0 0.0
      %4320 = vmatprep.subr.mxu0 0.0
      %4321 = vmatpush1.msra.mxu0 0.0
      %4322 = vmatprep.subr.mxu0 0.0
      %4323 = vmatpush1.msra.mxu0 0.0
      %4324 = vmatprep.subr.mxu0 0.0
      %4325 = vmatpush1.msra.mxu0 0.0
      %4326 = vmatprep.subr.mxu0 0.0
      %4327 = vmatpush1.msra.mxu0 0.0
      %4328 = vmatprep.subr.mxu0 0.0
      %4329 = vmatpush1.msra.mxu0 0.0
      %4330 = vmatprep.subr.mxu0 0.0
      %4331 = vmatpush1.msra.mxu0 0.0
      %4332 = vmatprep.subr.mxu0 0.0
      %4333 = vmatpush1.msra.mxu0 0.0
      %4334 = vmatprep.subr.mxu0 0.0
      %4335 = vmatpush1.msra.mxu0 0.0
      %4336 = vmatprep.subr.mxu0 0.0
      %4337 = vmatpush1.msra.mxu0 0.0
      %4338 = vmatprep.subr.mxu0 0.0
      %4339 = vmatpush1.msra.mxu0 0.0
      %4340 = vmatprep.subr.mxu0 0.0
      %4341 = vmatpush1.msra.mxu0 0.0
      %4342 = vmatprep.subr.mxu0 0.0
      %4343 = vmatpush1.msra.mxu0 0.0
      %4344 = vmatprep.subr.mxu0 0.0
      %4345 = vmatpush1.msra.mxu0 0.0
      %4346 = vmatprep.subr.mxu0 0.0
      %4347 = vmatpush1.msra.mxu0 0.0
      %4348 = vmatprep.subr.mxu0 0.0
      %4349 = vmatpush1.msra.mxu0 0.0
      %4350 = vmatprep.subr.mxu0 0.0
      %4351 = vmatpush1.msra.mxu0 0.0
      %4352 = vmatprep.subr.mxu0 0.0
      %4353 = vmatpush1.msra.mxu0 0.0
      %4354 = vmatprep.subr.mxu0 0.0
      %4355 = vmatpush1.msra.mxu0 0.0
      %4356 = vmatprep.subr.mxu0 0.0
      %4357 = vmatpush1.msra.mxu0 0.0
      %4358 = vmatprep.subr.mxu0 0.0
      %4359 = vmatpush1.msra.mxu0 0.0
      %4360 = vmatprep.subr.mxu0 0.0
      %4361 = vmatpush1.msra.mxu0 0.0
      %4362 = vmatprep.subr.mxu0 0.0
      %4363 = vmatpush1.msra.mxu0 0.0
      %4364 = vmatprep.subr.mxu0 0.0
      %4365 = vmatpush1.msra.mxu0 0.0
      %4366 = vmatprep.mubr.f32.mxu0 0.0
      %4367 = vmatmul.mubr.f32.gmra.mrb[0].mxu0 %v4294
      %v4368 = vpop.f32.mrb[0].mxu0
      %v4369 = vadd.f32 0.0, %v4368
      %v4370 = vpop.f32.mrb[0].mxu0
      %v4371 = vadd.f32 0.0, %v4370
      %4372 = vdwg.mxu0
      %v4373 = vadd.f32 %v4251, %v4369
      %v4374 = vadd.f32 %v4253, %v4371
      %4375 = vrot.lane.b32.xlu0 %v4041, 112
      %v4376 = vpop.permute.xlu0 %4375
      %4377 = vrot.lane.b32.xlu0 %v4042, 112
      %v4378 = vpop.permute.xlu0 %4377
      %4379 = vrot.lane.b32.xlu0 %v4043, 112
      %v4380 = vpop.permute.xlu0 %4379
      %4381 = vrot.lane.b32.xlu0 %v4044, 112
      %v4382 = vpop.permute.xlu0 %4381
      %4383 = vrot.lane.b32.xlu0 %v4045, 112
      %v4384 = vpop.permute.xlu0 %4383
      %4385 = vrot.lane.b32.xlu0 %v4046, 112
      %v4386 = vpop.permute.xlu0 %4385
      %4387 = vrot.lane.b32.xlu0 %v4047, 112
      %v4388 = vpop.permute.xlu0 %4387
      %4389 = vrot.lane.b32.xlu0 %v4048, 112
      %v4390 = vpop.permute.xlu0 %4389
      %4391 = vrot.lane.b32.xlu0 %v4049, 112
      %v4392 = vpop.permute.xlu0 %4391
      %v4393 = vsel %vm737, %v4376, %v4378
      %v4394 = vsel %vm737, %v4378, %v4380
      %v4395 = vsel %vm737, %v4382, %v4384
      %v4396 = vsel %vm737, %v4384, %v4386
      %v4397 = vsel %vm737, %v4388, %v4390
      %v4398 = vsel %vm737, %v4390, %v4392
      %v4405 = vsel %vm451, %v4393, 0.0
      %v4406 = vsel %vm452, %v4394, 0.0
      %v4407 = vsel %vm451, %v4395, 0.0
      %v4408 = vsel %vm452, %v4396, 0.0
      %v4409 = vsel %vm451, %v4397, 0.0
      %v4410 = vsel %vm452, %v4398, 0.0
      %s4411 = scalar_lea.vmem %s5, 12
      %v4412 = vld [vmem:[%s4411] sm:$0xf]
      %v4414 = vsel %vm4096, %v4412, 0
      %v4417 = vsel %vm474, %v4409, 0
      %v4420 = vsel %vm474, %v4410, 0
      %4422 = vmatprep.subr.mxu0 %v4406
      %4423 = vmatpush1.msra.mxu0 %v4405
      %4424 = vmatprep.subr.mxu0 %v4408
      %4425 = vmatpush1.msra.mxu0 %v4407
      %4426 = vmatprep.subr.mxu0 %v4420
      %4427 = vmatpush1.msra.mxu0 %v4417
      %4428 = vmatprep.subr.mxu0 0.0
      %4429 = vmatpush1.msra.mxu0 0.0
      %4430 = vmatprep.subr.mxu0 0.0
      %4431 = vmatpush1.msra.mxu0 0.0
      %4432 = vmatprep.subr.mxu0 0.0
      %4433 = vmatpush1.msra.mxu0 0.0
      %4434 = vmatprep.subr.mxu0 0.0
      %4435 = vmatpush1.msra.mxu0 0.0
      %4436 = vmatprep.subr.mxu0 0.0
      %4437 = vmatpush1.msra.mxu0 0.0
      %4438 = vmatprep.subr.mxu0 0.0
      %4439 = vmatpush1.msra.mxu0 0.0
      %4440 = vmatprep.subr.mxu0 0.0
      %4441 = vmatpush1.msra.mxu0 0.0
      %4442 = vmatprep.subr.mxu0 0.0
      %4443 = vmatpush1.msra.mxu0 0.0
      %4444 = vmatprep.subr.mxu0 0.0
      %4445 = vmatpush1.msra.mxu0 0.0
      %4446 = vmatprep.subr.mxu0 0.0
      %4447 = vmatpush1.msra.mxu0 0.0
      %4448 = vmatprep.subr.mxu0 0.0
      %4449 = vmatpush1.msra.mxu0 0.0
      %4450 = vmatprep.subr.mxu0 0.0
      %4451 = vmatpush1.msra.mxu0 0.0
      %4452 = vmatprep.subr.mxu0 0.0
      %4453 = vmatpush1.msra.mxu0 0.0
      %4454 = vmatprep.subr.mxu0 0.0
      %4455 = vmatpush1.msra.mxu0 0.0
      %4456 = vmatprep.subr.mxu0 0.0
      %4457 = vmatpush1.msra.mxu0 0.0
      %4458 = vmatprep.subr.mxu0 0.0
      %4459 = vmatpush1.msra.mxu0 0.0
      %4460 = vmatprep.subr.mxu0 0.0
      %4461 = vmatpush1.msra.mxu0 0.0
      %4462 = vmatprep.subr.mxu0 0.0
      %4463 = vmatpush1.msra.mxu0 0.0
      %4464 = vmatprep.subr.mxu0 0.0
      %4465 = vmatpush1.msra.mxu0 0.0
      %4466 = vmatprep.subr.mxu0 0.0
      %4467 = vmatpush1.msra.mxu0 0.0
      %4468 = vmatprep.subr.mxu0 0.0
      %4469 = vmatpush1.msra.mxu0 0.0
      %4470 = vmatprep.subr.mxu0 0.0
      %4471 = vmatpush1.msra.mxu0 0.0
      %4472 = vmatprep.subr.mxu0 0.0
      %4473 = vmatpush1.msra.mxu0 0.0
      %4474 = vmatprep.subr.mxu0 0.0
      %4475 = vmatpush1.msra.mxu0 0.0
      %4476 = vmatprep.subr.mxu0 0.0
      %4477 = vmatpush1.msra.mxu0 0.0
      %4478 = vmatprep.subr.mxu0 0.0
      %4479 = vmatpush1.msra.mxu0 0.0
      %4480 = vmatprep.subr.mxu0 0.0
      %4481 = vmatpush1.msra.mxu0 0.0
      %4482 = vmatprep.subr.mxu0 0.0
      %4483 = vmatpush1.msra.mxu0 0.0
      %4484 = vmatprep.subr.mxu0 0.0
      %4485 = vmatpush1.msra.mxu0 0.0
      %4486 = vmatprep.mubr.f32.mxu0 0.0
      %4487 = vmatmul.mubr.f32.gmra.mrb[0].mxu0 %v4414
      %v4488 = vpop.f32.mrb[0].mxu0
      %v4489 = vadd.f32 0.0, %v4488
      %v4490 = vpop.f32.mrb[0].mxu0
      %v4491 = vadd.f32 0.0, %v4490
      %4492 = vdwg.mxu0
      %v4493 = vadd.f32 %v4373, %v4489
      %v4494 = vadd.f32 %v4374, %v4491
      %s4495 = scalar_lea.vmem %s5, 16
      %v4496 = vld [vmem:[%s4495] sm:$0xf]
      %4497 = vrot.lane.b32.xlu0 %v4041, 111
      %v4498 = vpop.permute.xlu0 %4497
      %4499 = vrot.lane.b32.xlu0 %v4042, 111
      %v4500 = vpop.permute.xlu0 %4499
      %4501 = vrot.lane.b32.xlu0 %v4043, 111
      %v4502 = vpop.permute.xlu0 %4501
      %4503 = vrot.lane.b32.xlu0 %v4044, 111
      %v4504 = vpop.permute.xlu0 %4503
      %4505 = vrot.lane.b32.xlu0 %v4045, 111
      %v4506 = vpop.permute.xlu0 %4505
      %4507 = vrot.lane.b32.xlu0 %v4046, 111
      %v4508 = vpop.permute.xlu0 %4507
      %4509 = vrot.lane.b32.xlu0 %v4047, 111
      %v4510 = vpop.permute.xlu0 %4509
      %4511 = vrot.lane.b32.xlu0 %v4048, 111
      %v4512 = vpop.permute.xlu0 %4511
      %4513 = vrot.lane.b32.xlu0 %v4049, 111
      %v4514 = vpop.permute.xlu0 %4513
      %v4515 = vsel %vm836, %v4498, %v4500
      %v4516 = vsel %vm836, %v4500, %v4502
      %v4517 = vsel %vm836, %v4504, %v4506
      %v4518 = vsel %vm836, %v4506, %v4508
      %v4519 = vsel %vm836, %v4510, %v4512
      %v4520 = vsel %vm836, %v4512, %v4514
      %v4526 = vsel %vm4096, %v4496, 0
      %v4528 = vsel %vm474, %v4519, 0
      %v4530 = vsel %vm474, %v4520, 0
      %4532 = vmatprep.subr.mxu0 %v4516
      %4533 = vmatpush1.msra.mxu0 %v4515
      %4534 = vmatprep.subr.mxu0 %v4518
      %4535 = vmatpush1.msra.mxu0 %v4517
      %4536 = vmatprep.subr.mxu0 %v4530
      %4537 = vmatpush1.msra.mxu0 %v4528
      %4538 = vmatprep.subr.mxu0 0.0
      %4539 = vmatpush1.msra.mxu0 0.0
      %4540 = vmatprep.subr.mxu0 0.0
      %4541 = vmatpush1.msra.mxu0 0.0
      %4542 = vmatprep.subr.mxu0 0.0
      %4543 = vmatpush1.msra.mxu0 0.0
      %4544 = vmatprep.subr.mxu0 0.0
      %4545 = vmatpush1.msra.mxu0 0.0
      %4546 = vmatprep.subr.mxu0 0.0
      %4547 = vmatpush1.msra.mxu0 0.0
      %4548 = vmatprep.subr.mxu0 0.0
      %4549 = vmatpush1.msra.mxu0 0.0
      %4550 = vmatprep.subr.mxu0 0.0
      %4551 = vmatpush1.msra.mxu0 0.0
      %4552 = vmatprep.subr.mxu0 0.0
      %4553 = vmatpush1.msra.mxu0 0.0
      %4554 = vmatprep.subr.mxu0 0.0
      %4555 = vmatpush1.msra.mxu0 0.0
      %4556 = vmatprep.subr.mxu0 0.0
      %4557 = vmatpush1.msra.mxu0 0.0
      %4558 = vmatprep.subr.mxu0 0.0
      %4559 = vmatpush1.msra.mxu0 0.0
      %4560 = vmatprep.subr.mxu0 0.0
      %4561 = vmatpush1.msra.mxu0 0.0
      %4562 = vmatprep.subr.mxu0 0.0
      %4563 = vmatpush1.msra.mxu0 0.0
      %4564 = vmatprep.subr.mxu0 0.0
      %4565 = vmatpush1.msra.mxu0 0.0
      %4566 = vmatprep.subr.mxu0 0.0
      %4567 = vmatpush1.msra.mxu0 0.0
      %4568 = vmatprep.subr.mxu0 0.0
      %4569 = vmatpush1.msra.mxu0 0.0
      %4570 = vmatprep.subr.mxu0 0.0
      %4571 = vmatpush1.msra.mxu0 0.0
      %4572 = vmatprep.subr.mxu0 0.0
      %4573 = vmatpush1.msra.mxu0 0.0
      %4574 = vmatprep.subr.mxu0 0.0
      %4575 = vmatpush1.msra.mxu0 0.0
      %4576 = vmatprep.subr.mxu0 0.0
      %4577 = vmatpush1.msra.mxu0 0.0
      %4578 = vmatprep.subr.mxu0 0.0
      %4579 = vmatpush1.msra.mxu0 0.0
      %4580 = vmatprep.subr.mxu0 0.0
      %4581 = vmatpush1.msra.mxu0 0.0
      %4582 = vmatprep.subr.mxu0 0.0
      %4583 = vmatpush1.msra.mxu0 0.0
      %4584 = vmatprep.subr.mxu0 0.0
      %4585 = vmatpush1.msra.mxu0 0.0
      %4586 = vmatprep.subr.mxu0 0.0
      %4587 = vmatpush1.msra.mxu0 0.0
      %4588 = vmatprep.subr.mxu0 0.0
      %4589 = vmatpush1.msra.mxu0 0.0
      %4590 = vmatprep.subr.mxu0 0.0
      %4591 = vmatpush1.msra.mxu0 0.0
      %4592 = vmatprep.subr.mxu0 0.0
      %4593 = vmatpush1.msra.mxu0 0.0
      %4594 = vmatprep.subr.mxu0 0.0
      %4595 = vmatpush1.msra.mxu0 0.0
      %4596 = vmatprep.mubr.f32.mxu0 0.0
      %4597 = vmatmul.mubr.f32.gmra.mrb[0].mxu0 %v4526
      %v4598 = vpop.f32.mrb[0].mxu0
      %v4599 = vadd.f32 0.0, %v4598
      %v4600 = vpop.f32.mrb[0].mxu0
      %v4601 = vadd.f32 0.0, %v4600
      %4602 = vdwg.mxu0
      %v4603 = vadd.f32 %v4493, %v4599
      %v4604 = vadd.f32 %v4494, %v4601
      %4605 = vrot.lane.b32.xlu0 %v4041, 110
      %v4606 = vpop.permute.xlu0 %4605
      %4607 = vrot.lane.b32.xlu0 %v4042, 110
      %v4608 = vpop.permute.xlu0 %4607
      %4609 = vrot.lane.b32.xlu0 %v4043, 110
      %v4610 = vpop.permute.xlu0 %4609
      %4611 = vrot.lane.b32.xlu0 %v4044, 110
      %v4612 = vpop.permute.xlu0 %4611
      %4613 = vrot.lane.b32.xlu0 %v4045, 110
      %v4614 = vpop.permute.xlu0 %4613
      %4615 = vrot.lane.b32.xlu0 %v4046, 110
      %v4616 = vpop.permute.xlu0 %4615
      %4617 = vrot.lane.b32.xlu0 %v4047, 110
      %v4618 = vpop.permute.xlu0 %4617
      %4619 = vrot.lane.b32.xlu0 %v4048, 110
      %v4620 = vpop.permute.xlu0 %4619
      %4621 = vrot.lane.b32.xlu0 %v4049, 110
      %v4622 = vpop.permute.xlu0 %4621
      %v4623 = vsel %vm925, %v4606, %v4608
      %v4624 = vsel %vm925, %v4608, %v4610
      %v4625 = vsel %vm925, %v4612, %v4614
      %v4626 = vsel %vm925, %v4614, %v4616
      %v4627 = vsel %vm925, %v4618, %v4620
      %v4628 = vsel %vm925, %v4620, %v4622
      %v4635 = vsel %vm632, %v4623, 0.0
      %v4636 = vsel %vm633, %v4624, 0.0
      %v4637 = vsel %vm632, %v4625, 0.0
      %v4638 = vsel %vm633, %v4626, 0.0
      %v4639 = vsel %vm632, %v4627, 0.0
      %v4640 = vsel %vm633, %v4628, 0.0
      %s4641 = scalar_lea.vmem %s5, 20
      %v4642 = vld [vmem:[%s4641] sm:$0xf]
      %v4644 = vsel %vm4096, %v4642, 0
      %v4647 = vsel %vm474, %v4639, 0
      %v4650 = vsel %vm474, %v4640, 0
      %4652 = vmatprep.subr.mxu0 %v4636
      %4653 = vmatpush1.msra.mxu0 %v4635
      %4654 = vmatprep.subr.mxu0 %v4638
      %4655 = vmatpush1.msra.mxu0 %v4637
      %4656 = vmatprep.subr.mxu0 %v4650
      %4657 = vmatpush1.msra.mxu0 %v4647
      %4658 = vmatprep.subr.mxu0 0.0
      %4659 = vmatpush1.msra.mxu0 0.0
      %4660 = vmatprep.subr.mxu0 0.0
      %4661 = vmatpush1.msra.mxu0 0.0
      %4662 = vmatprep.subr.mxu0 0.0
      %4663 = vmatpush1.msra.mxu0 0.0
      %4664 = vmatprep.subr.mxu0 0.0
      %4665 = vmatpush1.msra.mxu0 0.0
      %4666 = vmatprep.subr.mxu0 0.0
      %4667 = vmatpush1.msra.mxu0 0.0
      %4668 = vmatprep.subr.mxu0 0.0
      %4669 = vmatpush1.msra.mxu0 0.0
      %4670 = vmatprep.subr.mxu0 0.0
      %4671 = vmatpush1.msra.mxu0 0.0
      %4672 = vmatprep.subr.mxu0 0.0
      %4673 = vmatpush1.msra.mxu0 0.0
      %4674 = vmatprep.subr.mxu0 0.0
      %4675 = vmatpush1.msra.mxu0 0.0
      %4676 = vmatprep.subr.mxu0 0.0
      %4677 = vmatpush1.msra.mxu0 0.0
      %4678 = vmatprep.subr.mxu0 0.0
      %4679 = vmatpush1.msra.mxu0 0.0
      %4680 = vmatprep.subr.mxu0 0.0
      %4681 = vmatpush1.msra.mxu0 0.0
      %4682 = vmatprep.subr.mxu0 0.0
      %4683 = vmatpush1.msra.mxu0 0.0
      %4684 = vmatprep.subr.mxu0 0.0
      %4685 = vmatpush1.msra.mxu0 0.0
      %4686 = vmatprep.subr.mxu0 0.0
      %4687 = vmatpush1.msra.mxu0 0.0
      %4688 = vmatprep.subr.mxu0 0.0
      %4689 = vmatpush1.msra.mxu0 0.0
      %4690 = vmatprep.subr.mxu0 0.0
      %4691 = vmatpush1.msra.mxu0 0.0
      %4692 = vmatprep.subr.mxu0 0.0
      %4693 = vmatpush1.msra.mxu0 0.0
      %4694 = vmatprep.subr.mxu0 0.0
      %4695 = vmatpush1.msra.mxu0 0.0
      %4696 = vmatprep.subr.mxu0 0.0
      %4697 = vmatpush1.msra.mxu0 0.0
      %4698 = vmatprep.subr.mxu0 0.0
      %4699 = vmatpush1.msra.mxu0 0.0
      %4700 = vmatprep.subr.mxu0 0.0
      %4701 = vmatpush1.msra.mxu0 0.0
      %4702 = vmatprep.subr.mxu0 0.0
      %4703 = vmatpush1.msra.mxu0 0.0
      %4704 = vmatprep.subr.mxu0 0.0
      %4705 = vmatpush1.msra.mxu0 0.0
      %4706 = vmatprep.subr.mxu0 0.0
      %4707 = vmatpush1.msra.mxu0 0.0
      %4708 = vmatprep.subr.mxu0 0.0
      %4709 = vmatpush1.msra.mxu0 0.0
      %4710 = vmatprep.subr.mxu0 0.0
      %4711 = vmatpush1.msra.mxu0 0.0
      %4712 = vmatprep.subr.mxu0 0.0
      %4713 = vmatpush1.msra.mxu0 0.0
      %4714 = vmatprep.subr.mxu0 0.0
      %4715 = vmatpush1.msra.mxu0 0.0
      %4716 = vmatprep.mubr.f32.mxu0 0.0
      %4717 = vmatmul.mubr.f32.gmra.mrb[0].mxu0 %v4644
      %v4718 = vpop.f32.mrb[0].mxu0
      %v4719 = vadd.f32 0.0, %v4718
      %v4720 = vpop.f32.mrb[0].mxu0
      %v4721 = vadd.f32 0.0, %v4720
      %4722 = vdwg.mxu0
      %v4723 = vadd.f32 %v4603, %v4719
      %v4724 = vadd.f32 %v4604, %v4721
      %4725 = vrot.lane.b32.xlu0 %v4041, 96
      %v4726 = vpop.permute.xlu0 %4725
      %4727 = vrot.lane.b32.xlu0 %v4042, 96
      %v4728 = vpop.permute.xlu0 %4727
      %4729 = vrot.lane.b32.xlu0 %v4043, 96
      %v4730 = vpop.permute.xlu0 %4729
      %4731 = vrot.lane.b32.xlu0 %v4044, 96
      %v4732 = vpop.permute.xlu0 %4731
      %4733 = vrot.lane.b32.xlu0 %v4045, 96
      %v4734 = vpop.permute.xlu0 %4733
      %4735 = vrot.lane.b32.xlu0 %v4046, 96
      %v4736 = vpop.permute.xlu0 %4735
      %4737 = vrot.lane.b32.xlu0 %v4047, 96
      %v4738 = vpop.permute.xlu0 %4737
      %4739 = vrot.lane.b32.xlu0 %v4048, 96
      %v4740 = vpop.permute.xlu0 %4739
      %4741 = vrot.lane.b32.xlu0 %v4049, 96
      %v4742 = vpop.permute.xlu0 %4741
      %v4743 = vsel %vm1022, %v4726, %v4728
      %v4744 = vsel %vm1022, %v4728, %v4730
      %v4745 = vsel %vm1022, %v4732, %v4734
      %v4746 = vsel %vm1022, %v4734, %v4736
      %v4747 = vsel %vm1022, %v4738, %v4740
      %v4748 = vsel %vm1022, %v4740, %v4742
      %v4755 = vsel %vm451, %v4743, 0.0
      %v4756 = vsel %vm452, %v4744, 0.0
      %v4757 = vsel %vm451, %v4745, 0.0
      %v4758 = vsel %vm452, %v4746, 0.0
      %v4759 = vsel %vm451, %v4747, 0.0
      %v4760 = vsel %vm452, %v4748, 0.0
      %s4761 = scalar_lea.vmem %s5, 24
      %v4762 = vld [vmem:[%s4761] sm:$0xf]
      %v4764 = vsel %vm4096, %v4762, 0
      %v4767 = vsel %vm474, %v4759, 0
      %v4770 = vsel %vm474, %v4760, 0
      %4772 = vmatprep.subr.mxu0 %v4756
      %4773 = vmatpush1.msra.mxu0 %v4755
      %4774 = vmatprep.subr.mxu0 %v4758
      %4775 = vmatpush1.msra.mxu0 %v4757
      %4776 = vmatprep.subr.mxu0 %v4770
      %4777 = vmatpush1.msra.mxu0 %v4767
      %4778 = vmatprep.subr.mxu0 0.0
      %4779 = vmatpush1.msra.mxu0 0.0
      %4780 = vmatprep.subr.mxu0 0.0
      %4781 = vmatpush1.msra.mxu0 0.0
      %4782 = vmatprep.subr.mxu0 0.0
      %4783 = vmatpush1.msra.mxu0 0.0
      %4784 = vmatprep.subr.mxu0 0.0
      %4785 = vmatpush1.msra.mxu0 0.0
      %4786 = vmatprep.subr.mxu0 0.0
      %4787 = vmatpush1.msra.mxu0 0.0
      %4788 = vmatprep.subr.mxu0 0.0
      %4789 = vmatpush1.msra.mxu0 0.0
      %4790 = vmatprep.subr.mxu0 0.0
      %4791 = vmatpush1.msra.mxu0 0.0
      %4792 = vmatprep.subr.mxu0 0.0
      %4793 = vmatpush1.msra.mxu0 0.0
      %4794 = vmatprep.subr.mxu0 0.0
      %4795 = vmatpush1.msra.mxu0 0.0
      %4796 = vmatprep.subr.mxu0 0.0
      %4797 = vmatpush1.msra.mxu0 0.0
      %4798 = vmatprep.subr.mxu0 0.0
      %4799 = vmatpush1.msra.mxu0 0.0
      %4800 = vmatprep.subr.mxu0 0.0
      %4801 = vmatpush1.msra.mxu0 0.0
      %4802 = vmatprep.subr.mxu0 0.0
      %4803 = vmatpush1.msra.mxu0 0.0
      %4804 = vmatprep.subr.mxu0 0.0
      %4805 = vmatpush1.msra.mxu0 0.0
      %4806 = vmatprep.subr.mxu0 0.0
      %4807 = vmatpush1.msra.mxu0 0.0
      %4808 = vmatprep.subr.mxu0 0.0
      %4809 = vmatpush1.msra.mxu0 0.0
      %4810 = vmatprep.subr.mxu0 0.0
      %4811 = vmatpush1.msra.mxu0 0.0
      %4812 = vmatprep.subr.mxu0 0.0
      %4813 = vmatpush1.msra.mxu0 0.0
      %4814 = vmatprep.subr.mxu0 0.0
      %4815 = vmatpush1.msra.mxu0 0.0
      %4816 = vmatprep.subr.mxu0 0.0
      %4817 = vmatpush1.msra.mxu0 0.0
      %4818 = vmatprep.subr.mxu0 0.0
      %4819 = vmatpush1.msra.mxu0 0.0
      %4820 = vmatprep.subr.mxu0 0.0
      %4821 = vmatpush1.msra.mxu0 0.0
      %4822 = vmatprep.subr.mxu0 0.0
      %4823 = vmatpush1.msra.mxu0 0.0
      %4824 = vmatprep.subr.mxu0 0.0
      %4825 = vmatpush1.msra.mxu0 0.0
      %4826 = vmatprep.subr.mxu0 0.0
      %4827 = vmatpush1.msra.mxu0 0.0
      %4828 = vmatprep.subr.mxu0 0.0
      %4829 = vmatpush1.msra.mxu0 0.0
      %4830 = vmatprep.subr.mxu0 0.0
      %4831 = vmatpush1.msra.mxu0 0.0
      %4832 = vmatprep.subr.mxu0 0.0
      %4833 = vmatpush1.msra.mxu0 0.0
      %4834 = vmatprep.subr.mxu0 0.0
      %4835 = vmatpush1.msra.mxu0 0.0
      %4836 = vmatprep.mubr.f32.mxu0 0.0
      %4837 = vmatmul.mubr.f32.gmra.mrb[0].mxu0 %v4764
      %v4838 = vpop.f32.mrb[0].mxu0
      %v4839 = vadd.f32 0.0, %v4838
      %v4840 = vpop.f32.mrb[0].mxu0
      %v4841 = vadd.f32 0.0, %v4840
      %4842 = vdwg.mxu0
      %v4843 = vadd.f32 %v4723, %v4839
      %v4844 = vadd.f32 %v4724, %v4841
      %s4845 = scalar_lea.vmem %s5, 28
      %v4846 = vld [vmem:[%s4845] sm:$0xf]
      %4847 = vrot.lane.b32.xlu0 %v4041, 95
      %v4848 = vpop.permute.xlu0 %4847
      %4849 = vrot.lane.b32.xlu0 %v4042, 95
      %v4850 = vpop.permute.xlu0 %4849
      %4851 = vrot.lane.b32.xlu0 %v4043, 95
      %v4852 = vpop.permute.xlu0 %4851
      %4853 = vrot.lane.b32.xlu0 %v4044, 95
      %v4854 = vpop.permute.xlu0 %4853
      %4855 = vrot.lane.b32.xlu0 %v4045, 95
      %v4856 = vpop.permute.xlu0 %4855
      %4857 = vrot.lane.b32.xlu0 %v4046, 95
      %v4858 = vpop.permute.xlu0 %4857
      %4859 = vrot.lane.b32.xlu0 %v4047, 95
      %v4860 = vpop.permute.xlu0 %4859
      %4861 = vrot.lane.b32.xlu0 %v4048, 95
      %v4862 = vpop.permute.xlu0 %4861
      %4863 = vrot.lane.b32.xlu0 %v4049, 95
      %v4864 = vpop.permute.xlu0 %4863
      %v4865 = vsel %vm1121, %v4848, %v4850
      %v4866 = vsel %vm1121, %v4850, %v4852
      %v4867 = vsel %vm1121, %v4854, %v4856
      %v4868 = vsel %vm1121, %v4856, %v4858
      %v4869 = vsel %vm1121, %v4860, %v4862
      %v4870 = vsel %vm1121, %v4862, %v4864
      %v4876 = vsel %vm4096, %v4846, 0
      %v4878 = vsel %vm474, %v4869, 0
      %v4880 = vsel %vm474, %v4870, 0
      %4882 = vmatprep.subr.mxu0 %v4866
      %4883 = vmatpush1.msra.mxu0 %v4865
      %4884 = vmatprep.subr.mxu0 %v4868
      %4885 = vmatpush1.msra.mxu0 %v4867
      %4886 = vmatprep.subr.mxu0 %v4880
      %4887 = vmatpush1.msra.mxu0 %v4878
      %4888 = vmatprep.subr.mxu0 0.0
      %4889 = vmatpush1.msra.mxu0 0.0
      %4890 = vmatprep.subr.mxu0 0.0
      %4891 = vmatpush1.msra.mxu0 0.0
      %4892 = vmatprep.subr.mxu0 0.0
      %4893 = vmatpush1.msra.mxu0 0.0
      %4894 = vmatprep.subr.mxu0 0.0
      %4895 = vmatpush1.msra.mxu0 0.0
      %4896 = vmatprep.subr.mxu0 0.0
      %4897 = vmatpush1.msra.mxu0 0.0
      %4898 = vmatprep.subr.mxu0 0.0
      %4899 = vmatpush1.msra.mxu0 0.0
      %4900 = vmatprep.subr.mxu0 0.0
      %4901 = vmatpush1.msra.mxu0 0.0
      %4902 = vmatprep.subr.mxu0 0.0
      %4903 = vmatpush1.msra.mxu0 0.0
      %4904 = vmatprep.subr.mxu0 0.0
      %4905 = vmatpush1.msra.mxu0 0.0
      %4906 = vmatprep.subr.mxu0 0.0
      %4907 = vmatpush1.msra.mxu0 0.0
      %4908 = vmatprep.subr.mxu0 0.0
      %4909 = vmatpush1.msra.mxu0 0.0
      %4910 = vmatprep.subr.mxu0 0.0
      %4911 = vmatpush1.msra.mxu0 0.0
      %4912 = vmatprep.subr.mxu0 0.0
      %4913 = vmatpush1.msra.mxu0 0.0
      %4914 = vmatprep.subr.mxu0 0.0
      %4915 = vmatpush1.msra.mxu0 0.0
      %4916 = vmatprep.subr.mxu0 0.0
      %4917 = vmatpush1.msra.mxu0 0.0
      %4918 = vmatprep.subr.mxu0 0.0
      %4919 = vmatpush1.msra.mxu0 0.0
      %4920 = vmatprep.subr.mxu0 0.0
      %4921 = vmatpush1.msra.mxu0 0.0
      %4922 = vmatprep.subr.mxu0 0.0
      %4923 = vmatpush1.msra.mxu0 0.0
      %4924 = vmatprep.subr.mxu0 0.0
      %4925 = vmatpush1.msra.mxu0 0.0
      %4926 = vmatprep.subr.mxu0 0.0
      %4927 = vmatpush1.msra.mxu0 0.0
      %4928 = vmatprep.subr.mxu0 0.0
      %4929 = vmatpush1.msra.mxu0 0.0
      %4930 = vmatprep.subr.mxu0 0.0
      %4931 = vmatpush1.msra.mxu0 0.0
      %4932 = vmatprep.subr.mxu0 0.0
      %4933 = vmatpush1.msra.mxu0 0.0
      %4934 = vmatprep.subr.mxu0 0.0
      %4935 = vmatpush1.msra.mxu0 0.0
      %4936 = vmatprep.subr.mxu0 0.0
      %4937 = vmatpush1.msra.mxu0 0.0
      %4938 = vmatprep.subr.mxu0 0.0
      %4939 = vmatpush1.msra.mxu0 0.0
      %4940 = vmatprep.subr.mxu0 0.0
      %4941 = vmatpush1.msra.mxu0 0.0
      %4942 = vmatprep.subr.mxu0 0.0
      %4943 = vmatpush1.msra.mxu0 0.0
      %4944 = vmatprep.subr.mxu0 0.0
      %4945 = vmatpush1.msra.mxu0 0.0
      %4946 = vmatprep.mubr.f32.mxu0 0.0
      %4947 = vmatmul.mubr.f32.gmra.mrb[0].mxu0 %v4876
      %v4948 = vpop.f32.mrb[0].mxu0
      %v4949 = vadd.f32 0.0, %v4948
      %v4950 = vpop.f32.mrb[0].mxu0
      %v4951 = vadd.f32 0.0, %v4950
      %4952 = vdwg.mxu0
      %v4953 = vadd.f32 %v4843, %v4949
      %v4954 = vadd.f32 %v4844, %v4951
      %4955 = vrot.lane.b32.xlu0 %v4041, 94
      %v4956 = vpop.permute.xlu0 %4955
      %4957 = vrot.lane.b32.xlu0 %v4042, 94
      %v4958 = vpop.permute.xlu0 %4957
      %4959 = vrot.lane.b32.xlu0 %v4043, 94
      %v4960 = vpop.permute.xlu0 %4959
      %4961 = vrot.lane.b32.xlu0 %v4044, 94
      %v4962 = vpop.permute.xlu0 %4961
      %4963 = vrot.lane.b32.xlu0 %v4045, 94
      %v4964 = vpop.permute.xlu0 %4963
      %4965 = vrot.lane.b32.xlu0 %v4046, 94
      %v4966 = vpop.permute.xlu0 %4965
      %4967 = vrot.lane.b32.xlu0 %v4047, 94
      %v4968 = vpop.permute.xlu0 %4967
      %4969 = vrot.lane.b32.xlu0 %v4048, 94
      %v4970 = vpop.permute.xlu0 %4969
      %4971 = vrot.lane.b32.xlu0 %v4049, 94
      %v4972 = vpop.permute.xlu0 %4971
      %v4973 = vsel %vm1210, %v4956, %v4958
      %v4974 = vsel %vm1210, %v4958, %v4960
      %v4975 = vsel %vm1210, %v4962, %v4964
      %v4976 = vsel %vm1210, %v4964, %v4966
      %v4977 = vsel %vm1210, %v4968, %v4970
      %v4978 = vsel %vm1210, %v4970, %v4972
      %v4985 = vsel %vm632, %v4973, 0.0
      %v4986 = vsel %vm633, %v4974, 0.0
      %v4987 = vsel %vm632, %v4975, 0.0
      %v4988 = vsel %vm633, %v4976, 0.0
      %v4989 = vsel %vm632, %v4977, 0.0
      %v4990 = vsel %vm633, %v4978, 0.0
      %s4991 = scalar_lea.vmem %s5, 32
      %v4992 = vld [vmem:[%s4991] sm:$0xf]
      %v4994 = vsel %vm4096, %v4992, 0
      %v4997 = vsel %vm474, %v4989, 0
      %v5000 = vsel %vm474, %v4990, 0
      %5002 = vmatprep.subr.mxu0 %v4986
      %5003 = vmatpush1.msra.mxu0 %v4985
      %5004 = vmatprep.subr.mxu0 %v4988
      %5005 = vmatpush1.msra.mxu0 %v4987
      %5006 = vmatprep.subr.mxu0 %v5000
      %5007 = vmatpush1.msra.mxu0 %v4997
      %5008 = vmatprep.subr.mxu0 0.0
      %5009 = vmatpush1.msra.mxu0 0.0
      %5010 = vmatprep.subr.mxu0 0.0
      %5011 = vmatpush1.msra.mxu0 0.0
      %5012 = vmatprep.subr.mxu0 0.0
      %5013 = vmatpush1.msra.mxu0 0.0
      %5014 = vmatprep.subr.mxu0 0.0
      %5015 = vmatpush1.msra.mxu0 0.0
      %5016 = vmatprep.subr.mxu0 0.0
      %5017 = vmatpush1.msra.mxu0 0.0
      %5018 = vmatprep.subr.mxu0 0.0
      %5019 = vmatpush1.msra.mxu0 0.0
      %5020 = vmatprep.subr.mxu0 0.0
      %5021 = vmatpush1.msra.mxu0 0.0
      %5022 = vmatprep.subr.mxu0 0.0
      %5023 = vmatpush1.msra.mxu0 0.0
      %5024 = vmatprep.subr.mxu0 0.0
      %5025 = vmatpush1.msra.mxu0 0.0
      %5026 = vmatprep.subr.mxu0 0.0
      %5027 = vmatpush1.msra.mxu0 0.0
      %5028 = vmatprep.subr.mxu0 0.0
      %5029 = vmatpush1.msra.mxu0 0.0
      %5030 = vmatprep.subr.mxu0 0.0
      %5031 = vmatpush1.msra.mxu0 0.0
      %5032 = vmatprep.subr.mxu0 0.0
      %5033 = vmatpush1.msra.mxu0 0.0
      %5034 = vmatprep.subr.mxu0 0.0
      %5035 = vmatpush1.msra.mxu0 0.0
      %5036 = vmatprep.subr.mxu0 0.0
      %5037 = vmatpush1.msra.mxu0 0.0
      %5038 = vmatprep.subr.mxu0 0.0
      %5039 = vmatpush1.msra.mxu0 0.0
      %5040 = vmatprep.subr.mxu0 0.0
      %5041 = vmatpush1.msra.mxu0 0.0
      %5042 = vmatprep.subr.mxu0 0.0
      %5043 = vmatpush1.msra.mxu0 0.0
      %5044 = vmatprep.subr.mxu0 0.0
      %5045 = vmatpush1.msra.mxu0 0.0
      %5046 = vmatprep.subr.mxu0 0.0
      %5047 = vmatpush1.msra.mxu0 0.0
      %5048 = vmatprep.subr.mxu0 0.0
      %5049 = vmatpush1.msra.mxu0 0.0
      %5050 = vmatprep.subr.mxu0 0.0
      %5051 = vmatpush1.msra.mxu0 0.0
      %5052 = vmatprep.subr.mxu0 0.0
      %5053 = vmatpush1.msra.mxu0 0.0
      %5054 = vmatprep.subr.mxu0 0.0
      %5055 = vmatpush1.msra.mxu0 0.0
      %5056 = vmatprep.subr.mxu0 0.0
      %5057 = vmatpush1.msra.mxu0 0.0
      %5058 = vmatprep.subr.mxu0 0.0
      %5059 = vmatpush1.msra.mxu0 0.0
      %5060 = vmatprep.subr.mxu0 0.0
      %5061 = vmatpush1.msra.mxu0 0.0
      %5062 = vmatprep.subr.mxu0 0.0
      %5063 = vmatpush1.msra.mxu0 0.0
      %5064 = vmatprep.subr.mxu0 0.0
      %5065 = vmatpush1.msra.mxu0 0.0
      %5066 = vmatprep.mubr.f32.mxu0 0.0
      %5067 = vmatmul.mubr.f32.gmra.mrb[0].mxu0 %v4994
      %v5068 = vpop.f32.mrb[0].mxu0
      %v5069 = vadd.f32 0.0, %v5068
      %v5070 = vpop.f32.mrb[0].mxu0
      %v5071 = vadd.f32 0.0, %v5070
      %5072 = vdwg.mxu0
      %v5073 = vadd.f32 %v4953, %v5069
      %v5074 = vadd.f32 %v4954, %v5071
      %v5075 = vld [vmem:[%s10] sm:$0xf]
      %5077 = vset.pattern.permute.xlu0 0
      %5078 = vperm.xlu0 %5077, %v5075
      %v5079 = vpop.permute.xlu0 %5078
      %v5081 = vadd.f32 %v5073, %v5079
      %v5082 = vadd.f32 %v5074, %v5079
      %vm5083 = vcmp.ge.f32.partialorder %v5081, 0.0
      %vm5084 = vcmp.ge.f32.partialorder %v5082, 0.0
      %v5085 = vmul.f32 %v5081, 0.2
      %v5086 = vmul.f32 %v5082, 0.2
      %v5087 = vsel %vm5083, %v5081, %v5085
      %v5088 = vsel %vm5084, %v5082, %v5086
      %v5089 = vmul.f32 %v5087, 0.2
      %v5090 = vmul.f32 %v5088, 0.2
      %v5091 = vld [vmem:[%s381] sm:$0xff]
      %v5093 = vcombine.high %v5091, %v5091
      %v5095 = vadd.f32 %v5089, %v5091
      %v5096 = vadd.f32 %v5090, %v5093
      %v5099 = vcombine.low %v5095, %v5096
      %5101 = vst [vmem:[%s386] sm:$0xff] %v5099
      %p5102 = scmp.lt.s32.totalorder %s22, 1
      %s5103 = scalar_select %p5102, %s22, 1
      %s5104 = smul.addr %s5103, 2
      %s5105 = smul.addr %s5104, 4
      %s5106 = scalar_lea.vmem %s11, %s5105
      // Predicated region
      $region65: #{residual_dense_block5.1} parent=63 // pred_check
        %p5107 = pneg %p276
      $region66: #{residual_dense_block5.1} parent=63 // pred_check_branch
        %5109 = sbr.rel (%p5107) target = $region68
      $region67: #{residual_dense_block5.1} parent=63 // pred_region
        _
      $region68: #{residual_dense_block5.1} parent=63 // pred_fallthru
        _
    $region64: #{residual_dense_block5.1} parent=5 // pred_fallthru
      _
    %p5110 = scmp.le.s32.totalorder 2, %s17
    // Predicated region
    $region69: #{residual_dense_block5.1} parent=5 // pred_check
      %p5111 = pneg %p5110
    $region70: #{residual_dense_block5.1} parent=5 // pred_check_branch
      %5113 = sbr.rel (%p5111) target = $region72
    $region71: #{residual_dense_block5.1} parent=5 // pred_region
      %s5114 = ssub.s32 %s17, 2
      // Predicated region
      $region73: #{residual_dense_block5.1} parent=71 // pred_check
        %p5115 = pneg %p282
      $region74: #{residual_dense_block5.1} parent=71 // pred_check_branch
        %5117 = sbr.rel (%p5115) target = $region76
      $region75: #{residual_dense_block5.1} parent=71 // pred_region
        %p5118 = scmp.lt.s32.totalorder %s23, 1
        %s5119 = scalar_select %p5118, %s23, 1
        %s5120 = smul.addr %s5119, 2
        %s5121 = smul.addr %s5120, 4
        %s5122 = scalar_lea.vmem %s11, %s5121
      $region76: #{residual_dense_block5.1} parent=71 // pred_fallthru
        _
    $region72: #{residual_dense_block5.1} parent=5 // pred_fallthru
      _
  $region6: #{residual_dense_block5.1} parent=0 // loop_footer
    %s21 = sadd.s32 1, %s17
  $region7: #{residual_dense_block5.1} parent=0 // loop_footer_branch
    %16 = sbr.rel target = $region3
  $region8: #{residual_dense_block5.1} parent=0 // loop_exit
    _

</llo_original>
